<compile_context>
chip_gen: v6e
topology: v6e:2x2x1
jax: 0.10.0
libtpu: 0.0.40
codegen_flags: <defaults>
</compile_context>

<pallas_src>
import math
import numpy as np
import jax
import jax.numpy as jnp
from jax import lax
from jax.experimental import pallas as pl
from jax.experimental.pallas import tpu as pltpu


# ------------------ deterministic NSGT parameter construction (glue) ------------------

def log_scale(fmin, fmax, bnds):
    """LogScale(): returns (frequencies, Q factors) exactly like nsgt_torch.fscale.LogScale."""
    lfmin, lfmax = np.log2(fmin), np.log2(fmax)
    odiv = (lfmax - lfmin) / (bnds - 1)
    pow2n = 2.0 ** odiv
    frqs = fmin * pow2n ** np.arange(bnds, dtype=np.float64)
    q = np.full(bnds, np.sqrt(pow2n) / (pow2n - 1.0) / 2.0, dtype=np.float64)
    return frqs, q


def hannwin(l):
    r = np.arange(l, dtype=np.float64)
    r *= np.pi * 2.0 / l
    r = np.cos(r)
    r += 1.0
    r *= 0.5
    return r.astype(np.float32)


def nsgfwin(f, q, sr, Ls, min_win=4):
    """nsgfwin(..., sliced=False) port (window construction)."""
    nf = sr / 2.0
    lim = int(np.argmax(f > 0))
    if lim != 0:
        f = f[lim:]
        q = q[lim:]
    lim = int(np.argmax(f >= nf))
    if lim != 0:
        f = f[:lim]
        q = q[:lim]
    assert len(f) == len(q)
    assert np.all((f[1:] - f[:-1]) > 0)
    assert np.all(q > 0)

    fbas = f
    lbas = len(fbas)
    frqs = np.concatenate(((0.0,), fbas, (nf,)))
    fbas = np.concatenate((frqs, sr - frqs[-2:0:-1]))
    fbas *= float(Ls) / sr

    M = np.zeros(fbas.shape, dtype=np.int64)
    M[0] = np.round(2 * fbas[1])
    for k in range(1, 2 * lbas + 1):
        M[k] = np.round(fbas[k + 1] - fbas[k - 1])
    M[-1] = np.round(fbas[-1] - fbas[-2])
    M = np.clip(M, min_win, None)

    g = [hannwin(int(m)) for m in M]

    fbas[lbas] = (fbas[lbas - 1] + fbas[lbas + 1]) / 2
    fbas[lbas + 2] = Ls - fbas[lbas]
    rfbas = np.round(fbas).astype(np.int64)
    return g, rfbas, M


def calcwinrange(g, rfbas, Ls):
    shift = np.concatenate(((np.mod(-rfbas[-1], Ls),), rfbas[1:] - rfbas[:-1]))
    timepos = np.cumsum(shift)
    nn = int(timepos[-1])
    timepos = timepos - shift[0]
    wins = []
    for gii, tpii in zip(g, timepos):
        Lg = len(gii)
        win_range = np.arange(-(Lg // 2) + tpii, Lg - (Lg // 2) + tpii, dtype=np.int64)
        win_range %= nn
        wins.append(win_range)
    return wins, nn


def build_nsgt(fs, Ls, fmin, fmax, bnds):
    """Replicates NSGT.__init__ for real=True, matrixform=True, reducedform=0."""
    frqs, q = log_scale(fmin, fmax, bnds)
    g, rfbas, M = nsgfwin(frqs, q, fs, Ls)
    sl = slice(0, len(g) // 2 + 1)        # real=True, reducedform=0
    M[:] = M.max()                        # matrixform=True, reducedform=0
    wins, nn = calcwinrange(g, rfbas, Ls)
    assert nn == Ls
    g_sl, M_sl, wins_sl = g[sl], M[sl], wins[sl]
    maxLg = max(int(math.ceil(float(len(gii)) / int(mii))) * int(mii)
                for mii, gii in zip(M_sl, g_sl))
    nbins = len(g_sl)
    return g_sl, wins_sl, nbins, maxLg


def nsgt_forward_np(s, g_sl, wins_sl, nbins, maxLg):
    """Reference forward (nsgtf, matrixform path) in float64/complex128 numpy."""
    ft = np.fft.fft(s, axis=-1)
    c = np.zeros(s.shape[:-1] + (nbins, maxLg), dtype=np.complex128)
    for j in range(nbins):
        gj = g_sl[j].astype(np.float64)
        Lg = len(gj)
        wr = wins_sl[j]
        t = ft[..., wr] * np.fft.fftshift(gj)        # conj(g) == g (real windows)
        c[..., j, : (Lg + 1) // 2] = t[..., Lg // 2:]
        c[..., j, maxLg - (Lg // 2):] = t[..., : Lg // 2]
    return np.fft.ifft(c, axis=-1)


# ------------------------- weight preparation (done once, off hot path) ---------------

def prepare_nsgt_weights(g_sl, wins_sl, nbins, maxLg, Ls,
                         max_tile_bytes=8 << 20):
    """Build the re/im-interleaved transform matrix, pad to the 128-lane quantum, cast
    to bf16 once, and pick the column tile (single grid step whenever it fits VMEM)."""
    T = nsgt_forward_np(np.eye(Ls, dtype=np.float64), g_sl, wins_sl, nbins, maxLg)
    T = T.reshape(Ls, nbins * maxLg)
    nout = nbins * maxLg
    nfull = 2 * nout

    # interleave real/imag per output coefficient: column order [re0, im0, re1, im1, ...]
    t_int = np.empty((Ls, nfull), dtype=np.float32)
    t_int[:, 0::2] = T.real.astype(np.float32)
    t_int[:, 1::2] = T.imag.astype(np.float32)

    # pad only to a multiple of 128 lanes (no 512-multiple over-padding)
    npad = ((nfull + 127) // 128) * 128
    t_pad = np.zeros((Ls, npad), dtype=np.float32)
    t_pad[:, :nfull] = t_int

    # tile_n selection: one grid step if the (double-buffered) bf16 RHS tile fits the
    # budget; otherwise the smallest number of 128-aligned steps whose tile fits.
    # (Per-step cost ~0.35 us; on 1-TC chips the grid is purely serial overhead.)
    n_lane_blocks = npad // 128
    tile_n = 128
    for steps in range(1, n_lane_blocks + 1):
        if n_lane_blocks % steps:
            continue
        cand = npad // steps
        if 2 * cand * Ls * 2 <= max_tile_bytes:      # 2 buffers x bf16 bytes
            tile_n = cand
            break

    # weights live in HBM as bf16 (halves the dominant HBM stream vs f32);
    # accumulation stays f32 inside the kernel.
    t_full = jnp.asarray(t_pad).astype(jnp.bfloat16)
    return t_full, nout, tile_n


# ----------------------------------- Pallas kernel ------------------------------------

def _nsgt_matmul_kernel(s_ref, t_ref, o_ref):
    # s_ref: (BC, Ls) f32 (resident across the grid; cast to bf16 here — the cast rides
    #        a free VPU slot under the MXU, and removes the wrapper-side astype/pad ops)
    # t_ref: (Ls, tile_n) bf16 weight tile
    # o_ref: (BC, tile_n) f32 lane-dense output slab
    s = s_ref[...].astype(jnp.bfloat16)
    o_ref[...] = jnp.dot(s, t_ref[...], preferred_element_type=jnp.float32)


def nsgt_forward_pallas(x, t_full, nout, nbins, maxLg, tile_n):
    """NSGT.forward: x (B, C, Ls) float32 -> coefficients (B, C, nbins, maxLg) complex64."""
    B, C, Ls = x.shape
    BC = B * C
    npad = t_full.shape[1]
    assert npad % tile_n == 0
    n_steps = npad // tile_n

    # No wrapper-side cast or row padding: block_shape == full array dims is legal.
    # TODO(synk): if BC grows large enough to be compute-bound, pad BC to the MXU row
    #             granularity and add an M grid axis (keep output N-major / lane-dense).
    s = x.reshape(BC, Ls)

    out = pl.pallas_call(
        _nsgt_matmul_kernel,
        out_shape=jax.ShapeDtypeStruct((BC, npad), jnp.float32),
        grid_spec=pltpu.PrefetchScalarGridSpec(
            num_scalar_prefetch=0,
            grid=(n_steps,),
            in_specs=[pl.BlockSpec((BC, Ls), lambda j: (0, 0)),
                      pl.BlockSpec((Ls, tile_n), lambda j: (0, j))],
            out_specs=pl.BlockSpec((BC, tile_n), lambda j: (0, j)),
        ),
        compiler_params=pltpu.CompilerParams(
            dimension_semantics=("parallel",),
            vmem_limit_bytes=32 * 1024 * 1024,
        ),
    )(s, t_full)

    # Interleaved [re, im] pairs -> complex64 with one contiguous slice (trim lane pad)
    # and one pairwise combine; no strided re/im block slices, no row slice.
    pairs = out[:, :2 * nout].reshape(BC, nout, 2)
    c = lax.complex(pairs[..., 0], pairs[..., 1])            # complex64
    return c.reshape(B, C, nbins, maxLg)


# --------------------------------------- main -----------------------------------------

if __name__ == "__main__":
    fs = 512.0
    Ls = 512
    B, C = 2, 2

    # NSGT(LogScale(10, 220, 10), fs=512, Ls=512, real=True, matrixform=True,
    #      reducedform=0, multichannel=True, dtype=float32)
    g_sl, wins_sl, nbins, maxLg = build_nsgt(fs, Ls, fmin=10.0, fmax=220.0, bnds=10)

    # Build the interleaved, 128-padded, bf16 transform matrix once (constant "weights").
    t_full, nout, tile_n = prepare_nsgt_weights(g_sl, wins_sl, nbins, maxLg, Ls)

    key = jax.random.PRNGKey(0)
    x = jax.random.normal(key, (B, C, Ls), dtype=jnp.float32)

    out = nsgt_forward_pallas(x, t_full, nout, nbins, maxLg, tile_n)
    out = jax.block_until_ready(out)
    assert out.shape == (B, C, nbins, maxLg)
    assert out.dtype == jnp.complex64

    ref = nsgt_forward_np(np.asarray(x, dtype=np.float64), g_sl, wins_sl, nbins, maxLg)
    err = np.max(np.abs(np.asarray(out) - ref)) / (np.max(np.abs(ref)) + 1e-12)
    assert err < 1e-2, f"max relative error too large: {err}"

    print("KERNEL_OK")
</pallas_src>

<mosaic_0001>
module attributes {stable_mosaic.version = 11 : i64} {
  func.func @_nsgt_matmul_kernel(%arg0: i32, %arg1: memref<4x512xf32, #tpu.memory_space<vmem>>, %arg2: memref<512x2688xbf16, #tpu.memory_space<vmem>>, %arg3: memref<4x2688xf32, #tpu.memory_space<vmem>>) attributes {dimension_semantics = [#tpu.dimension_semantics<parallel>], iteration_bounds = array<i64: 1>, scalar_prefetch = 0 : i64, scratch_operands = 0 : i64, tpu.core_type = #tpu.core_type<tc>, window_params = [{pipeline_mode = #tpu.pipeline_mode<synchronous>, transform_indices = @transform_0, window_bounds = array<i64: 4, 512>}, {transform_indices = @transform_1, window_bounds = array<i64: 512, 2688>}, {transform_indices = @transform_2, window_bounds = array<i64: 4, 2688>}]} {
    %c0 = arith.constant 0 : index
    %c0_0 = arith.constant 0 : index
    %0 = vector.load %arg1[%c0, %c0_0] : memref<4x512xf32, #tpu.memory_space<vmem>>, vector<4x512xf32>
    %1 = arith.truncf %0 : vector<4x512xf32> to vector<4x512xbf16>
    %c0_1 = arith.constant 0 : index
    %c0_2 = arith.constant 0 : index
    %2 = vector.load %arg2[%c0_1, %c0_2] : memref<512x2688xbf16, #tpu.memory_space<vmem>>, vector<512x2688xbf16>
    %cst = arith.constant dense<0.000000e+00> : vector<4x2688xf32>
    %3 = tpu.matmul %1, %2, %cst {dimension_numbers = #tpu.dot_dimension_numbers<[1], [0], [0], [1], [0, 0, 1, 1], [], []>} : vector<4x512xbf16>, vector<512x2688xbf16>, vector<4x2688xf32> -> vector<4x2688xf32>
    %c0_3 = arith.constant 0 : index
    %c0_4 = arith.constant 0 : index
    %4 = vector.load %arg3[%c0_3, %c0_4] : memref<4x2688xf32, #tpu.memory_space<vmem>>, vector<4x2688xf32>
    tpu.vector_store %arg3[%c0_3, %c0_4], %3 {strides = array<i32>} : memref<4x2688xf32, #tpu.memory_space<vmem>>, vector<4x2688xf32>,
    return
  }
  func.func @transform_0(%arg0: i32) -> (i32, i32) {
    %c0_i32 = arith.constant 0 : i32
    %c0_i32_0 = arith.constant 0 : i32
    %c0_i32_1 = arith.constant 0 : i32
    return %c0_i32, %c0_i32_0 : i32, i32
  }
  func.func @transform_1(%arg0: i32) -> (i32, i32) {
    %c0_i32 = arith.constant 0 : i32
    %c0_i32_0 = arith.constant 0 : i32
    return %c0_i32, %arg0 : i32, i32
  }
  func.func @transform_2(%arg0: i32) -> (i32, i32) {
    %c0_i32 = arith.constant 0 : i32
    %c0_i32_0 = arith.constant 0 : i32
    return %c0_i32, %arg0 : i32, i32
  }
}

</mosaic_0001>

<llo_original>
// kernel: tpu_custom_call.1
$region0: #{tpu_custom_call.1}
  #allocation0 [shape = 'u32[]', space=smem, size = 0x4, offset = 0x4, fixed_abs, tag = 'smem constant byte address 0x4 - core index']
  #allocation1 [shape = 'u32[144,128]{1,0:T(1,128)}', space=vmem, size = 0x12000, scoped, tag = 'internal scratch']
  %s0 = inlined_call_operand.hbm [shape: f32[4,512], index: 0, kind: input, shape index: {}]
  %s1 = inlined_call_operand.hbm [shape: bf16[512,2688], index: 1, kind: input, shape index: {}]
  %s2 = inlined_call_operand.hbm [shape: f32[4,2688], index: 2, kind: output, shape index: {}]
  %s3 = sld [smem:[#allocation0]]
  $region26: #{tpu_custom_call.1} parent=0
    _
  %s5 = ssub.s32 1, %s3
  %s6 = scalar_select 0, %s5, %s3
  $region1: #{tpu_custom_call.1} parent=0
    #allocation2 [shape = 'u8[8192]{0}', space=vmem, size = 0x2000, scoped, tag = 'input window, operand 0, single buffered']
    #allocation3 [shape = 's32[1]{0}', space=sflag, size = 0x4, scoped, tag = 'scoped memory for tpu_custom_call.1']
    #allocation4 [shape = 's32[1]{0}', space=sflag, size = 0x4, scoped, tag = 'scoped memory for tpu_custom_call.1']
    #allocation5 [shape = 'u8[2752512]{0}', space=vmem, size = 0x2a0000, scoped, tag = 'input window, operand 1, single buffered']
    #allocation6 [shape = 's32[1]{0}', space=sflag, size = 0x4, scoped, tag = 'scoped memory for tpu_custom_call.1']
    #allocation7 [shape = 'u8[43008]{0}', space=vmem, size = 0xa800, scoped, tag = 'output window, operand 0, single buffered']
    %7 = vsyncpa [#allocation3], 0
    %8 = vsyncpa [#allocation6], 0
    %9 = vsyncpa [#allocation4], 0
    // Predicated region
    $region2: #{tpu_custom_call.1} parent=1 // pred_check
      _
    $region3: #{tpu_custom_call.1} parent=1 // pred_check_branch
      %11 = sbr.rel (0) target = $region5
    $region4: #{tpu_custom_call.1} parent=1 // pred_region
      %s13 = ssub.s32 256, 256
      %14 = vsyncadd [#allocation3], %s13
      %s16 = sshll.u32 [#allocation2], 4
      %s17 = int_to_ptr.vmem [resolvable:$true] %s16
      %19 = dma.hbm_to_vmem [thread:$0]  %s0, 256, %s17, [#allocation3]
    $region5: #{tpu_custom_call.1} parent=1 // pred_fallthru
      _
    // Predicated region
    $region6: #{tpu_custom_call.1} parent=1 // pred_check
      _
    $region7: #{tpu_custom_call.1} parent=1 // pred_check_branch
      %21 = sbr.rel (0) target = $region9
    $region8: #{tpu_custom_call.1} parent=1 // pred_region
      %s23 = ssub.s32 86016, 86016
      %24 = vsyncadd [#allocation6], %s23
      %s25 = sshll.u32 [#allocation5], 4
      %s26 = int_to_ptr.vmem [resolvable:$true] %s25
      %31 = dma.hbm_to_vmem [thread:$0]  %s1, 86016, %s26, [#allocation6], 1344, 1344, 84
    $region9: #{tpu_custom_call.1} parent=1 // pred_fallthru
      _
    // Predicated region
    $region10: #{tpu_custom_call.1} parent=1 // pred_check
      _
    $region11: #{tpu_custom_call.1} parent=1 // pred_check_branch
      %33 = sbr.rel (0) target = $region13
    $region12: #{tpu_custom_call.1} parent=1 // pred_region
      %34 = dma.done [#allocation3], 256
    $region13: #{tpu_custom_call.1} parent=1 // pred_fallthru
      _
    // Predicated region
    $region14: #{tpu_custom_call.1} parent=1 // pred_check
      _
    $region15: #{tpu_custom_call.1} parent=1 // pred_check_branch
      %36 = sbr.rel (0) target = $region17
    $region16: #{tpu_custom_call.1} parent=1 // pred_region
      %37 = dma.done [#allocation6], 86016
    $region17: #{tpu_custom_call.1} parent=1 // pred_fallthru
      _
    %v39 = vld [vmem:[#allocation2] sm:$0xff]
    %v40 = vld [vmem:[#allocation2 + $0x8] sm:$0xff]
    %v43 = vcombine.high %v39, %v39
    %v44 = vcombine.high %v40, %v40
    %v47 = vpack.c.bf16 %v39, %v39
    %v48 = vpack.c.bf16 %v43, %v43
    %v49 = vpack.c.bf16 %v40, %v40
    %v50 = vpack.c.bf16 %v44, %v44
    %v51 = vld [vmem:[#allocation5] sm:$0xff]
    %v52 = vld [vmem:[#allocation5 + $0x8] sm:$0xff]
    %v53 = vld [vmem:[#allocation5 + $0x10] sm:$0xff]
    %v54 = vld [vmem:[#allocation5 + $0x18] sm:$0xff]
    %v55 = vld [vmem:[#allocation5 + $0x20] sm:$0xff]
    %v56 = vld [vmem:[#allocation5 + $0x28] sm:$0xff]
    %v57 = vld [vmem:[#allocation5 + $0x30] sm:$0xff]
    %v58 = vld [vmem:[#allocation5 + $0x38] sm:$0xff]
    %v59 = vld [vmem:[#allocation5 + $0x40] sm:$0xff]
    %v60 = vld [vmem:[#allocation5 + $0x48] sm:$0xff]
    %v61 = vld [vmem:[#allocation5 + $0x50] sm:$0xf]
    %v62 = vld [vmem:[#allocation5 + $0x54] sm:$0xff]
    %v63 = vld [vmem:[#allocation5 + $0x5c] sm:$0xff]
    %v64 = vld [vmem:[#allocation5 + $0x64] sm:$0xff]
    %v65 = vld [vmem:[#allocation5 + $0x6c] sm:$0xff]
    %v66 = vld [vmem:[#allocation5 + $0x74] sm:$0xff]
    %v67 = vld [vmem:[#allocation5 + $0x7c] sm:$0xff]
    %v68 = vld [vmem:[#allocation5 + $0x84] sm:$0xff]
    %v69 = vld [vmem:[#allocation5 + $0x8c] sm:$0xff]
    %v70 = vld [vmem:[#allocation5 + $0x94] sm:$0xff]
    %v71 = vld [vmem:[#allocation5 + $0x9c] sm:$0xff]
    %v72 = vld [vmem:[#allocation5 + $0xa4] sm:$0xf]
    %v73 = vld [vmem:[#allocation5 + $0xa8] sm:$0xff]
    %v74 = vld [vmem:[#allocation5 + $0xb0] sm:$0xff]
    %v75 = vld [vmem:[#allocation5 + $0xb8] sm:$0xff]
    %v76 = vld [vmem:[#allocation5 + $0xc0] sm:$0xff]
    %v77 = vld [vmem:[#allocation5 + $0xc8] sm:$0xff]
    %v78 = vld [vmem:[#allocation5 + $0xd0] sm:$0xff]
    %v79 = vld [vmem:[#allocation5 + $0xd8] sm:$0xff]
    %v80 = vld [vmem:[#allocation5 + $0xe0] sm:$0xff]
    %v81 = vld [vmem:[#allocation5 + $0xe8] sm:$0xff]
    %v82 = vld [vmem:[#allocation5 + $0xf0] sm:$0xff]
    %v83 = vld [vmem:[#allocation5 + $0xf8] sm:$0xf]
    %v84 = vld [vmem:[#allocation5 + $0xfc] sm:$0xff]
    %v85 = vld [vmem:[#allocation5 + $0x104] sm:$0xff]
    %v86 = vld [vmem:[#allocation5 + $0x10c] sm:$0xff]
    %v87 = vld [vmem:[#allocation5 + $0x114] sm:$0xff]
    %v88 = vld [vmem:[#allocation5 + $0x11c] sm:$0xff]
    %v89 = vld [vmem:[#allocation5 + $0x124] sm:$0xff]
    %v90 = vld [vmem:[#allocation5 + $0x12c] sm:$0xff]
    %v91 = vld [vmem:[#allocation5 + $0x134] sm:$0xff]
    %v92 = vld [vmem:[#allocation5 + $0x13c] sm:$0xff]
    %v93 = vld [vmem:[#allocation5 + $0x144] sm:$0xff]
    %v94 = vld [vmem:[#allocation5 + $0x14c] sm:$0xf]
    %v95 = vld [vmem:[#allocation5 + $0x150] sm:$0xff]
    %v96 = vld [vmem:[#allocation5 + $0x158] sm:$0xff]
    %v97 = vld [vmem:[#allocation5 + $0x160] sm:$0xff]
    %v98 = vld [vmem:[#allocation5 + $0x168] sm:$0xff]
    %v99 = vld [vmem:[#allocation5 + $0x170] sm:$0xff]
    %v100 = vld [vmem:[#allocation5 + $0x178] sm:$0xff]
    %v101 = vld [vmem:[#allocation5 + $0x180] sm:$0xff]
    %v102 = vld [vmem:[#allocation5 + $0x188] sm:$0xff]
    %v103 = vld [vmem:[#allocation5 + $0x190] sm:$0xff]
    %v104 = vld [vmem:[#allocation5 + $0x198] sm:$0xff]
    %v105 = vld [vmem:[#allocation5 + $0x1a0] sm:$0xf]
    %v106 = vld [vmem:[#allocation5 + $0x1a4] sm:$0xff]
    %v107 = vld [vmem:[#allocation5 + $0x1ac] sm:$0xff]
    %v108 = vld [vmem:[#allocation5 + $0x1b4] sm:$0xff]
    %v109 = vld [vmem:[#allocation5 + $0x1bc] sm:$0xff]
    %v110 = vld [vmem:[#allocation5 + $0x1c4] sm:$0xff]
    %v111 = vld [vmem:[#allocation5 + $0x1cc] sm:$0xff]
    %v112 = vld [vmem:[#allocation5 + $0x1d4] sm:$0xff]
    %v113 = vld [vmem:[#allocation5 + $0x1dc] sm:$0xff]
    %v114 = vld [vmem:[#allocation5 + $0x1e4] sm:$0xff]
    %v115 = vld [vmem:[#allocation5 + $0x1ec] sm:$0xff]
    %v116 = vld [vmem:[#allocation5 + $0x1f4] sm:$0xf]
    %v117 = vld [vmem:[#allocation5 + $0x1f8] sm:$0xff]
    %v118 = vld [vmem:[#allocation5 + $0x200] sm:$0xff]
    %v119 = vld [vmem:[#allocation5 + $0x208] sm:$0xff]
    %v120 = vld [vmem:[#allocation5 + $0x210] sm:$0xff]
    %v121 = vld [vmem:[#allocation5 + $0x218] sm:$0xff]
    %v122 = vld [vmem:[#allocation5 + $0x220] sm:$0xff]
    %v123 = vld [vmem:[#allocation5 + $0x228] sm:$0xff]
    %v124 = vld [vmem:[#allocation5 + $0x230] sm:$0xff]
    %v125 = vld [vmem:[#allocation5 + $0x238] sm:$0xff]
    %v126 = vld [vmem:[#allocation5 + $0x240] sm:$0xff]
    %v127 = vld [vmem:[#allocation5 + $0x248] sm:$0xf]
    %v128 = vld [vmem:[#allocation5 + $0x24c] sm:$0xff]
    %v129 = vld [vmem:[#allocation5 + $0x254] sm:$0xff]
    %v130 = vld [vmem:[#allocation5 + $0x25c] sm:$0xff]
    %v131 = vld [vmem:[#allocation5 + $0x264] sm:$0xff]
    %v132 = vld [vmem:[#allocation5 + $0x26c] sm:$0xff]
    %v133 = vld [vmem:[#allocation5 + $0x274] sm:$0xff]
    %v134 = vld [vmem:[#allocation5 + $0x27c] sm:$0xff]
    %v135 = vld [vmem:[#allocation5 + $0x284] sm:$0xff]
    %v136 = vld [vmem:[#allocation5 + $0x28c] sm:$0xff]
    %v137 = vld [vmem:[#allocation5 + $0x294] sm:$0xff]
    %v138 = vld [vmem:[#allocation5 + $0x29c] sm:$0xf]
    %v139 = vld [vmem:[#allocation5 + $0x2a0] sm:$0xff]
    %v140 = vld [vmem:[#allocation5 + $0x2a8] sm:$0xff]
    %v141 = vld [vmem:[#allocation5 + $0x2b0] sm:$0xff]
    %v142 = vld [vmem:[#allocation5 + $0x2b8] sm:$0xff]
    %v143 = vld [vmem:[#allocation5 + $0x2c0] sm:$0xff]
    %v144 = vld [vmem:[#allocation5 + $0x2c8] sm:$0xff]
    %v145 = vld [vmem:[#allocation5 + $0x2d0] sm:$0xff]
    %v146 = vld [vmem:[#allocation5 + $0x2d8] sm:$0xff]
    %v147 = vld [vmem:[#allocation5 + $0x2e0] sm:$0xff]
    %v148 = vld [vmem:[#allocation5 + $0x2e8] sm:$0xff]
    %v149 = vld [vmem:[#allocation5 + $0x2f0] sm:$0xf]
    %v150 = vld [vmem:[#allocation5 + $0x2f4] sm:$0xff]
    %v151 = vld [vmem:[#allocation5 + $0x2fc] sm:$0xff]
    %v152 = vld [vmem:[#allocation5 + $0x304] sm:$0xff]
    %v153 = vld [vmem:[#allocation5 + $0x30c] sm:$0xff]
    %v154 = vld [vmem:[#allocation5 + $0x314] sm:$0xff]
    %v155 = vld [vmem:[#allocation5 + $0x31c] sm:$0xff]
    %v156 = vld [vmem:[#allocation5 + $0x324] sm:$0xff]
    %v157 = vld [vmem:[#allocation5 + $0x32c] sm:$0xff]
    %v158 = vld [vmem:[#allocation5 + $0x334] sm:$0xff]
    %v159 = vld [vmem:[#allocation5 + $0x33c] sm:$0xff]
    %v160 = vld [vmem:[#allocation5 + $0x344] sm:$0xf]
    %v161 = vld [vmem:[#allocation5 + $0x348] sm:$0xff]
    %v162 = vld [vmem:[#allocation5 + $0x350] sm:$0xff]
    %v163 = vld [vmem:[#allocation5 + $0x358] sm:$0xff]
    %v164 = vld [vmem:[#allocation5 + $0x360] sm:$0xff]
    %v165 = vld [vmem:[#allocation5 + $0x368] sm:$0xff]
    %v166 = vld [vmem:[#allocation5 + $0x370] sm:$0xff]
    %v167 = vld [vmem:[#allocation5 + $0x378] sm:$0xff]
    %v168 = vld [vmem:[#allocation5 + $0x380] sm:$0xff]
    %v169 = vld [vmem:[#allocation5 + $0x388] sm:$0xff]
    %v170 = vld [vmem:[#allocation5 + $0x390] sm:$0xff]
    %v171 = vld [vmem:[#allocation5 + $0x398] sm:$0xf]
    %v172 = vld [vmem:[#allocation5 + $0x39c] sm:$0xff]
    %v173 = vld [vmem:[#allocation5 + $0x3a4] sm:$0xff]
    %v174 = vld [vmem:[#allocation5 + $0x3ac] sm:$0xff]
    %v175 = vld [vmem:[#allocation5 + $0x3b4] sm:$0xff]
    %v176 = vld [vmem:[#allocation5 + $0x3bc] sm:$0xff]
    %v177 = vld [vmem:[#allocation5 + $0x3c4] sm:$0xff]
    %v178 = vld [vmem:[#allocation5 + $0x3cc] sm:$0xff]
    %v179 = vld [vmem:[#allocation5 + $0x3d4] sm:$0xff]
    %v180 = vld [vmem:[#allocation5 + $0x3dc] sm:$0xff]
    %v181 = vld [vmem:[#allocation5 + $0x3e4] sm:$0xff]
    %v182 = vld [vmem:[#allocation5 + $0x3ec] sm:$0xf]
    %v183 = vld [vmem:[#allocation5 + $0x3f0] sm:$0xff]
    %v184 = vld [vmem:[#allocation5 + $0x3f8] sm:$0xff]
    %v185 = vld [vmem:[#allocation5 + $0x400] sm:$0xff]
    %v186 = vld [vmem:[#allocation5 + $0x408] sm:$0xff]
    %v187 = vld [vmem:[#allocation5 + $0x410] sm:$0xff]
    %v188 = vld [vmem:[#allocation5 + $0x418] sm:$0xff]
    %v189 = vld [vmem:[#allocation5 + $0x420] sm:$0xff]
    %v190 = vld [vmem:[#allocation5 + $0x428] sm:$0xff]
    %v191 = vld [vmem:[#allocation5 + $0x430] sm:$0xff]
    %v192 = vld [vmem:[#allocation5 + $0x438] sm:$0xff]
    %v193 = vld [vmem:[#allocation5 + $0x440] sm:$0xf]
    %v194 = vld [vmem:[#allocation5 + $0x444] sm:$0xff]
    %v195 = vld [vmem:[#allocation5 + $0x44c] sm:$0xff]
    %v196 = vld [vmem:[#allocation5 + $0x454] sm:$0xff]
    %v197 = vld [vmem:[#allocation5 + $0x45c] sm:$0xff]
    %v198 = vld [vmem:[#allocation5 + $0x464] sm:$0xff]
    %v199 = vld [vmem:[#allocation5 + $0x46c] sm:$0xff]
    %v200 = vld [vmem:[#allocation5 + $0x474] sm:$0xff]
    %v201 = vld [vmem:[#allocation5 + $0x47c] sm:$0xff]
    %v202 = vld [vmem:[#allocation5 + $0x484] sm:$0xff]
    %v203 = vld [vmem:[#allocation5 + $0x48c] sm:$0xff]
    %v204 = vld [vmem:[#allocation5 + $0x494] sm:$0xf]
    %v205 = vld [vmem:[#allocation5 + $0x498] sm:$0xff]
    %v206 = vld [vmem:[#allocation5 + $0x4a0] sm:$0xff]
    %v207 = vld [vmem:[#allocation5 + $0x4a8] sm:$0xff]
    %v208 = vld [vmem:[#allocation5 + $0x4b0] sm:$0xff]
    %v209 = vld [vmem:[#allocation5 + $0x4b8] sm:$0xff]
    %v210 = vld [vmem:[#allocation5 + $0x4c0] sm:$0xff]
    %v211 = vld [vmem:[#allocation5 + $0x4c8] sm:$0xff]
    %v212 = vld [vmem:[#allocation5 + $0x4d0] sm:$0xff]
    %v213 = vld [vmem:[#allocation5 + $0x4d8] sm:$0xff]
    %v214 = vld [vmem:[#allocation5 + $0x4e0] sm:$0xff]
    %v215 = vld [vmem:[#allocation5 + $0x4e8] sm:$0xf]
    %v216 = vld [vmem:[#allocation5 + $0x4ec] sm:$0xff]
    %v217 = vld [vmem:[#allocation5 + $0x4f4] sm:$0xff]
    %v218 = vld [vmem:[#allocation5 + $0x4fc] sm:$0xff]
    %v219 = vld [vmem:[#allocation5 + $0x504] sm:$0xff]
    %v220 = vld [vmem:[#allocation5 + $0x50c] sm:$0xff]
    %v221 = vld [vmem:[#allocation5 + $0x514] sm:$0xff]
    %v222 = vld [vmem:[#allocation5 + $0x51c] sm:$0xff]
    %v223 = vld [vmem:[#allocation5 + $0x524] sm:$0xff]
    %v224 = vld [vmem:[#allocation5 + $0x52c] sm:$0xff]
    %v225 = vld [vmem:[#allocation5 + $0x534] sm:$0xff]
    %v226 = vld [vmem:[#allocation5 + $0x53c] sm:$0xf]
    %v227 = vld [vmem:[#allocation5 + $0x540] sm:$0xff]
    %v228 = vld [vmem:[#allocation5 + $0x548] sm:$0xff]
    %v229 = vld [vmem:[#allocation5 + $0x550] sm:$0xff]
    %v230 = vld [vmem:[#allocation5 + $0x558] sm:$0xff]
    %v231 = vld [vmem:[#allocation5 + $0x560] sm:$0xff]
    %v232 = vld [vmem:[#allocation5 + $0x568] sm:$0xff]
    %v233 = vld [vmem:[#allocation5 + $0x570] sm:$0xff]
    %v234 = vld [vmem:[#allocation5 + $0x578] sm:$0xff]
    %v235 = vld [vmem:[#allocation5 + $0x580] sm:$0xff]
    %v236 = vld [vmem:[#allocation5 + $0x588] sm:$0xff]
    %v237 = vld [vmem:[#allocation5 + $0x590] sm:$0xf]
    %v238 = vld [vmem:[#allocation5 + $0x594] sm:$0xff]
    %v239 = vld [vmem:[#allocation5 + $0x59c] sm:$0xff]
    %v240 = vld [vmem:[#allocation5 + $0x5a4] sm:$0xff]
    %v241 = vld [vmem:[#allocation5 + $0x5ac] sm:$0xff]
    %v242 = vld [vmem:[#allocation5 + $0x5b4] sm:$0xff]
    %v243 = vld [vmem:[#allocation5 + $0x5bc] sm:$0xff]
    %v244 = vld [vmem:[#allocation5 + $0x5c4] sm:$0xff]
    %v245 = vld [vmem:[#allocation5 + $0x5cc] sm:$0xff]
    %v246 = vld [vmem:[#allocation5 + $0x5d4] sm:$0xff]
    %v247 = vld [vmem:[#allocation5 + $0x5dc] sm:$0xff]
    %v248 = vld [vmem:[#allocation5 + $0x5e4] sm:$0xf]
    %v249 = vld [vmem:[#allocation5 + $0x5e8] sm:$0xff]
    %v250 = vld [vmem:[#allocation5 + $0x5f0] sm:$0xff]
    %v251 = vld [vmem:[#allocation5 + $0x5f8] sm:$0xff]
    %v252 = vld [vmem:[#allocation5 + $0x600] sm:$0xff]
    %v253 = vld [vmem:[#allocation5 + $0x608] sm:$0xff]
    %v254 = vld [vmem:[#allocation5 + $0x610] sm:$0xff]
    %v255 = vld [vmem:[#allocation5 + $0x618] sm:$0xff]
    %v256 = vld [vmem:[#allocation5 + $0x620] sm:$0xff]
    %v257 = vld [vmem:[#allocation5 + $0x628] sm:$0xff]
    %v258 = vld [vmem:[#allocation5 + $0x630] sm:$0xff]
    %v259 = vld [vmem:[#allocation5 + $0x638] sm:$0xf]
    %v260 = vld [vmem:[#allocation5 + $0x63c] sm:$0xff]
    %v261 = vld [vmem:[#allocation5 + $0x644] sm:$0xff]
    %v262 = vld [vmem:[#allocation5 + $0x64c] sm:$0xff]
    %v263 = vld [vmem:[#allocation5 + $0x654] sm:$0xff]
    %v264 = vld [vmem:[#allocation5 + $0x65c] sm:$0xff]
    %v265 = vld [vmem:[#allocation5 + $0x664] sm:$0xff]
    %v266 = vld [vmem:[#allocation5 + $0x66c] sm:$0xff]
    %v267 = vld [vmem:[#allocation5 + $0x674] sm:$0xff]
    %v268 = vld [vmem:[#allocation5 + $0x67c] sm:$0xff]
    %v269 = vld [vmem:[#allocation5 + $0x684] sm:$0xff]
    %v270 = vld [vmem:[#allocation5 + $0x68c] sm:$0xf]
    %v271 = vld [vmem:[#allocation5 + $0x690] sm:$0xff]
    %v272 = vld [vmem:[#allocation5 + $0x698] sm:$0xff]
    %v273 = vld [vmem:[#allocation5 + $0x6a0] sm:$0xff]
    %v274 = vld [vmem:[#allocation5 + $0x6a8] sm:$0xff]
    %v275 = vld [vmem:[#allocation5 + $0x6b0] sm:$0xff]
    %v276 = vld [vmem:[#allocation5 + $0x6b8] sm:$0xff]
    %v277 = vld [vmem:[#allocation5 + $0x6c0] sm:$0xff]
    %v278 = vld [vmem:[#allocation5 + $0x6c8] sm:$0xff]
    %v279 = vld [vmem:[#allocation5 + $0x6d0] sm:$0xff]
    %v280 = vld [vmem:[#allocation5 + $0x6d8] sm:$0xff]
    %v281 = vld [vmem:[#allocation5 + $0x6e0] sm:$0xf]
    %v282 = vld [vmem:[#allocation5 + $0x6e4] sm:$0xff]
    %v283 = vld [vmem:[#allocation5 + $0x6ec] sm:$0xff]
    %v284 = vld [vmem:[#allocation5 + $0x6f4] sm:$0xff]
    %v285 = vld [vmem:[#allocation5 + $0x6fc] sm:$0xff]
    %v286 = vld [vmem:[#allocation5 + $0x704] sm:$0xff]
    %v287 = vld [vmem:[#allocation5 + $0x70c] sm:$0xff]
    %v288 = vld [vmem:[#allocation5 + $0x714] sm:$0xff]
    %v289 = vld [vmem:[#allocation5 + $0x71c] sm:$0xff]
    %v290 = vld [vmem:[#allocation5 + $0x724] sm:$0xff]
    %v291 = vld [vmem:[#allocation5 + $0x72c] sm:$0xff]
    %v292 = vld [vmem:[#allocation5 + $0x734] sm:$0xf]
    %v293 = vld [vmem:[#allocation5 + $0x738] sm:$0xff]
    %v294 = vld [vmem:[#allocation5 + $0x740] sm:$0xff]
    %v295 = vld [vmem:[#allocation5 + $0x748] sm:$0xff]
    %v296 = vld [vmem:[#allocation5 + $0x750] sm:$0xff]
    %v297 = vld [vmem:[#allocation5 + $0x758] sm:$0xff]
    %v298 = vld [vmem:[#allocation5 + $0x760] sm:$0xff]
    %v299 = vld [vmem:[#allocation5 + $0x768] sm:$0xff]
    %v300 = vld [vmem:[#allocation5 + $0x770] sm:$0xff]
    %v301 = vld [vmem:[#allocation5 + $0x778] sm:$0xff]
    %v302 = vld [vmem:[#allocation5 + $0x780] sm:$0xff]
    %v303 = vld [vmem:[#allocation5 + $0x788] sm:$0xf]
    %v304 = vld [vmem:[#allocation5 + $0x78c] sm:$0xff]
    %v305 = vld [vmem:[#allocation5 + $0x794] sm:$0xff]
    %v306 = vld [vmem:[#allocation5 + $0x79c] sm:$0xff]
    %v307 = vld [vmem:[#allocation5 + $0x7a4] sm:$0xff]
    %v308 = vld [vmem:[#allocation5 + $0x7ac] sm:$0xff]
    %v309 = vld [vmem:[#allocation5 + $0x7b4] sm:$0xff]
    %v310 = vld [vmem:[#allocation5 + $0x7bc] sm:$0xff]
    %v311 = vld [vmem:[#allocation5 + $0x7c4] sm:$0xff]
    %v312 = vld [vmem:[#allocation5 + $0x7cc] sm:$0xff]
    %v313 = vld [vmem:[#allocation5 + $0x7d4] sm:$0xff]
    %v314 = vld [vmem:[#allocation5 + $0x7dc] sm:$0xf]
    %v315 = vld [vmem:[#allocation5 + $0x7e0] sm:$0xff]
    %v316 = vld [vmem:[#allocation5 + $0x7e8] sm:$0xff]
    %v317 = vld [vmem:[#allocation5 + $0x7f0] sm:$0xff]
    %v318 = vld [vmem:[#allocation5 + $0x7f8] sm:$0xff]
    %v319 = vld [vmem:[#allocation5 + $0x800] sm:$0xff]
    %v320 = vld [vmem:[#allocation5 + $0x808] sm:$0xff]
    %v321 = vld [vmem:[#allocation5 + $0x810] sm:$0xff]
    %v322 = vld [vmem:[#allocation5 + $0x818] sm:$0xff]
    %v323 = vld [vmem:[#allocation5 + $0x820] sm:$0xff]
    %v324 = vld [vmem:[#allocation5 + $0x828] sm:$0xff]
    %v325 = vld [vmem:[#allocation5 + $0x830] sm:$0xf]
    %v326 = vld [vmem:[#allocation5 + $0x834] sm:$0xff]
    %v327 = vld [vmem:[#allocation5 + $0x83c] sm:$0xff]
    %v328 = vld [vmem:[#allocation5 + $0x844] sm:$0xff]
    %v329 = vld [vmem:[#allocation5 + $0x84c] sm:$0xff]
    %v330 = vld [vmem:[#allocation5 + $0x854] sm:$0xff]
    %v331 = vld [vmem:[#allocation5 + $0x85c] sm:$0xff]
    %v332 = vld [vmem:[#allocation5 + $0x864] sm:$0xff]
    %v333 = vld [vmem:[#allocation5 + $0x86c] sm:$0xff]
    %v334 = vld [vmem:[#allocation5 + $0x874] sm:$0xff]
    %v335 = vld [vmem:[#allocation5 + $0x87c] sm:$0xff]
    %v336 = vld [vmem:[#allocation5 + $0x884] sm:$0xf]
    %v337 = vld [vmem:[#allocation5 + $0x888] sm:$0xff]
    %v338 = vld [vmem:[#allocation5 + $0x890] sm:$0xff]
    %v339 = vld [vmem:[#allocation5 + $0x898] sm:$0xff]
    %v340 = vld [vmem:[#allocation5 + $0x8a0] sm:$0xff]
    %v341 = vld [vmem:[#allocation5 + $0x8a8] sm:$0xff]
    %v342 = vld [vmem:[#allocation5 + $0x8b0] sm:$0xff]
    %v343 = vld [vmem:[#allocation5 + $0x8b8] sm:$0xff]
    %v344 = vld [vmem:[#allocation5 + $0x8c0] sm:$0xff]
    %v345 = vld [vmem:[#allocation5 + $0x8c8] sm:$0xff]
    %v346 = vld [vmem:[#allocation5 + $0x8d0] sm:$0xff]
    %v347 = vld [vmem:[#allocation5 + $0x8d8] sm:$0xf]
    %v348 = vld [vmem:[#allocation5 + $0x8dc] sm:$0xff]
    %v349 = vld [vmem:[#allocation5 + $0x8e4] sm:$0xff]
    %v350 = vld [vmem:[#allocation5 + $0x8ec] sm:$0xff]
    %v351 = vld [vmem:[#allocation5 + $0x8f4] sm:$0xff]
    %v352 = vld [vmem:[#allocation5 + $0x8fc] sm:$0xff]
    %v353 = vld [vmem:[#allocation5 + $0x904] sm:$0xff]
    %v354 = vld [vmem:[#allocation5 + $0x90c] sm:$0xff]
    %v355 = vld [vmem:[#allocation5 + $0x914] sm:$0xff]
    %v356 = vld [vmem:[#allocation5 + $0x91c] sm:$0xff]
    %v357 = vld [vmem:[#allocation5 + $0x924] sm:$0xff]
    %v358 = vld [vmem:[#allocation5 + $0x92c] sm:$0xf]
    %v359 = vld [vmem:[#allocation5 + $0x930] sm:$0xff]
    %v360 = vld [vmem:[#allocation5 + $0x938] sm:$0xff]
    %v361 = vld [vmem:[#allocation5 + $0x940] sm:$0xff]
    %v362 = vld [vmem:[#allocation5 + $0x948] sm:$0xff]
    %v363 = vld [vmem:[#allocation5 + $0x950] sm:$0xff]
    %v364 = vld [vmem:[#allocation5 + $0x958] sm:$0xff]
    %v365 = vld [vmem:[#allocation5 + $0x960] sm:$0xff]
    %v366 = vld [vmem:[#allocation5 + $0x968] sm:$0xff]
    %v367 = vld [vmem:[#allocation5 + $0x970] sm:$0xff]
    %v368 = vld [vmem:[#allocation5 + $0x978] sm:$0xff]
    %v369 = vld [vmem:[#allocation5 + $0x980] sm:$0xf]
    %v370 = vld [vmem:[#allocation5 + $0x984] sm:$0xff]
    %v371 = vld [vmem:[#allocation5 + $0x98c] sm:$0xff]
    %v372 = vld [vmem:[#allocation5 + $0x994] sm:$0xff]
    %v373 = vld [vmem:[#allocation5 + $0x99c] sm:$0xff]
    %v374 = vld [vmem:[#allocation5 + $0x9a4] sm:$0xff]
    %v375 = vld [vmem:[#allocation5 + $0x9ac] sm:$0xff]
    %v376 = vld [vmem:[#allocation5 + $0x9b4] sm:$0xff]
    %v377 = vld [vmem:[#allocation5 + $0x9bc] sm:$0xff]
    %v378 = vld [vmem:[#allocation5 + $0x9c4] sm:$0xff]
    %v379 = vld [vmem:[#allocation5 + $0x9cc] sm:$0xff]
    %v380 = vld [vmem:[#allocation5 + $0x9d4] sm:$0xf]
    %v381 = vld [vmem:[#allocation5 + $0x9d8] sm:$0xff]
    %v382 = vld [vmem:[#allocation5 + $0x9e0] sm:$0xff]
    %v383 = vld [vmem:[#allocation5 + $0x9e8] sm:$0xff]
    %v384 = vld [vmem:[#allocation5 + $0x9f0] sm:$0xff]
    %v385 = vld [vmem:[#allocation5 + $0x9f8] sm:$0xff]
    %v386 = vld [vmem:[#allocation5 + $0xa00] sm:$0xff]
    %v387 = vld [vmem:[#allocation5 + $0xa08] sm:$0xff]
    %v388 = vld [vmem:[#allocation5 + $0xa10] sm:$0xff]
    %v389 = vld [vmem:[#allocation5 + $0xa18] sm:$0xff]
    %v390 = vld [vmem:[#allocation5 + $0xa20] sm:$0xff]
    %v391 = vld [vmem:[#allocation5 + $0xa28] sm:$0xf]
    %v392 = vld [vmem:[#allocation5 + $0xa2c] sm:$0xff]
    %v393 = vld [vmem:[#allocation5 + $0xa34] sm:$0xff]
    %v394 = vld [vmem:[#allocation5 + $0xa3c] sm:$0xff]
    %v395 = vld [vmem:[#allocation5 + $0xa44] sm:$0xff]
    %v396 = vld [vmem:[#allocation5 + $0xa4c] sm:$0xff]
    %v397 = vld [vmem:[#allocation5 + $0xa54] sm:$0xff]
    %v398 = vld [vmem:[#allocation5 + $0xa5c] sm:$0xff]
    %v399 = vld [vmem:[#allocation5 + $0xa64] sm:$0xff]
    %v400 = vld [vmem:[#allocation5 + $0xa6c] sm:$0xff]
    %v401 = vld [vmem:[#allocation5 + $0xa74] sm:$0xff]
    %v402 = vld [vmem:[#allocation5 + $0xa7c] sm:$0xf]
    %v403 = vld [vmem:[#allocation5 + $0xa80] sm:$0xff]
    %v404 = vld [vmem:[#allocation5 + $0xa88] sm:$0xff]
    %v405 = vld [vmem:[#allocation5 + $0xa90] sm:$0xff]
    %v406 = vld [vmem:[#allocation5 + $0xa98] sm:$0xff]
    %v407 = vld [vmem:[#allocation5 + $0xaa0] sm:$0xff]
    %v408 = vld [vmem:[#allocation5 + $0xaa8] sm:$0xff]
    %v409 = vld [vmem:[#allocation5 + $0xab0] sm:$0xff]
    %v410 = vld [vmem:[#allocation5 + $0xab8] sm:$0xff]
    %v411 = vld [vmem:[#allocation5 + $0xac0] sm:$0xff]
    %v412 = vld [vmem:[#allocation5 + $0xac8] sm:$0xff]
    %v413 = vld [vmem:[#allocation5 + $0xad0] sm:$0xf]
    %v414 = vld [vmem:[#allocation5 + $0xad4] sm:$0xff]
    %v415 = vld [vmem:[#allocation5 + $0xadc] sm:$0xff]
    %v416 = vld [vmem:[#allocation5 + $0xae4] sm:$0xff]
    %v417 = vld [vmem:[#allocation5 + $0xaec] sm:$0xff]
    %v418 = vld [vmem:[#allocation5 + $0xaf4] sm:$0xff]
    %v419 = vld [vmem:[#allocation5 + $0xafc] sm:$0xff]
    %v420 = vld [vmem:[#allocation5 + $0xb04] sm:$0xff]
    %v421 = vld [vmem:[#allocation5 + $0xb0c] sm:$0xff]
    %v422 = vld [vmem:[#allocation5 + $0xb14] sm:$0xff]
    %v423 = vld [vmem:[#allocation5 + $0xb1c] sm:$0xff]
    %v424 = vld [vmem:[#allocation5 + $0xb24] sm:$0xf]
    %v425 = vld [vmem:[#allocation5 + $0xb28] sm:$0xff]
    %v426 = vld [vmem:[#allocation5 + $0xb30] sm:$0xff]
    %v427 = vld [vmem:[#allocation5 + $0xb38] sm:$0xff]
    %v428 = vld [vmem:[#allocation5 + $0xb40] sm:$0xff]
    %v429 = vld [vmem:[#allocation5 + $0xb48] sm:$0xff]
    %v430 = vld [vmem:[#allocation5 + $0xb50] sm:$0xff]
    %v431 = vld [vmem:[#allocation5 + $0xb58] sm:$0xff]
    %v432 = vld [vmem:[#allocation5 + $0xb60] sm:$0xff]
    %v433 = vld [vmem:[#allocation5 + $0xb68] sm:$0xff]
    %v434 = vld [vmem:[#allocation5 + $0xb70] sm:$0xff]
    %v435 = vld [vmem:[#allocation5 + $0xb78] sm:$0xf]
    %v436 = vld [vmem:[#allocation5 + $0xb7c] sm:$0xff]
    %v437 = vld [vmem:[#allocation5 + $0xb84] sm:$0xff]
    %v438 = vld [vmem:[#allocation5 + $0xb8c] sm:$0xff]
    %v439 = vld [vmem:[#allocation5 + $0xb94] sm:$0xff]
    %v440 = vld [vmem:[#allocation5 + $0xb9c] sm:$0xff]
    %v441 = vld [vmem:[#allocation5 + $0xba4] sm:$0xff]
    %v442 = vld [vmem:[#allocation5 + $0xbac] sm:$0xff]
    %v443 = vld [vmem:[#allocation5 + $0xbb4] sm:$0xff]
    %v444 = vld [vmem:[#allocation5 + $0xbbc] sm:$0xff]
    %v445 = vld [vmem:[#allocation5 + $0xbc4] sm:$0xff]
    %v446 = vld [vmem:[#allocation5 + $0xbcc] sm:$0xf]
    %v447 = vld [vmem:[#allocation5 + $0xbd0] sm:$0xff]
    %v448 = vld [vmem:[#allocation5 + $0xbd8] sm:$0xff]
    %v449 = vld [vmem:[#allocation5 + $0xbe0] sm:$0xff]
    %v450 = vld [vmem:[#allocation5 + $0xbe8] sm:$0xff]
    %v451 = vld [vmem:[#allocation5 + $0xbf0] sm:$0xff]
    %v452 = vld [vmem:[#allocation5 + $0xbf8] sm:$0xff]
    %v453 = vld [vmem:[#allocation5 + $0xc00] sm:$0xff]
    %v454 = vld [vmem:[#allocation5 + $0xc08] sm:$0xff]
    %v455 = vld [vmem:[#allocation5 + $0xc10] sm:$0xff]
    %v456 = vld [vmem:[#allocation5 + $0xc18] sm:$0xff]
    %v457 = vld [vmem:[#allocation5 + $0xc20] sm:$0xf]
    %v458 = vld [vmem:[#allocation5 + $0xc24] sm:$0xff]
    %v459 = vld [vmem:[#allocation5 + $0xc2c] sm:$0xff]
    %v460 = vld [vmem:[#allocation5 + $0xc34] sm:$0xff]
    %v461 = vld [vmem:[#allocation5 + $0xc3c] sm:$0xff]
    %v462 = vld [vmem:[#allocation5 + $0xc44] sm:$0xff]
    %v463 = vld [vmem:[#allocation5 + $0xc4c] sm:$0xff]
    %v464 = vld [vmem:[#allocation5 + $0xc54] sm:$0xff]
    %v465 = vld [vmem:[#allocation5 + $0xc5c] sm:$0xff]
    %v466 = vld [vmem:[#allocation5 + $0xc64] sm:$0xff]
    %v467 = vld [vmem:[#allocation5 + $0xc6c] sm:$0xff]
    %v468 = vld [vmem:[#allocation5 + $0xc74] sm:$0xf]
    %v469 = vld [vmem:[#allocation5 + $0xc78] sm:$0xff]
    %v470 = vld [vmem:[#allocation5 + $0xc80] sm:$0xff]
    %v471 = vld [vmem:[#allocation5 + $0xc88] sm:$0xff]
    %v472 = vld [vmem:[#allocation5 + $0xc90] sm:$0xff]
    %v473 = vld [vmem:[#allocation5 + $0xc98] sm:$0xff]
    %v474 = vld [vmem:[#allocation5 + $0xca0] sm:$0xff]
    %v475 = vld [vmem:[#allocation5 + $0xca8] sm:$0xff]
    %v476 = vld [vmem:[#allocation5 + $0xcb0] sm:$0xff]
    %v477 = vld [vmem:[#allocation5 + $0xcb8] sm:$0xff]
    %v478 = vld [vmem:[#allocation5 + $0xcc0] sm:$0xff]
    %v479 = vld [vmem:[#allocation5 + $0xcc8] sm:$0xf]
    %v480 = vld [vmem:[#allocation5 + $0xccc] sm:$0xff]
    %v481 = vld [vmem:[#allocation5 + $0xcd4] sm:$0xff]
    %v482 = vld [vmem:[#allocation5 + $0xcdc] sm:$0xff]
    %v483 = vld [vmem:[#allocation5 + $0xce4] sm:$0xff]
    %v484 = vld [vmem:[#allocation5 + $0xcec] sm:$0xff]
    %v485 = vld [vmem:[#allocation5 + $0xcf4] sm:$0xff]
    %v486 = vld [vmem:[#allocation5 + $0xcfc] sm:$0xff]
    %v487 = vld [vmem:[#allocation5 + $0xd04] sm:$0xff]
    %v488 = vld [vmem:[#allocation5 + $0xd0c] sm:$0xff]
    %v489 = vld [vmem:[#allocation5 + $0xd14] sm:$0xff]
    %v490 = vld [vmem:[#allocation5 + $0xd1c] sm:$0xf]
    %v491 = vld [vmem:[#allocation5 + $0xd20] sm:$0xff]
    %v492 = vld [vmem:[#allocation5 + $0xd28] sm:$0xff]
    %v493 = vld [vmem:[#allocation5 + $0xd30] sm:$0xff]
    %v494 = vld [vmem:[#allocation5 + $0xd38] sm:$0xff]
    %v495 = vld [vmem:[#allocation5 + $0xd40] sm:$0xff]
    %v496 = vld [vmem:[#allocation5 + $0xd48] sm:$0xff]
    %v497 = vld [vmem:[#allocation5 + $0xd50] sm:$0xff]
    %v498 = vld [vmem:[#allocation5 + $0xd58] sm:$0xff]
    %v499 = vld [vmem:[#allocation5 + $0xd60] sm:$0xff]
    %v500 = vld [vmem:[#allocation5 + $0xd68] sm:$0xff]
    %v501 = vld [vmem:[#allocation5 + $0xd70] sm:$0xf]
    %v502 = vld [vmem:[#allocation5 + $0xd74] sm:$0xff]
    %v503 = vld [vmem:[#allocation5 + $0xd7c] sm:$0xff]
    %v504 = vld [vmem:[#allocation5 + $0xd84] sm:$0xff]
    %v505 = vld [vmem:[#allocation5 + $0xd8c] sm:$0xff]
    %v506 = vld [vmem:[#allocation5 + $0xd94] sm:$0xff]
    %v507 = vld [vmem:[#allocation5 + $0xd9c] sm:$0xff]
    %v508 = vld [vmem:[#allocation5 + $0xda4] sm:$0xff]
    %v509 = vld [vmem:[#allocation5 + $0xdac] sm:$0xff]
    %v510 = vld [vmem:[#allocation5 + $0xdb4] sm:$0xff]
    %v511 = vld [vmem:[#allocation5 + $0xdbc] sm:$0xff]
    %v512 = vld [vmem:[#allocation5 + $0xdc4] sm:$0xf]
    %v513 = vld [vmem:[#allocation5 + $0xdc8] sm:$0xff]
    %v514 = vld [vmem:[#allocation5 + $0xdd0] sm:$0xff]
    %v515 = vld [vmem:[#allocation5 + $0xdd8] sm:$0xff]
    %v516 = vld [vmem:[#allocation5 + $0xde0] sm:$0xff]
    %v517 = vld [vmem:[#allocation5 + $0xde8] sm:$0xff]
    %v518 = vld [vmem:[#allocation5 + $0xdf0] sm:$0xff]
    %v519 = vld [vmem:[#allocation5 + $0xdf8] sm:$0xff]
    %v520 = vld [vmem:[#allocation5 + $0xe00] sm:$0xff]
    %v521 = vld [vmem:[#allocation5 + $0xe08] sm:$0xff]
    %v522 = vld [vmem:[#allocation5 + $0xe10] sm:$0xff]
    %v523 = vld [vmem:[#allocation5 + $0xe18] sm:$0xf]
    %v524 = vld [vmem:[#allocation5 + $0xe1c] sm:$0xff]
    %v525 = vld [vmem:[#allocation5 + $0xe24] sm:$0xff]
    %v526 = vld [vmem:[#allocation5 + $0xe2c] sm:$0xff]
    %v527 = vld [vmem:[#allocation5 + $0xe34] sm:$0xff]
    %v528 = vld [vmem:[#allocation5 + $0xe3c] sm:$0xff]
    %v529 = vld [vmem:[#allocation5 + $0xe44] sm:$0xff]
    %v530 = vld [vmem:[#allocation5 + $0xe4c] sm:$0xff]
    %v531 = vld [vmem:[#allocation5 + $0xe54] sm:$0xff]
    %v532 = vld [vmem:[#allocation5 + $0xe5c] sm:$0xff]
    %v533 = vld [vmem:[#allocation5 + $0xe64] sm:$0xff]
    %v534 = vld [vmem:[#allocation5 + $0xe6c] sm:$0xf]
    %v535 = vld [vmem:[#allocation5 + $0xe70] sm:$0xff]
    %v536 = vld [vmem:[#allocation5 + $0xe78] sm:$0xff]
    %v537 = vld [vmem:[#allocation5 + $0xe80] sm:$0xff]
    %v538 = vld [vmem:[#allocation5 + $0xe88] sm:$0xff]
    %v539 = vld [vmem:[#allocation5 + $0xe90] sm:$0xff]
    %v540 = vld [vmem:[#allocation5 + $0xe98] sm:$0xff]
    %v541 = vld [vmem:[#allocation5 + $0xea0] sm:$0xff]
    %v542 = vld [vmem:[#allocation5 + $0xea8] sm:$0xff]
    %v543 = vld [vmem:[#allocation5 + $0xeb0] sm:$0xff]
    %v544 = vld [vmem:[#allocation5 + $0xeb8] sm:$0xff]
    %v545 = vld [vmem:[#allocation5 + $0xec0] sm:$0xf]
    %v546 = vld [vmem:[#allocation5 + $0xec4] sm:$0xff]
    %v547 = vld [vmem:[#allocation5 + $0xecc] sm:$0xff]
    %v548 = vld [vmem:[#allocation5 + $0xed4] sm:$0xff]
    %v549 = vld [vmem:[#allocation5 + $0xedc] sm:$0xff]
    %v550 = vld [vmem:[#allocation5 + $0xee4] sm:$0xff]
    %v551 = vld [vmem:[#allocation5 + $0xeec] sm:$0xff]
    %v552 = vld [vmem:[#allocation5 + $0xef4] sm:$0xff]
    %v553 = vld [vmem:[#allocation5 + $0xefc] sm:$0xff]
    %v554 = vld [vmem:[#allocation5 + $0xf04] sm:$0xff]
    %v555 = vld [vmem:[#allocation5 + $0xf0c] sm:$0xff]
    %v556 = vld [vmem:[#allocation5 + $0xf14] sm:$0xf]
    %v557 = vld [vmem:[#allocation5 + $0xf18] sm:$0xff]
    %v558 = vld [vmem:[#allocation5 + $0xf20] sm:$0xff]
    %v559 = vld [vmem:[#allocation5 + $0xf28] sm:$0xff]
    %v560 = vld [vmem:[#allocation5 + $0xf30] sm:$0xff]
    %v561 = vld [vmem:[#allocation5 + $0xf38] sm:$0xff]
    %v562 = vld [vmem:[#allocation5 + $0xf40] sm:$0xff]
    %v563 = vld [vmem:[#allocation5 + $0xf48] sm:$0xff]
    %v564 = vld [vmem:[#allocation5 + $0xf50] sm:$0xff]
    %v565 = vld [vmem:[#allocation5 + $0xf58] sm:$0xff]
    %v566 = vld [vmem:[#allocation5 + $0xf60] sm:$0xff]
    %v567 = vld [vmem:[#allocation5 + $0xf68] sm:$0xf]
    %v568 = vld [vmem:[#allocation5 + $0xf6c] sm:$0xff]
    %v569 = vld [vmem:[#allocation5 + $0xf74] sm:$0xff]
    %v570 = vld [vmem:[#allocation5 + $0xf7c] sm:$0xff]
    %v571 = vld [vmem:[#allocation5 + $0xf84] sm:$0xff]
    %v572 = vld [vmem:[#allocation5 + $0xf8c] sm:$0xff]
    %v573 = vld [vmem:[#allocation5 + $0xf94] sm:$0xff]
    %v574 = vld [vmem:[#allocation5 + $0xf9c] sm:$0xff]
    %v575 = vld [vmem:[#allocation5 + $0xfa4] sm:$0xff]
    %v576 = vld [vmem:[#allocation5 + $0xfac] sm:$0xff]
    %v577 = vld [vmem:[#allocation5 + $0xfb4] sm:$0xff]
    %v578 = vld [vmem:[#allocation5 + $0xfbc] sm:$0xf]
    %v579 = vld [vmem:[#allocation5 + $0xfc0] sm:$0xff]
    %v580 = vld [vmem:[#allocation5 + $0xfc8] sm:$0xff]
    %v581 = vld [vmem:[#allocation5 + $0xfd0] sm:$0xff]
    %v582 = vld [vmem:[#allocation5 + $0xfd8] sm:$0xff]
    %v583 = vld [vmem:[#allocation5 + $0xfe0] sm:$0xff]
    %v584 = vld [vmem:[#allocation5 + $0xfe8] sm:$0xff]
    %v585 = vld [vmem:[#allocation5 + $0xff0] sm:$0xff]
    %v586 = vld [vmem:[#allocation5 + $0xff8] sm:$0xff]
    %v587 = vld [vmem:[#allocation5 + $0x1000] sm:$0xff]
    %v588 = vld [vmem:[#allocation5 + $0x1008] sm:$0xff]
    %v589 = vld [vmem:[#allocation5 + $0x1010] sm:$0xf]
    %v590 = vld [vmem:[#allocation5 + $0x1014] sm:$0xff]
    %v591 = vld [vmem:[#allocation5 + $0x101c] sm:$0xff]
    %v592 = vld [vmem:[#allocation5 + $0x1024] sm:$0xff]
    %v593 = vld [vmem:[#allocation5 + $0x102c] sm:$0xff]
    %v594 = vld [vmem:[#allocation5 + $0x1034] sm:$0xff]
    %v595 = vld [vmem:[#allocation5 + $0x103c] sm:$0xff]
    %v596 = vld [vmem:[#allocation5 + $0x1044] sm:$0xff]
    %v597 = vld [vmem:[#allocation5 + $0x104c] sm:$0xff]
    %v598 = vld [vmem:[#allocation5 + $0x1054] sm:$0xff]
    %v599 = vld [vmem:[#allocation5 + $0x105c] sm:$0xff]
    %v600 = vld [vmem:[#allocation5 + $0x1064] sm:$0xf]
    %v601 = vld [vmem:[#allocation5 + $0x1068] sm:$0xff]
    %v602 = vld [vmem:[#allocation5 + $0x1070] sm:$0xff]
    %v603 = vld [vmem:[#allocation5 + $0x1078] sm:$0xff]
    %v604 = vld [vmem:[#allocation5 + $0x1080] sm:$0xff]
    %v605 = vld [vmem:[#allocation5 + $0x1088] sm:$0xff]
    %v606 = vld [vmem:[#allocation5 + $0x1090] sm:$0xff]
    %v607 = vld [vmem:[#allocation5 + $0x1098] sm:$0xff]
    %v608 = vld [vmem:[#allocation5 + $0x10a0] sm:$0xff]
    %v609 = vld [vmem:[#allocation5 + $0x10a8] sm:$0xff]
    %v610 = vld [vmem:[#allocation5 + $0x10b0] sm:$0xff]
    %v611 = vld [vmem:[#allocation5 + $0x10b8] sm:$0xf]
    %v612 = vld [vmem:[#allocation5 + $0x10bc] sm:$0xff]
    %v613 = vld [vmem:[#allocation5 + $0x10c4] sm:$0xff]
    %v614 = vld [vmem:[#allocation5 + $0x10cc] sm:$0xff]
    %v615 = vld [vmem:[#allocation5 + $0x10d4] sm:$0xff]
    %v616 = vld [vmem:[#allocation5 + $0x10dc] sm:$0xff]
    %v617 = vld [vmem:[#allocation5 + $0x10e4] sm:$0xff]
    %v618 = vld [vmem:[#allocation5 + $0x10ec] sm:$0xff]
    %v619 = vld [vmem:[#allocation5 + $0x10f4] sm:$0xff]
    %v620 = vld [vmem:[#allocation5 + $0x10fc] sm:$0xff]
    %v621 = vld [vmem:[#allocation5 + $0x1104] sm:$0xff]
    %v622 = vld [vmem:[#allocation5 + $0x110c] sm:$0xf]
    %v623 = vld [vmem:[#allocation5 + $0x1110] sm:$0xff]
    %v624 = vld [vmem:[#allocation5 + $0x1118] sm:$0xff]
    %v625 = vld [vmem:[#allocation5 + $0x1120] sm:$0xff]
    %v626 = vld [vmem:[#allocation5 + $0x1128] sm:$0xff]
    %v627 = vld [vmem:[#allocation5 + $0x1130] sm:$0xff]
    %v628 = vld [vmem:[#allocation5 + $0x1138] sm:$0xff]
    %v629 = vld [vmem:[#allocation5 + $0x1140] sm:$0xff]
    %v630 = vld [vmem:[#allocation5 + $0x1148] sm:$0xff]
    %v631 = vld [vmem:[#allocation5 + $0x1150] sm:$0xff]
    %v632 = vld [vmem:[#allocation5 + $0x1158] sm:$0xff]
    %v633 = vld [vmem:[#allocation5 + $0x1160] sm:$0xf]
    %v634 = vld [vmem:[#allocation5 + $0x1164] sm:$0xff]
    %v635 = vld [vmem:[#allocation5 + $0x116c] sm:$0xff]
    %v636 = vld [vmem:[#allocation5 + $0x1174] sm:$0xff]
    %v637 = vld [vmem:[#allocation5 + $0x117c] sm:$0xff]
    %v638 = vld [vmem:[#allocation5 + $0x1184] sm:$0xff]
    %v639 = vld [vmem:[#allocation5 + $0x118c] sm:$0xff]
    %v640 = vld [vmem:[#allocation5 + $0x1194] sm:$0xff]
    %v641 = vld [vmem:[#allocation5 + $0x119c] sm:$0xff]
    %v642 = vld [vmem:[#allocation5 + $0x11a4] sm:$0xff]
    %v643 = vld [vmem:[#allocation5 + $0x11ac] sm:$0xff]
    %v644 = vld [vmem:[#allocation5 + $0x11b4] sm:$0xf]
    %v645 = vld [vmem:[#allocation5 + $0x11b8] sm:$0xff]
    %v646 = vld [vmem:[#allocation5 + $0x11c0] sm:$0xff]
    %v647 = vld [vmem:[#allocation5 + $0x11c8] sm:$0xff]
    %v648 = vld [vmem:[#allocation5 + $0x11d0] sm:$0xff]
    %v649 = vld [vmem:[#allocation5 + $0x11d8] sm:$0xff]
    %v650 = vld [vmem:[#allocation5 + $0x11e0] sm:$0xff]
    %v651 = vld [vmem:[#allocation5 + $0x11e8] sm:$0xff]
    %v652 = vld [vmem:[#allocation5 + $0x11f0] sm:$0xff]
    %v653 = vld [vmem:[#allocation5 + $0x11f8] sm:$0xff]
    %v654 = vld [vmem:[#allocation5 + $0x1200] sm:$0xff]
    %v655 = vld [vmem:[#allocation5 + $0x1208] sm:$0xf]
    %v656 = vld [vmem:[#allocation5 + $0x120c] sm:$0xff]
    %v657 = vld [vmem:[#allocation5 + $0x1214] sm:$0xff]
    %v658 = vld [vmem:[#allocation5 + $0x121c] sm:$0xff]
    %v659 = vld [vmem:[#allocation5 + $0x1224] sm:$0xff]
    %v660 = vld [vmem:[#allocation5 + $0x122c] sm:$0xff]
    %v661 = vld [vmem:[#allocation5 + $0x1234] sm:$0xff]
    %v662 = vld [vmem:[#allocation5 + $0x123c] sm:$0xff]
    %v663 = vld [vmem:[#allocation5 + $0x1244] sm:$0xff]
    %v664 = vld [vmem:[#allocation5 + $0x124c] sm:$0xff]
    %v665 = vld [vmem:[#allocation5 + $0x1254] sm:$0xff]
    %v666 = vld [vmem:[#allocation5 + $0x125c] sm:$0xf]
    %v667 = vld [vmem:[#allocation5 + $0x1260] sm:$0xff]
    %v668 = vld [vmem:[#allocation5 + $0x1268] sm:$0xff]
    %v669 = vld [vmem:[#allocation5 + $0x1270] sm:$0xff]
    %v670 = vld [vmem:[#allocation5 + $0x1278] sm:$0xff]
    %v671 = vld [vmem:[#allocation5 + $0x1280] sm:$0xff]
    %v672 = vld [vmem:[#allocation5 + $0x1288] sm:$0xff]
    %v673 = vld [vmem:[#allocation5 + $0x1290] sm:$0xff]
    %v674 = vld [vmem:[#allocation5 + $0x1298] sm:$0xff]
    %v675 = vld [vmem:[#allocation5 + $0x12a0] sm:$0xff]
    %v676 = vld [vmem:[#allocation5 + $0x12a8] sm:$0xff]
    %v677 = vld [vmem:[#allocation5 + $0x12b0] sm:$0xf]
    %v678 = vld [vmem:[#allocation5 + $0x12b4] sm:$0xff]
    %v679 = vld [vmem:[#allocation5 + $0x12bc] sm:$0xff]
    %v680 = vld [vmem:[#allocation5 + $0x12c4] sm:$0xff]
    %v681 = vld [vmem:[#allocation5 + $0x12cc] sm:$0xff]
    %v682 = vld [vmem:[#allocation5 + $0x12d4] sm:$0xff]
    %v683 = vld [vmem:[#allocation5 + $0x12dc] sm:$0xff]
    %v684 = vld [vmem:[#allocation5 + $0x12e4] sm:$0xff]
    %v685 = vld [vmem:[#allocation5 + $0x12ec] sm:$0xff]
    %v686 = vld [vmem:[#allocation5 + $0x12f4] sm:$0xff]
    %v687 = vld [vmem:[#allocation5 + $0x12fc] sm:$0xff]
    %v688 = vld [vmem:[#allocation5 + $0x1304] sm:$0xf]
    %v689 = vld [vmem:[#allocation5 + $0x1308] sm:$0xff]
    %v690 = vld [vmem:[#allocation5 + $0x1310] sm:$0xff]
    %v691 = vld [vmem:[#allocation5 + $0x1318] sm:$0xff]
    %v692 = vld [vmem:[#allocation5 + $0x1320] sm:$0xff]
    %v693 = vld [vmem:[#allocation5 + $0x1328] sm:$0xff]
    %v694 = vld [vmem:[#allocation5 + $0x1330] sm:$0xff]
    %v695 = vld [vmem:[#allocation5 + $0x1338] sm:$0xff]
    %v696 = vld [vmem:[#allocation5 + $0x1340] sm:$0xff]
    %v697 = vld [vmem:[#allocation5 + $0x1348] sm:$0xff]
    %v698 = vld [vmem:[#allocation5 + $0x1350] sm:$0xff]
    %v699 = vld [vmem:[#allocation5 + $0x1358] sm:$0xf]
    %v700 = vld [vmem:[#allocation5 + $0x135c] sm:$0xff]
    %v701 = vld [vmem:[#allocation5 + $0x1364] sm:$0xff]
    %v702 = vld [vmem:[#allocation5 + $0x136c] sm:$0xff]
    %v703 = vld [vmem:[#allocation5 + $0x1374] sm:$0xff]
    %v704 = vld [vmem:[#allocation5 + $0x137c] sm:$0xff]
    %v705 = vld [vmem:[#allocation5 + $0x1384] sm:$0xff]
    %v706 = vld [vmem:[#allocation5 + $0x138c] sm:$0xff]
    %v707 = vld [vmem:[#allocation5 + $0x1394] sm:$0xff]
    %v708 = vld [vmem:[#allocation5 + $0x139c] sm:$0xff]
    %v709 = vld [vmem:[#allocation5 + $0x13a4] sm:$0xff]
    %v710 = vld [vmem:[#allocation5 + $0x13ac] sm:$0xf]
    %v711 = vld [vmem:[#allocation5 + $0x13b0] sm:$0xff]
    %v712 = vld [vmem:[#allocation5 + $0x13b8] sm:$0xff]
    %v713 = vld [vmem:[#allocation5 + $0x13c0] sm:$0xff]
    %v714 = vld [vmem:[#allocation5 + $0x13c8] sm:$0xff]
    %v715 = vld [vmem:[#allocation5 + $0x13d0] sm:$0xff]
    %v716 = vld [vmem:[#allocation5 + $0x13d8] sm:$0xff]
    %v717 = vld [vmem:[#allocation5 + $0x13e0] sm:$0xff]
    %v718 = vld [vmem:[#allocation5 + $0x13e8] sm:$0xff]
    %v719 = vld [vmem:[#allocation5 + $0x13f0] sm:$0xff]
    %v720 = vld [vmem:[#allocation5 + $0x13f8] sm:$0xff]
    %v721 = vld [vmem:[#allocation5 + $0x1400] sm:$0xf]
    %v722 = vld [vmem:[#allocation5 + $0x1404] sm:$0xff]
    %v723 = vld [vmem:[#allocation5 + $0x140c] sm:$0xff]
    %v724 = vld [vmem:[#allocation5 + $0x1414] sm:$0xff]
    %v725 = vld [vmem:[#allocation5 + $0x141c] sm:$0xff]
    %v726 = vld [vmem:[#allocation5 + $0x1424] sm:$0xff]
    %v727 = vld [vmem:[#allocation5 + $0x142c] sm:$0xff]
    %v728 = vld [vmem:[#allocation5 + $0x1434] sm:$0xff]
    %v729 = vld [vmem:[#allocation5 + $0x143c] sm:$0xff]
    %v730 = vld [vmem:[#allocation5 + $0x1444] sm:$0xff]
    %v731 = vld [vmem:[#allocation5 + $0x144c] sm:$0xff]
    %v732 = vld [vmem:[#allocation5 + $0x1454] sm:$0xf]
    %v733 = vld [vmem:[#allocation5 + $0x1458] sm:$0xff]
    %v734 = vld [vmem:[#allocation5 + $0x1460] sm:$0xff]
    %v735 = vld [vmem:[#allocation5 + $0x1468] sm:$0xff]
    %v736 = vld [vmem:[#allocation5 + $0x1470] sm:$0xff]
    %v737 = vld [vmem:[#allocation5 + $0x1478] sm:$0xff]
    %v738 = vld [vmem:[#allocation5 + $0x1480] sm:$0xff]
    %v739 = vld [vmem:[#allocation5 + $0x1488] sm:$0xff]
    %v740 = vld [vmem:[#allocation5 + $0x1490] sm:$0xff]
    %v741 = vld [vmem:[#allocation5 + $0x1498] sm:$0xff]
    %v742 = vld [vmem:[#allocation5 + $0x14a0] sm:$0xff]
    %v743 = vld [vmem:[#allocation5 + $0x14a8] sm:$0xf]
    %v744 = vld [vmem:[#allocation5 + $0x14ac] sm:$0xff]
    %v745 = vld [vmem:[#allocation5 + $0x14b4] sm:$0xff]
    %v746 = vld [vmem:[#allocation5 + $0x14bc] sm:$0xff]
    %v747 = vld [vmem:[#allocation5 + $0x14c4] sm:$0xff]
    %v748 = vld [vmem:[#allocation5 + $0x14cc] sm:$0xff]
    %v749 = vld [vmem:[#allocation5 + $0x14d4] sm:$0xff]
    %v750 = vld [vmem:[#allocation5 + $0x14dc] sm:$0xff]
    %v751 = vld [vmem:[#allocation5 + $0x14e4] sm:$0xff]
    %v752 = vld [vmem:[#allocation5 + $0x14ec] sm:$0xff]
    %v753 = vld [vmem:[#allocation5 + $0x14f4] sm:$0xff]
    %v754 = vld [vmem:[#allocation5 + $0x14fc] sm:$0xf]
    %v1459 = vunpack.c.l.b16 %v51
    %v1460 = vunpack.c.h.b16 %v51
    %v1461 = vunpack.c.l.b16 %v52
    %v1462 = vunpack.c.h.b16 %v52
    %v1463 = vunpack.c.l.b16 %v53
    %v1464 = vunpack.c.h.b16 %v53
    %v1465 = vunpack.c.l.b16 %v54
    %v1466 = vunpack.c.h.b16 %v54
    %v1467 = vunpack.c.l.b16 %v55
    %v1468 = vunpack.c.h.b16 %v55
    %v1469 = vunpack.c.l.b16 %v56
    %v1470 = vunpack.c.h.b16 %v56
    %v1471 = vunpack.c.l.b16 %v57
    %v1472 = vunpack.c.h.b16 %v57
    %v1473 = vunpack.c.l.b16 %v58
    %v1474 = vunpack.c.h.b16 %v58
    %v1475 = vunpack.c.l.b16 %v59
    %v1476 = vunpack.c.h.b16 %v59
    %v1477 = vunpack.c.l.b16 %v60
    %v1478 = vunpack.c.h.b16 %v60
    %v1479 = vunpack.c.l.b16 %v61
    %v1480 = vunpack.c.l.b16 %v62
    %v1481 = vunpack.c.h.b16 %v62
    %v1482 = vunpack.c.l.b16 %v63
    %v1483 = vunpack.c.h.b16 %v63
    %v1484 = vunpack.c.l.b16 %v64
    %v1485 = vunpack.c.h.b16 %v64
    %v1486 = vunpack.c.l.b16 %v65
    %v1487 = vunpack.c.h.b16 %v65
    %v1488 = vunpack.c.l.b16 %v66
    %v1489 = vunpack.c.h.b16 %v66
    %v1490 = vunpack.c.l.b16 %v67
    %v1491 = vunpack.c.h.b16 %v67
    %v1492 = vunpack.c.l.b16 %v68
    %v1493 = vunpack.c.h.b16 %v68
    %v1494 = vunpack.c.l.b16 %v69
    %v1495 = vunpack.c.h.b16 %v69
    %v1496 = vunpack.c.l.b16 %v70
    %v1497 = vunpack.c.h.b16 %v70
    %v1498 = vunpack.c.l.b16 %v71
    %v1499 = vunpack.c.h.b16 %v71
    %v1500 = vunpack.c.l.b16 %v72
    %v1501 = vunpack.c.l.b16 %v73
    %v1502 = vunpack.c.h.b16 %v73
    %v1503 = vunpack.c.l.b16 %v74
    %v1504 = vunpack.c.h.b16 %v74
    %v1505 = vunpack.c.l.b16 %v75
    %v1506 = vunpack.c.h.b16 %v75
    %v1507 = vunpack.c.l.b16 %v76
    %v1508 = vunpack.c.h.b16 %v76
    %v1509 = vunpack.c.l.b16 %v77
    %v1510 = vunpack.c.h.b16 %v77
    %v1511 = vunpack.c.l.b16 %v78
    %v1512 = vunpack.c.h.b16 %v78
    %v1513 = vunpack.c.l.b16 %v79
    %v1514 = vunpack.c.h.b16 %v79
    %v1515 = vunpack.c.l.b16 %v80
    %v1516 = vunpack.c.h.b16 %v80
    %v1517 = vunpack.c.l.b16 %v81
    %v1518 = vunpack.c.h.b16 %v81
    %v1519 = vunpack.c.l.b16 %v82
    %v1520 = vunpack.c.h.b16 %v82
    %v1521 = vunpack.c.l.b16 %v83
    %v1522 = vunpack.c.l.b16 %v84
    %v1523 = vunpack.c.h.b16 %v84
    %v1524 = vunpack.c.l.b16 %v85
    %v1525 = vunpack.c.h.b16 %v85
    %v1526 = vunpack.c.l.b16 %v86
    %v1527 = vunpack.c.h.b16 %v86
    %v1528 = vunpack.c.l.b16 %v87
    %v1529 = vunpack.c.h.b16 %v87
    %v1530 = vunpack.c.l.b16 %v88
    %v1531 = vunpack.c.h.b16 %v88
    %v1532 = vunpack.c.l.b16 %v89
    %v1533 = vunpack.c.h.b16 %v89
    %v1534 = vunpack.c.l.b16 %v90
    %v1535 = vunpack.c.h.b16 %v90
    %v1536 = vunpack.c.l.b16 %v91
    %v1537 = vunpack.c.h.b16 %v91
    %v1538 = vunpack.c.l.b16 %v92
    %v1539 = vunpack.c.h.b16 %v92
    %v1540 = vunpack.c.l.b16 %v93
    %v1541 = vunpack.c.h.b16 %v93
    %v1542 = vunpack.c.l.b16 %v94
    %v1543 = vunpack.c.l.b16 %v95
    %v1544 = vunpack.c.h.b16 %v95
    %v1545 = vunpack.c.l.b16 %v96
    %v1546 = vunpack.c.h.b16 %v96
    %v1547 = vunpack.c.l.b16 %v97
    %v1548 = vunpack.c.h.b16 %v97
    %v1549 = vunpack.c.l.b16 %v98
    %v1550 = vunpack.c.h.b16 %v98
    %v1551 = vunpack.c.l.b16 %v99
    %v1552 = vunpack.c.h.b16 %v99
    %v1553 = vunpack.c.l.b16 %v100
    %v1554 = vunpack.c.h.b16 %v100
    %v1555 = vunpack.c.l.b16 %v101
    %v1556 = vunpack.c.h.b16 %v101
    %v1557 = vunpack.c.l.b16 %v102
    %v1558 = vunpack.c.h.b16 %v102
    %v1559 = vunpack.c.l.b16 %v103
    %v1560 = vunpack.c.h.b16 %v103
    %v1561 = vunpack.c.l.b16 %v104
    %v1562 = vunpack.c.h.b16 %v104
    %v1563 = vunpack.c.l.b16 %v105
    %v1564 = vunpack.c.l.b16 %v106
    %v1565 = vunpack.c.h.b16 %v106
    %v1566 = vunpack.c.l.b16 %v107
    %v1567 = vunpack.c.h.b16 %v107
    %v1568 = vunpack.c.l.b16 %v108
    %v1569 = vunpack.c.h.b16 %v108
    %v1570 = vunpack.c.l.b16 %v109
    %v1571 = vunpack.c.h.b16 %v109
    %v1572 = vunpack.c.l.b16 %v110
    %v1573 = vunpack.c.h.b16 %v110
    %v1574 = vunpack.c.l.b16 %v111
    %v1575 = vunpack.c.h.b16 %v111
    %v1576 = vunpack.c.l.b16 %v112
    %v1577 = vunpack.c.h.b16 %v112
    %v1578 = vunpack.c.l.b16 %v113
    %v1579 = vunpack.c.h.b16 %v113
    %v1580 = vunpack.c.l.b16 %v114
    %v1581 = vunpack.c.h.b16 %v114
    %v1582 = vunpack.c.l.b16 %v115
    %v1583 = vunpack.c.h.b16 %v115
    %v1584 = vunpack.c.l.b16 %v116
    %v1585 = vunpack.c.l.b16 %v117
    %v1586 = vunpack.c.h.b16 %v117
    %v1587 = vunpack.c.l.b16 %v118
    %v1588 = vunpack.c.h.b16 %v118
    %v1589 = vunpack.c.l.b16 %v119
    %v1590 = vunpack.c.h.b16 %v119
    %v1591 = vunpack.c.l.b16 %v120
    %v1592 = vunpack.c.h.b16 %v120
    %v1593 = vunpack.c.l.b16 %v121
    %v1594 = vunpack.c.h.b16 %v121
    %v1595 = vunpack.c.l.b16 %v122
    %v1596 = vunpack.c.h.b16 %v122
    %v1597 = vunpack.c.l.b16 %v123
    %v1598 = vunpack.c.h.b16 %v123
    %v1599 = vunpack.c.l.b16 %v124
    %v1600 = vunpack.c.h.b16 %v124
    %v1601 = vunpack.c.l.b16 %v125
    %v1602 = vunpack.c.h.b16 %v125
    %v1603 = vunpack.c.l.b16 %v126
    %v1604 = vunpack.c.h.b16 %v126
    %v1605 = vunpack.c.l.b16 %v127
    %v1606 = vunpack.c.l.b16 %v128
    %v1607 = vunpack.c.h.b16 %v128
    %v1608 = vunpack.c.l.b16 %v129
    %v1609 = vunpack.c.h.b16 %v129
    %v1610 = vunpack.c.l.b16 %v130
    %v1611 = vunpack.c.h.b16 %v130
    %v1612 = vunpack.c.l.b16 %v131
    %v1613 = vunpack.c.h.b16 %v131
    %v1614 = vunpack.c.l.b16 %v132
    %v1615 = vunpack.c.h.b16 %v132
    %v1616 = vunpack.c.l.b16 %v133
    %v1617 = vunpack.c.h.b16 %v133
    %v1618 = vunpack.c.l.b16 %v134
    %v1619 = vunpack.c.h.b16 %v134
    %v1620 = vunpack.c.l.b16 %v135
    %v1621 = vunpack.c.h.b16 %v135
    %v1622 = vunpack.c.l.b16 %v136
    %v1623 = vunpack.c.h.b16 %v136
    %v1624 = vunpack.c.l.b16 %v137
    %v1625 = vunpack.c.h.b16 %v137
    %v1626 = vunpack.c.l.b16 %v138
    %v1627 = vunpack.c.l.b16 %v139
    %v1628 = vunpack.c.h.b16 %v139
    %v1629 = vunpack.c.l.b16 %v140
    %v1630 = vunpack.c.h.b16 %v140
    %v1631 = vunpack.c.l.b16 %v141
    %v1632 = vunpack.c.h.b16 %v141
    %v1633 = vunpack.c.l.b16 %v142
    %v1634 = vunpack.c.h.b16 %v142
    %v1635 = vunpack.c.l.b16 %v143
    %v1636 = vunpack.c.h.b16 %v143
    %v1637 = vunpack.c.l.b16 %v144
    %v1638 = vunpack.c.h.b16 %v144
    %v1639 = vunpack.c.l.b16 %v145
    %v1640 = vunpack.c.h.b16 %v145
    %v1641 = vunpack.c.l.b16 %v146
    %v1642 = vunpack.c.h.b16 %v146
    %v1643 = vunpack.c.l.b16 %v147
    %v1644 = vunpack.c.h.b16 %v147
    %v1645 = vunpack.c.l.b16 %v148
    %v1646 = vunpack.c.h.b16 %v148
    %v1647 = vunpack.c.l.b16 %v149
    %v1648 = vunpack.c.l.b16 %v150
    %v1649 = vunpack.c.h.b16 %v150
    %v1650 = vunpack.c.l.b16 %v151
    %v1651 = vunpack.c.h.b16 %v151
    %v1652 = vunpack.c.l.b16 %v152
    %v1653 = vunpack.c.h.b16 %v152
    %v1654 = vunpack.c.l.b16 %v153
    %v1655 = vunpack.c.h.b16 %v153
    %v1656 = vunpack.c.l.b16 %v154
    %v1657 = vunpack.c.h.b16 %v154
    %v1658 = vunpack.c.l.b16 %v155
    %v1659 = vunpack.c.h.b16 %v155
    %v1660 = vunpack.c.l.b16 %v156
    %v1661 = vunpack.c.h.b16 %v156
    %v1662 = vunpack.c.l.b16 %v157
    %v1663 = vunpack.c.h.b16 %v157
    %v1664 = vunpack.c.l.b16 %v158
    %v1665 = vunpack.c.h.b16 %v158
    %v1666 = vunpack.c.l.b16 %v159
    %v1667 = vunpack.c.h.b16 %v159
    %v1668 = vunpack.c.l.b16 %v160
    %v1669 = vunpack.c.l.b16 %v161
    %v1670 = vunpack.c.h.b16 %v161
    %v1671 = vunpack.c.l.b16 %v162
    %v1672 = vunpack.c.h.b16 %v162
    %v1673 = vunpack.c.l.b16 %v163
    %v1674 = vunpack.c.h.b16 %v163
    %v1675 = vunpack.c.l.b16 %v164
    %v1676 = vunpack.c.h.b16 %v164
    %v1677 = vunpack.c.l.b16 %v165
    %v1678 = vunpack.c.h.b16 %v165
    %v1679 = vunpack.c.l.b16 %v166
    %v1680 = vunpack.c.h.b16 %v166
    %v1681 = vunpack.c.l.b16 %v167
    %v1682 = vunpack.c.h.b16 %v167
    %v1683 = vunpack.c.l.b16 %v168
    %v1684 = vunpack.c.h.b16 %v168
    %v1685 = vunpack.c.l.b16 %v169
    %v1686 = vunpack.c.h.b16 %v169
    %v1687 = vunpack.c.l.b16 %v170
    %v1688 = vunpack.c.h.b16 %v170
    %v1689 = vunpack.c.l.b16 %v171
    %v1690 = vunpack.c.l.b16 %v172
    %v1691 = vunpack.c.h.b16 %v172
    %v1692 = vunpack.c.l.b16 %v173
    %v1693 = vunpack.c.h.b16 %v173
    %v1694 = vunpack.c.l.b16 %v174
    %v1695 = vunpack.c.h.b16 %v174
    %v1696 = vunpack.c.l.b16 %v175
    %v1697 = vunpack.c.h.b16 %v175
    %v1698 = vunpack.c.l.b16 %v176
    %v1699 = vunpack.c.h.b16 %v176
    %v1700 = vunpack.c.l.b16 %v177
    %v1701 = vunpack.c.h.b16 %v177
    %v1702 = vunpack.c.l.b16 %v178
    %v1703 = vunpack.c.h.b16 %v178
    %v1704 = vunpack.c.l.b16 %v179
    %v1705 = vunpack.c.h.b16 %v179
    %v1706 = vunpack.c.l.b16 %v180
    %v1707 = vunpack.c.h.b16 %v180
    %v1708 = vunpack.c.l.b16 %v181
    %v1709 = vunpack.c.h.b16 %v181
    %v1710 = vunpack.c.l.b16 %v182
    %v1711 = vunpack.c.l.b16 %v183
    %v1712 = vunpack.c.h.b16 %v183
    %v1713 = vunpack.c.l.b16 %v184
    %v1714 = vunpack.c.h.b16 %v184
    %v1715 = vunpack.c.l.b16 %v185
    %v1716 = vunpack.c.h.b16 %v185
    %v1717 = vunpack.c.l.b16 %v186
    %v1718 = vunpack.c.h.b16 %v186
    %v1719 = vunpack.c.l.b16 %v187
    %v1720 = vunpack.c.h.b16 %v187
    %v1721 = vunpack.c.l.b16 %v188
    %v1722 = vunpack.c.h.b16 %v188
    %v1723 = vunpack.c.l.b16 %v189
    %v1724 = vunpack.c.h.b16 %v189
    %v1725 = vunpack.c.l.b16 %v190
    %v1726 = vunpack.c.h.b16 %v190
    %v1727 = vunpack.c.l.b16 %v191
    %v1728 = vunpack.c.h.b16 %v191
    %v1729 = vunpack.c.l.b16 %v192
    %v1730 = vunpack.c.h.b16 %v192
    %v1731 = vunpack.c.l.b16 %v193
    %v1732 = vunpack.c.l.b16 %v194
    %v1733 = vunpack.c.h.b16 %v194
    %v1734 = vunpack.c.l.b16 %v195
    %v1735 = vunpack.c.h.b16 %v195
    %v1736 = vunpack.c.l.b16 %v196
    %v1737 = vunpack.c.h.b16 %v196
    %v1738 = vunpack.c.l.b16 %v197
    %v1739 = vunpack.c.h.b16 %v197
    %v1740 = vunpack.c.l.b16 %v198
    %v1741 = vunpack.c.h.b16 %v198
    %v1742 = vunpack.c.l.b16 %v199
    %v1743 = vunpack.c.h.b16 %v199
    %v1744 = vunpack.c.l.b16 %v200
    %v1745 = vunpack.c.h.b16 %v200
    %v1746 = vunpack.c.l.b16 %v201
    %v1747 = vunpack.c.h.b16 %v201
    %v1748 = vunpack.c.l.b16 %v202
    %v1749 = vunpack.c.h.b16 %v202
    %v1750 = vunpack.c.l.b16 %v203
    %v1751 = vunpack.c.h.b16 %v203
    %v1752 = vunpack.c.l.b16 %v204
    %v1753 = vunpack.c.l.b16 %v205
    %v1754 = vunpack.c.h.b16 %v205
    %v1755 = vunpack.c.l.b16 %v206
    %v1756 = vunpack.c.h.b16 %v206
    %v1757 = vunpack.c.l.b16 %v207
    %v1758 = vunpack.c.h.b16 %v207
    %v1759 = vunpack.c.l.b16 %v208
    %v1760 = vunpack.c.h.b16 %v208
    %v1761 = vunpack.c.l.b16 %v209
    %v1762 = vunpack.c.h.b16 %v209
    %v1763 = vunpack.c.l.b16 %v210
    %v1764 = vunpack.c.h.b16 %v210
    %v1765 = vunpack.c.l.b16 %v211
    %v1766 = vunpack.c.h.b16 %v211
    %v1767 = vunpack.c.l.b16 %v212
    %v1768 = vunpack.c.h.b16 %v212
    %v1769 = vunpack.c.l.b16 %v213
    %v1770 = vunpack.c.h.b16 %v213
    %v1771 = vunpack.c.l.b16 %v214
    %v1772 = vunpack.c.h.b16 %v214
    %v1773 = vunpack.c.l.b16 %v215
    %v1774 = vunpack.c.l.b16 %v216
    %v1775 = vunpack.c.h.b16 %v216
    %v1776 = vunpack.c.l.b16 %v217
    %v1777 = vunpack.c.h.b16 %v217
    %v1778 = vunpack.c.l.b16 %v218
    %v1779 = vunpack.c.h.b16 %v218
    %v1780 = vunpack.c.l.b16 %v219
    %v1781 = vunpack.c.h.b16 %v219
    %v1782 = vunpack.c.l.b16 %v220
    %v1783 = vunpack.c.h.b16 %v220
    %v1784 = vunpack.c.l.b16 %v221
    %v1785 = vunpack.c.h.b16 %v221
    %v1786 = vunpack.c.l.b16 %v222
    %v1787 = vunpack.c.h.b16 %v222
    %v1788 = vunpack.c.l.b16 %v223
    %v1789 = vunpack.c.h.b16 %v223
    %v1790 = vunpack.c.l.b16 %v224
    %v1791 = vunpack.c.h.b16 %v224
    %v1792 = vunpack.c.l.b16 %v225
    %v1793 = vunpack.c.h.b16 %v225
    %v1794 = vunpack.c.l.b16 %v226
    %v1795 = vunpack.c.l.b16 %v227
    %v1796 = vunpack.c.h.b16 %v227
    %v1797 = vunpack.c.l.b16 %v228
    %v1798 = vunpack.c.h.b16 %v228
    %v1799 = vunpack.c.l.b16 %v229
    %v1800 = vunpack.c.h.b16 %v229
    %v1801 = vunpack.c.l.b16 %v230
    %v1802 = vunpack.c.h.b16 %v230
    %v1803 = vunpack.c.l.b16 %v231
    %v1804 = vunpack.c.h.b16 %v231
    %v1805 = vunpack.c.l.b16 %v232
    %v1806 = vunpack.c.h.b16 %v232
    %v1807 = vunpack.c.l.b16 %v233
    %v1808 = vunpack.c.h.b16 %v233
    %v1809 = vunpack.c.l.b16 %v234
    %v1810 = vunpack.c.h.b16 %v234
    %v1811 = vunpack.c.l.b16 %v235
    %v1812 = vunpack.c.h.b16 %v235
    %v1813 = vunpack.c.l.b16 %v236
    %v1814 = vunpack.c.h.b16 %v236
    %v1815 = vunpack.c.l.b16 %v237
    %v1816 = vunpack.c.l.b16 %v238
    %v1817 = vunpack.c.h.b16 %v238
    %v1818 = vunpack.c.l.b16 %v239
    %v1819 = vunpack.c.h.b16 %v239
    %v1820 = vunpack.c.l.b16 %v240
    %v1821 = vunpack.c.h.b16 %v240
    %v1822 = vunpack.c.l.b16 %v241
    %v1823 = vunpack.c.h.b16 %v241
    %v1824 = vunpack.c.l.b16 %v242
    %v1825 = vunpack.c.h.b16 %v242
    %v1826 = vunpack.c.l.b16 %v243
    %v1827 = vunpack.c.h.b16 %v243
    %v1828 = vunpack.c.l.b16 %v244
    %v1829 = vunpack.c.h.b16 %v244
    %v1830 = vunpack.c.l.b16 %v245
    %v1831 = vunpack.c.h.b16 %v245
    %v1832 = vunpack.c.l.b16 %v246
    %v1833 = vunpack.c.h.b16 %v246
    %v1834 = vunpack.c.l.b16 %v247
    %v1835 = vunpack.c.h.b16 %v247
    %v1836 = vunpack.c.l.b16 %v248
    %v1837 = vunpack.c.l.b16 %v249
    %v1838 = vunpack.c.h.b16 %v249
    %v1839 = vunpack.c.l.b16 %v250
    %v1840 = vunpack.c.h.b16 %v250
    %v1841 = vunpack.c.l.b16 %v251
    %v1842 = vunpack.c.h.b16 %v251
    %v1843 = vunpack.c.l.b16 %v252
    %v1844 = vunpack.c.h.b16 %v252
    %v1845 = vunpack.c.l.b16 %v253
    %v1846 = vunpack.c.h.b16 %v253
    %v1847 = vunpack.c.l.b16 %v254
    %v1848 = vunpack.c.h.b16 %v254
    %v1849 = vunpack.c.l.b16 %v255
    %v1850 = vunpack.c.h.b16 %v255
    %v1851 = vunpack.c.l.b16 %v256
    %v1852 = vunpack.c.h.b16 %v256
    %v1853 = vunpack.c.l.b16 %v257
    %v1854 = vunpack.c.h.b16 %v257
    %v1855 = vunpack.c.l.b16 %v258
    %v1856 = vunpack.c.h.b16 %v258
    %v1857 = vunpack.c.l.b16 %v259
    %v1858 = vunpack.c.l.b16 %v260
    %v1859 = vunpack.c.h.b16 %v260
    %v1860 = vunpack.c.l.b16 %v261
    %v1861 = vunpack.c.h.b16 %v261
    %v1862 = vunpack.c.l.b16 %v262
    %v1863 = vunpack.c.h.b16 %v262
    %v1864 = vunpack.c.l.b16 %v263
    %v1865 = vunpack.c.h.b16 %v263
    %v1866 = vunpack.c.l.b16 %v264
    %v1867 = vunpack.c.h.b16 %v264
    %v1868 = vunpack.c.l.b16 %v265
    %v1869 = vunpack.c.h.b16 %v265
    %v1870 = vunpack.c.l.b16 %v266
    %v1871 = vunpack.c.h.b16 %v266
    %v1872 = vunpack.c.l.b16 %v267
    %v1873 = vunpack.c.h.b16 %v267
    %v1874 = vunpack.c.l.b16 %v268
    %v1875 = vunpack.c.h.b16 %v268
    %v1876 = vunpack.c.l.b16 %v269
    %v1877 = vunpack.c.h.b16 %v269
    %v1878 = vunpack.c.l.b16 %v270
    %v1879 = vunpack.c.l.b16 %v271
    %v1880 = vunpack.c.h.b16 %v271
    %v1881 = vunpack.c.l.b16 %v272
    %v1882 = vunpack.c.h.b16 %v272
    %v1883 = vunpack.c.l.b16 %v273
    %v1884 = vunpack.c.h.b16 %v273
    %v1885 = vunpack.c.l.b16 %v274
    %v1886 = vunpack.c.h.b16 %v274
    %v1887 = vunpack.c.l.b16 %v275
    %v1888 = vunpack.c.h.b16 %v275
    %v1889 = vunpack.c.l.b16 %v276
    %v1890 = vunpack.c.h.b16 %v276
    %v1891 = vunpack.c.l.b16 %v277
    %v1892 = vunpack.c.h.b16 %v277
    %v1893 = vunpack.c.l.b16 %v278
    %v1894 = vunpack.c.h.b16 %v278
    %v1895 = vunpack.c.l.b16 %v279
    %v1896 = vunpack.c.h.b16 %v279
    %v1897 = vunpack.c.l.b16 %v280
    %v1898 = vunpack.c.h.b16 %v280
    %v1899 = vunpack.c.l.b16 %v281
    %v1900 = vunpack.c.l.b16 %v282
    %v1901 = vunpack.c.h.b16 %v282
    %v1902 = vunpack.c.l.b16 %v283
    %v1903 = vunpack.c.h.b16 %v283
    %v1904 = vunpack.c.l.b16 %v284
    %v1905 = vunpack.c.h.b16 %v284
    %v1906 = vunpack.c.l.b16 %v285
    %v1907 = vunpack.c.h.b16 %v285
    %v1908 = vunpack.c.l.b16 %v286
    %v1909 = vunpack.c.h.b16 %v286
    %v1910 = vunpack.c.l.b16 %v287
    %v1911 = vunpack.c.h.b16 %v287
    %v1912 = vunpack.c.l.b16 %v288
    %v1913 = vunpack.c.h.b16 %v288
    %v1914 = vunpack.c.l.b16 %v289
    %v1915 = vunpack.c.h.b16 %v289
    %v1916 = vunpack.c.l.b16 %v290
    %v1917 = vunpack.c.h.b16 %v290
    %v1918 = vunpack.c.l.b16 %v291
    %v1919 = vunpack.c.h.b16 %v291
    %v1920 = vunpack.c.l.b16 %v292
    %v1921 = vunpack.c.l.b16 %v293
    %v1922 = vunpack.c.h.b16 %v293
    %v1923 = vunpack.c.l.b16 %v294
    %v1924 = vunpack.c.h.b16 %v294
    %v1925 = vunpack.c.l.b16 %v295
    %v1926 = vunpack.c.h.b16 %v295
    %v1927 = vunpack.c.l.b16 %v296
    %v1928 = vunpack.c.h.b16 %v296
    %v1929 = vunpack.c.l.b16 %v297
    %v1930 = vunpack.c.h.b16 %v297
    %v1931 = vunpack.c.l.b16 %v298
    %v1932 = vunpack.c.h.b16 %v298
    %v1933 = vunpack.c.l.b16 %v299
    %v1934 = vunpack.c.h.b16 %v299
    %v1935 = vunpack.c.l.b16 %v300
    %v1936 = vunpack.c.h.b16 %v300
    %v1937 = vunpack.c.l.b16 %v301
    %v1938 = vunpack.c.h.b16 %v301
    %v1939 = vunpack.c.l.b16 %v302
    %v1940 = vunpack.c.h.b16 %v302
    %v1941 = vunpack.c.l.b16 %v303
    %v1942 = vunpack.c.l.b16 %v304
    %v1943 = vunpack.c.h.b16 %v304
    %v1944 = vunpack.c.l.b16 %v305
    %v1945 = vunpack.c.h.b16 %v305
    %v1946 = vunpack.c.l.b16 %v306
    %v1947 = vunpack.c.h.b16 %v306
    %v1948 = vunpack.c.l.b16 %v307
    %v1949 = vunpack.c.h.b16 %v307
    %v1950 = vunpack.c.l.b16 %v308
    %v1951 = vunpack.c.h.b16 %v308
    %v1952 = vunpack.c.l.b16 %v309
    %v1953 = vunpack.c.h.b16 %v309
    %v1954 = vunpack.c.l.b16 %v310
    %v1955 = vunpack.c.h.b16 %v310
    %v1956 = vunpack.c.l.b16 %v311
    %v1957 = vunpack.c.h.b16 %v311
    %v1958 = vunpack.c.l.b16 %v312
    %v1959 = vunpack.c.h.b16 %v312
    %v1960 = vunpack.c.l.b16 %v313
    %v1961 = vunpack.c.h.b16 %v313
    %v1962 = vunpack.c.l.b16 %v314
    %v1963 = vunpack.c.l.b16 %v315
    %v1964 = vunpack.c.h.b16 %v315
    %v1965 = vunpack.c.l.b16 %v316
    %v1966 = vunpack.c.h.b16 %v316
    %v1967 = vunpack.c.l.b16 %v317
    %v1968 = vunpack.c.h.b16 %v317
    %v1969 = vunpack.c.l.b16 %v318
    %v1970 = vunpack.c.h.b16 %v318
    %v1971 = vunpack.c.l.b16 %v319
    %v1972 = vunpack.c.h.b16 %v319
    %v1973 = vunpack.c.l.b16 %v320
    %v1974 = vunpack.c.h.b16 %v320
    %v1975 = vunpack.c.l.b16 %v321
    %v1976 = vunpack.c.h.b16 %v321
    %v1977 = vunpack.c.l.b16 %v322
    %v1978 = vunpack.c.h.b16 %v322
    %v1979 = vunpack.c.l.b16 %v323
    %v1980 = vunpack.c.h.b16 %v323
    %v1981 = vunpack.c.l.b16 %v324
    %v1982 = vunpack.c.h.b16 %v324
    %v1983 = vunpack.c.l.b16 %v325
    %v1984 = vunpack.c.l.b16 %v326
    %v1985 = vunpack.c.h.b16 %v326
    %v1986 = vunpack.c.l.b16 %v327
    %v1987 = vunpack.c.h.b16 %v327
    %v1988 = vunpack.c.l.b16 %v328
    %v1989 = vunpack.c.h.b16 %v328
    %v1990 = vunpack.c.l.b16 %v329
    %v1991 = vunpack.c.h.b16 %v329
    %v1992 = vunpack.c.l.b16 %v330
    %v1993 = vunpack.c.h.b16 %v330
    %v1994 = vunpack.c.l.b16 %v331
    %v1995 = vunpack.c.h.b16 %v331
    %v1996 = vunpack.c.l.b16 %v332
    %v1997 = vunpack.c.h.b16 %v332
    %v1998 = vunpack.c.l.b16 %v333
    %v1999 = vunpack.c.h.b16 %v333
    %v2000 = vunpack.c.l.b16 %v334
    %v2001 = vunpack.c.h.b16 %v334
    %v2002 = vunpack.c.l.b16 %v335
    %v2003 = vunpack.c.h.b16 %v335
    %v2004 = vunpack.c.l.b16 %v336
    %v2005 = vunpack.c.l.b16 %v337
    %v2006 = vunpack.c.h.b16 %v337
    %v2007 = vunpack.c.l.b16 %v338
    %v2008 = vunpack.c.h.b16 %v338
    %v2009 = vunpack.c.l.b16 %v339
    %v2010 = vunpack.c.h.b16 %v339
    %v2011 = vunpack.c.l.b16 %v340
    %v2012 = vunpack.c.h.b16 %v340
    %v2013 = vunpack.c.l.b16 %v341
    %v2014 = vunpack.c.h.b16 %v341
    %v2015 = vunpack.c.l.b16 %v342
    %v2016 = vunpack.c.h.b16 %v342
    %v2017 = vunpack.c.l.b16 %v343
    %v2018 = vunpack.c.h.b16 %v343
    %v2019 = vunpack.c.l.b16 %v344
    %v2020 = vunpack.c.h.b16 %v344
    %v2021 = vunpack.c.l.b16 %v345
    %v2022 = vunpack.c.h.b16 %v345
    %v2023 = vunpack.c.l.b16 %v346
    %v2024 = vunpack.c.h.b16 %v346
    %v2025 = vunpack.c.l.b16 %v347
    %v2026 = vunpack.c.l.b16 %v348
    %v2027 = vunpack.c.h.b16 %v348
    %v2028 = vunpack.c.l.b16 %v349
    %v2029 = vunpack.c.h.b16 %v349
    %v2030 = vunpack.c.l.b16 %v350
    %v2031 = vunpack.c.h.b16 %v350
    %v2032 = vunpack.c.l.b16 %v351
    %v2033 = vunpack.c.h.b16 %v351
    %v2034 = vunpack.c.l.b16 %v352
    %v2035 = vunpack.c.h.b16 %v352
    %v2036 = vunpack.c.l.b16 %v353
    %v2037 = vunpack.c.h.b16 %v353
    %v2038 = vunpack.c.l.b16 %v354
    %v2039 = vunpack.c.h.b16 %v354
    %v2040 = vunpack.c.l.b16 %v355
    %v2041 = vunpack.c.h.b16 %v355
    %v2042 = vunpack.c.l.b16 %v356
    %v2043 = vunpack.c.h.b16 %v356
    %v2044 = vunpack.c.l.b16 %v357
    %v2045 = vunpack.c.h.b16 %v357
    %v2046 = vunpack.c.l.b16 %v358
    %v2047 = vunpack.c.l.b16 %v359
    %v2048 = vunpack.c.h.b16 %v359
    %v2049 = vunpack.c.l.b16 %v360
    %v2050 = vunpack.c.h.b16 %v360
    %v2051 = vunpack.c.l.b16 %v361
    %v2052 = vunpack.c.h.b16 %v361
    %v2053 = vunpack.c.l.b16 %v362
    %v2054 = vunpack.c.h.b16 %v362
    %v2055 = vunpack.c.l.b16 %v363
    %v2056 = vunpack.c.h.b16 %v363
    %v2057 = vunpack.c.l.b16 %v364
    %v2058 = vunpack.c.h.b16 %v364
    %v2059 = vunpack.c.l.b16 %v365
    %v2060 = vunpack.c.h.b16 %v365
    %v2061 = vunpack.c.l.b16 %v366
    %v2062 = vunpack.c.h.b16 %v366
    %v2063 = vunpack.c.l.b16 %v367
    %v2064 = vunpack.c.h.b16 %v367
    %v2065 = vunpack.c.l.b16 %v368
    %v2066 = vunpack.c.h.b16 %v368
    %v2067 = vunpack.c.l.b16 %v369
    %v2068 = vunpack.c.l.b16 %v370
    %v2069 = vunpack.c.h.b16 %v370
    %v2070 = vunpack.c.l.b16 %v371
    %v2071 = vunpack.c.h.b16 %v371
    %v2072 = vunpack.c.l.b16 %v372
    %v2073 = vunpack.c.h.b16 %v372
    %v2074 = vunpack.c.l.b16 %v373
    %v2075 = vunpack.c.h.b16 %v373
    %v2076 = vunpack.c.l.b16 %v374
    %v2077 = vunpack.c.h.b16 %v374
    %v2078 = vunpack.c.l.b16 %v375
    %v2079 = vunpack.c.h.b16 %v375
    %v2080 = vunpack.c.l.b16 %v376
    %v2081 = vunpack.c.h.b16 %v376
    %v2082 = vunpack.c.l.b16 %v377
    %v2083 = vunpack.c.h.b16 %v377
    %v2084 = vunpack.c.l.b16 %v378
    %v2085 = vunpack.c.h.b16 %v378
    %v2086 = vunpack.c.l.b16 %v379
    %v2087 = vunpack.c.h.b16 %v379
    %v2088 = vunpack.c.l.b16 %v380
    %v2089 = vunpack.c.l.b16 %v381
    %v2090 = vunpack.c.h.b16 %v381
    %v2091 = vunpack.c.l.b16 %v382
    %v2092 = vunpack.c.h.b16 %v382
    %v2093 = vunpack.c.l.b16 %v383
    %v2094 = vunpack.c.h.b16 %v383
    %v2095 = vunpack.c.l.b16 %v384
    %v2096 = vunpack.c.h.b16 %v384
    %v2097 = vunpack.c.l.b16 %v385
    %v2098 = vunpack.c.h.b16 %v385
    %v2099 = vunpack.c.l.b16 %v386
    %v2100 = vunpack.c.h.b16 %v386
    %v2101 = vunpack.c.l.b16 %v387
    %v2102 = vunpack.c.h.b16 %v387
    %v2103 = vunpack.c.l.b16 %v388
    %v2104 = vunpack.c.h.b16 %v388
    %v2105 = vunpack.c.l.b16 %v389
    %v2106 = vunpack.c.h.b16 %v389
    %v2107 = vunpack.c.l.b16 %v390
    %v2108 = vunpack.c.h.b16 %v390
    %v2109 = vunpack.c.l.b16 %v391
    %v2110 = vunpack.c.l.b16 %v392
    %v2111 = vunpack.c.h.b16 %v392
    %v2112 = vunpack.c.l.b16 %v393
    %v2113 = vunpack.c.h.b16 %v393
    %v2114 = vunpack.c.l.b16 %v394
    %v2115 = vunpack.c.h.b16 %v394
    %v2116 = vunpack.c.l.b16 %v395
    %v2117 = vunpack.c.h.b16 %v395
    %v2118 = vunpack.c.l.b16 %v396
    %v2119 = vunpack.c.h.b16 %v396
    %v2120 = vunpack.c.l.b16 %v397
    %v2121 = vunpack.c.h.b16 %v397
    %v2122 = vunpack.c.l.b16 %v398
    %v2123 = vunpack.c.h.b16 %v398
    %v2124 = vunpack.c.l.b16 %v399
    %v2125 = vunpack.c.h.b16 %v399
    %v2126 = vunpack.c.l.b16 %v400
    %v2127 = vunpack.c.h.b16 %v400
    %v2128 = vunpack.c.l.b16 %v401
    %v2129 = vunpack.c.h.b16 %v401
    %v2130 = vunpack.c.l.b16 %v402
    %v2131 = vunpack.c.l.b16 %v403
    %v2132 = vunpack.c.h.b16 %v403
    %v2133 = vunpack.c.l.b16 %v404
    %v2134 = vunpack.c.h.b16 %v404
    %v2135 = vunpack.c.l.b16 %v405
    %v2136 = vunpack.c.h.b16 %v405
    %v2137 = vunpack.c.l.b16 %v406
    %v2138 = vunpack.c.h.b16 %v406
    %v2139 = vunpack.c.l.b16 %v407
    %v2140 = vunpack.c.h.b16 %v407
    %v2141 = vunpack.c.l.b16 %v408
    %v2142 = vunpack.c.h.b16 %v408
    %v2143 = vunpack.c.l.b16 %v409
    %v2144 = vunpack.c.h.b16 %v409
    %v2145 = vunpack.c.l.b16 %v410
    %v2146 = vunpack.c.h.b16 %v410
    %v2147 = vunpack.c.l.b16 %v411
    %v2148 = vunpack.c.h.b16 %v411
    %v2149 = vunpack.c.l.b16 %v412
    %v2150 = vunpack.c.h.b16 %v412
    %v2151 = vunpack.c.l.b16 %v413
    %v2152 = vunpack.c.l.b16 %v414
    %v2153 = vunpack.c.h.b16 %v414
    %v2154 = vunpack.c.l.b16 %v415
    %v2155 = vunpack.c.h.b16 %v415
    %v2156 = vunpack.c.l.b16 %v416
    %v2157 = vunpack.c.h.b16 %v416
    %v2158 = vunpack.c.l.b16 %v417
    %v2159 = vunpack.c.h.b16 %v417
    %v2160 = vunpack.c.l.b16 %v418
    %v2161 = vunpack.c.h.b16 %v418
    %v2162 = vunpack.c.l.b16 %v419
    %v2163 = vunpack.c.h.b16 %v419
    %v2164 = vunpack.c.l.b16 %v420
    %v2165 = vunpack.c.h.b16 %v420
    %v2166 = vunpack.c.l.b16 %v421
    %v2167 = vunpack.c.h.b16 %v421
    %v2168 = vunpack.c.l.b16 %v422
    %v2169 = vunpack.c.h.b16 %v422
    %v2170 = vunpack.c.l.b16 %v423
    %v2171 = vunpack.c.h.b16 %v423
    %v2172 = vunpack.c.l.b16 %v424
    %v2173 = vunpack.c.l.b16 %v425
    %v2174 = vunpack.c.h.b16 %v425
    %v2175 = vunpack.c.l.b16 %v426
    %v2176 = vunpack.c.h.b16 %v426
    %v2177 = vunpack.c.l.b16 %v427
    %v2178 = vunpack.c.h.b16 %v427
    %v2179 = vunpack.c.l.b16 %v428
    %v2180 = vunpack.c.h.b16 %v428
    %v2181 = vunpack.c.l.b16 %v429
    %v2182 = vunpack.c.h.b16 %v429
    %v2183 = vunpack.c.l.b16 %v430
    %v2184 = vunpack.c.h.b16 %v430
    %v2185 = vunpack.c.l.b16 %v431
    %v2186 = vunpack.c.h.b16 %v431
    %v2187 = vunpack.c.l.b16 %v432
    %v2188 = vunpack.c.h.b16 %v432
    %v2189 = vunpack.c.l.b16 %v433
    %v2190 = vunpack.c.h.b16 %v433
    %v2191 = vunpack.c.l.b16 %v434
    %v2192 = vunpack.c.h.b16 %v434
    %v2193 = vunpack.c.l.b16 %v435
    %v2194 = vunpack.c.l.b16 %v436
    %v2195 = vunpack.c.h.b16 %v436
    %v2196 = vunpack.c.l.b16 %v437
    %v2197 = vunpack.c.h.b16 %v437
    %v2198 = vunpack.c.l.b16 %v438
    %v2199 = vunpack.c.h.b16 %v438
    %v2200 = vunpack.c.l.b16 %v439
    %v2201 = vunpack.c.h.b16 %v439
    %v2202 = vunpack.c.l.b16 %v440
    %v2203 = vunpack.c.h.b16 %v440
    %v2204 = vunpack.c.l.b16 %v441
    %v2205 = vunpack.c.h.b16 %v441
    %v2206 = vunpack.c.l.b16 %v442
    %v2207 = vunpack.c.h.b16 %v442
    %v2208 = vunpack.c.l.b16 %v443
    %v2209 = vunpack.c.h.b16 %v443
    %v2210 = vunpack.c.l.b16 %v444
    %v2211 = vunpack.c.h.b16 %v444
    %v2212 = vunpack.c.l.b16 %v445
    %v2213 = vunpack.c.h.b16 %v445
    %v2214 = vunpack.c.l.b16 %v446
    %v2215 = vunpack.c.l.b16 %v447
    %v2216 = vunpack.c.h.b16 %v447
    %v2217 = vunpack.c.l.b16 %v448
    %v2218 = vunpack.c.h.b16 %v448
    %v2219 = vunpack.c.l.b16 %v449
    %v2220 = vunpack.c.h.b16 %v449
    %v2221 = vunpack.c.l.b16 %v450
    %v2222 = vunpack.c.h.b16 %v450
    %v2223 = vunpack.c.l.b16 %v451
    %v2224 = vunpack.c.h.b16 %v451
    %v2225 = vunpack.c.l.b16 %v452
    %v2226 = vunpack.c.h.b16 %v452
    %v2227 = vunpack.c.l.b16 %v453
    %v2228 = vunpack.c.h.b16 %v453
    %v2229 = vunpack.c.l.b16 %v454
    %v2230 = vunpack.c.h.b16 %v454
    %v2231 = vunpack.c.l.b16 %v455
    %v2232 = vunpack.c.h.b16 %v455
    %v2233 = vunpack.c.l.b16 %v456
    %v2234 = vunpack.c.h.b16 %v456
    %v2235 = vunpack.c.l.b16 %v457
    %v2236 = vunpack.c.l.b16 %v458
    %v2237 = vunpack.c.h.b16 %v458
    %v2238 = vunpack.c.l.b16 %v459
    %v2239 = vunpack.c.h.b16 %v459
    %v2240 = vunpack.c.l.b16 %v460
    %v2241 = vunpack.c.h.b16 %v460
    %v2242 = vunpack.c.l.b16 %v461
    %v2243 = vunpack.c.h.b16 %v461
    %v2244 = vunpack.c.l.b16 %v462
    %v2245 = vunpack.c.h.b16 %v462
    %v2246 = vunpack.c.l.b16 %v463
    %v2247 = vunpack.c.h.b16 %v463
    %v2248 = vunpack.c.l.b16 %v464
    %v2249 = vunpack.c.h.b16 %v464
    %v2250 = vunpack.c.l.b16 %v465
    %v2251 = vunpack.c.h.b16 %v465
    %v2252 = vunpack.c.l.b16 %v466
    %v2253 = vunpack.c.h.b16 %v466
    %v2254 = vunpack.c.l.b16 %v467
    %v2255 = vunpack.c.h.b16 %v467
    %v2256 = vunpack.c.l.b16 %v468
    %v2257 = vunpack.c.l.b16 %v469
    %v2258 = vunpack.c.h.b16 %v469
    %v2259 = vunpack.c.l.b16 %v470
    %v2260 = vunpack.c.h.b16 %v470
    %v2261 = vunpack.c.l.b16 %v471
    %v2262 = vunpack.c.h.b16 %v471
    %v2263 = vunpack.c.l.b16 %v472
    %v2264 = vunpack.c.h.b16 %v472
    %v2265 = vunpack.c.l.b16 %v473
    %v2266 = vunpack.c.h.b16 %v473
    %v2267 = vunpack.c.l.b16 %v474
    %v2268 = vunpack.c.h.b16 %v474
    %v2269 = vunpack.c.l.b16 %v475
    %v2270 = vunpack.c.h.b16 %v475
    %v2271 = vunpack.c.l.b16 %v476
    %v2272 = vunpack.c.h.b16 %v476
    %v2273 = vunpack.c.l.b16 %v477
    %v2274 = vunpack.c.h.b16 %v477
    %v2275 = vunpack.c.l.b16 %v478
    %v2276 = vunpack.c.h.b16 %v478
    %v2277 = vunpack.c.l.b16 %v479
    %v2278 = vunpack.c.l.b16 %v480
    %v2279 = vunpack.c.h.b16 %v480
    %v2280 = vunpack.c.l.b16 %v481
    %v2281 = vunpack.c.h.b16 %v481
    %v2282 = vunpack.c.l.b16 %v482
    %v2283 = vunpack.c.h.b16 %v482
    %v2284 = vunpack.c.l.b16 %v483
    %v2285 = vunpack.c.h.b16 %v483
    %v2286 = vunpack.c.l.b16 %v484
    %v2287 = vunpack.c.h.b16 %v484
    %v2288 = vunpack.c.l.b16 %v485
    %v2289 = vunpack.c.h.b16 %v485
    %v2290 = vunpack.c.l.b16 %v486
    %v2291 = vunpack.c.h.b16 %v486
    %v2292 = vunpack.c.l.b16 %v487
    %v2293 = vunpack.c.h.b16 %v487
    %v2294 = vunpack.c.l.b16 %v488
    %v2295 = vunpack.c.h.b16 %v488
    %v2296 = vunpack.c.l.b16 %v489
    %v2297 = vunpack.c.h.b16 %v489
    %v2298 = vunpack.c.l.b16 %v490
    %v2299 = vunpack.c.l.b16 %v491
    %v2300 = vunpack.c.h.b16 %v491
    %v2301 = vunpack.c.l.b16 %v492
    %v2302 = vunpack.c.h.b16 %v492
    %v2303 = vunpack.c.l.b16 %v493
    %v2304 = vunpack.c.h.b16 %v493
    %v2305 = vunpack.c.l.b16 %v494
    %v2306 = vunpack.c.h.b16 %v494
    %v2307 = vunpack.c.l.b16 %v495
    %v2308 = vunpack.c.h.b16 %v495
    %v2309 = vunpack.c.l.b16 %v496
    %v2310 = vunpack.c.h.b16 %v496
    %v2311 = vunpack.c.l.b16 %v497
    %v2312 = vunpack.c.h.b16 %v497
    %v2313 = vunpack.c.l.b16 %v498
    %v2314 = vunpack.c.h.b16 %v498
    %v2315 = vunpack.c.l.b16 %v499
    %v2316 = vunpack.c.h.b16 %v499
    %v2317 = vunpack.c.l.b16 %v500
    %v2318 = vunpack.c.h.b16 %v500
    %v2319 = vunpack.c.l.b16 %v501
    %v2320 = vunpack.c.l.b16 %v502
    %v2321 = vunpack.c.h.b16 %v502
    %v2322 = vunpack.c.l.b16 %v503
    %v2323 = vunpack.c.h.b16 %v503
    %v2324 = vunpack.c.l.b16 %v504
    %v2325 = vunpack.c.h.b16 %v504
    %v2326 = vunpack.c.l.b16 %v505
    %v2327 = vunpack.c.h.b16 %v505
    %v2328 = vunpack.c.l.b16 %v506
    %v2329 = vunpack.c.h.b16 %v506
    %v2330 = vunpack.c.l.b16 %v507
    %v2331 = vunpack.c.h.b16 %v507
    %v2332 = vunpack.c.l.b16 %v508
    %v2333 = vunpack.c.h.b16 %v508
    %v2334 = vunpack.c.l.b16 %v509
    %v2335 = vunpack.c.h.b16 %v509
    %v2336 = vunpack.c.l.b16 %v510
    %v2337 = vunpack.c.h.b16 %v510
    %v2338 = vunpack.c.l.b16 %v511
    %v2339 = vunpack.c.h.b16 %v511
    %v2340 = vunpack.c.l.b16 %v512
    %v2341 = vunpack.c.l.b16 %v513
    %v2342 = vunpack.c.h.b16 %v513
    %v2343 = vunpack.c.l.b16 %v514
    %v2344 = vunpack.c.h.b16 %v514
    %v2345 = vunpack.c.l.b16 %v515
    %v2346 = vunpack.c.h.b16 %v515
    %v2347 = vunpack.c.l.b16 %v516
    %v2348 = vunpack.c.h.b16 %v516
    %v2349 = vunpack.c.l.b16 %v517
    %v2350 = vunpack.c.h.b16 %v517
    %v2351 = vunpack.c.l.b16 %v518
    %v2352 = vunpack.c.h.b16 %v518
    %v2353 = vunpack.c.l.b16 %v519
    %v2354 = vunpack.c.h.b16 %v519
    %v2355 = vunpack.c.l.b16 %v520
    %v2356 = vunpack.c.h.b16 %v520
    %v2357 = vunpack.c.l.b16 %v521
    %v2358 = vunpack.c.h.b16 %v521
    %v2359 = vunpack.c.l.b16 %v522
    %v2360 = vunpack.c.h.b16 %v522
    %v2361 = vunpack.c.l.b16 %v523
    %v2362 = vunpack.c.l.b16 %v524
    %v2363 = vunpack.c.h.b16 %v524
    %v2364 = vunpack.c.l.b16 %v525
    %v2365 = vunpack.c.h.b16 %v525
    %v2366 = vunpack.c.l.b16 %v526
    %v2367 = vunpack.c.h.b16 %v526
    %v2368 = vunpack.c.l.b16 %v527
    %v2369 = vunpack.c.h.b16 %v527
    %v2370 = vunpack.c.l.b16 %v528
    %v2371 = vunpack.c.h.b16 %v528
    %v2372 = vunpack.c.l.b16 %v529
    %v2373 = vunpack.c.h.b16 %v529
    %v2374 = vunpack.c.l.b16 %v530
    %v2375 = vunpack.c.h.b16 %v530
    %v2376 = vunpack.c.l.b16 %v531
    %v2377 = vunpack.c.h.b16 %v531
    %v2378 = vunpack.c.l.b16 %v532
    %v2379 = vunpack.c.h.b16 %v532
    %v2380 = vunpack.c.l.b16 %v533
    %v2381 = vunpack.c.h.b16 %v533
    %v2382 = vunpack.c.l.b16 %v534
    %v2383 = vunpack.c.l.b16 %v535
    %v2384 = vunpack.c.h.b16 %v535
    %v2385 = vunpack.c.l.b16 %v536
    %v2386 = vunpack.c.h.b16 %v536
    %v2387 = vunpack.c.l.b16 %v537
    %v2388 = vunpack.c.h.b16 %v537
    %v2389 = vunpack.c.l.b16 %v538
    %v2390 = vunpack.c.h.b16 %v538
    %v2391 = vunpack.c.l.b16 %v539
    %v2392 = vunpack.c.h.b16 %v539
    %v2393 = vunpack.c.l.b16 %v540
    %v2394 = vunpack.c.h.b16 %v540
    %v2395 = vunpack.c.l.b16 %v541
    %v2396 = vunpack.c.h.b16 %v541
    %v2397 = vunpack.c.l.b16 %v542
    %v2398 = vunpack.c.h.b16 %v542
    %v2399 = vunpack.c.l.b16 %v543
    %v2400 = vunpack.c.h.b16 %v543
    %v2401 = vunpack.c.l.b16 %v544
    %v2402 = vunpack.c.h.b16 %v544
    %v2403 = vunpack.c.l.b16 %v545
    %v2404 = vunpack.c.l.b16 %v546
    %v2405 = vunpack.c.h.b16 %v546
    %v2406 = vunpack.c.l.b16 %v547
    %v2407 = vunpack.c.h.b16 %v547
    %v2408 = vunpack.c.l.b16 %v548
    %v2409 = vunpack.c.h.b16 %v548
    %v2410 = vunpack.c.l.b16 %v549
    %v2411 = vunpack.c.h.b16 %v549
    %v2412 = vunpack.c.l.b16 %v550
    %v2413 = vunpack.c.h.b16 %v550
    %v2414 = vunpack.c.l.b16 %v551
    %v2415 = vunpack.c.h.b16 %v551
    %v2416 = vunpack.c.l.b16 %v552
    %v2417 = vunpack.c.h.b16 %v552
    %v2418 = vunpack.c.l.b16 %v553
    %v2419 = vunpack.c.h.b16 %v553
    %v2420 = vunpack.c.l.b16 %v554
    %v2421 = vunpack.c.h.b16 %v554
    %v2422 = vunpack.c.l.b16 %v555
    %v2423 = vunpack.c.h.b16 %v555
    %v2424 = vunpack.c.l.b16 %v556
    %v2425 = vunpack.c.l.b16 %v557
    %v2426 = vunpack.c.h.b16 %v557
    %v2427 = vunpack.c.l.b16 %v558
    %v2428 = vunpack.c.h.b16 %v558
    %v2429 = vunpack.c.l.b16 %v559
    %v2430 = vunpack.c.h.b16 %v559
    %v2431 = vunpack.c.l.b16 %v560
    %v2432 = vunpack.c.h.b16 %v560
    %v2433 = vunpack.c.l.b16 %v561
    %v2434 = vunpack.c.h.b16 %v561
    %v2435 = vunpack.c.l.b16 %v562
    %v2436 = vunpack.c.h.b16 %v562
    %v2437 = vunpack.c.l.b16 %v563
    %v2438 = vunpack.c.h.b16 %v563
    %v2439 = vunpack.c.l.b16 %v564
    %v2440 = vunpack.c.h.b16 %v564
    %v2441 = vunpack.c.l.b16 %v565
    %v2442 = vunpack.c.h.b16 %v565
    %v2443 = vunpack.c.l.b16 %v566
    %v2444 = vunpack.c.h.b16 %v566
    %v2445 = vunpack.c.l.b16 %v567
    %v2446 = vunpack.c.l.b16 %v568
    %v2447 = vunpack.c.h.b16 %v568
    %v2448 = vunpack.c.l.b16 %v569
    %v2449 = vunpack.c.h.b16 %v569
    %v2450 = vunpack.c.l.b16 %v570
    %v2451 = vunpack.c.h.b16 %v570
    %v2452 = vunpack.c.l.b16 %v571
    %v2453 = vunpack.c.h.b16 %v571
    %v2454 = vunpack.c.l.b16 %v572
    %v2455 = vunpack.c.h.b16 %v572
    %v2456 = vunpack.c.l.b16 %v573
    %v2457 = vunpack.c.h.b16 %v573
    %v2458 = vunpack.c.l.b16 %v574
    %v2459 = vunpack.c.h.b16 %v574
    %v2460 = vunpack.c.l.b16 %v575
    %v2461 = vunpack.c.h.b16 %v575
    %v2462 = vunpack.c.l.b16 %v576
    %v2463 = vunpack.c.h.b16 %v576
    %v2464 = vunpack.c.l.b16 %v577
    %v2465 = vunpack.c.h.b16 %v577
    %v2466 = vunpack.c.l.b16 %v578
    %v2467 = vunpack.c.l.b16 %v579
    %v2468 = vunpack.c.h.b16 %v579
    %v2469 = vunpack.c.l.b16 %v580
    %v2470 = vunpack.c.h.b16 %v580
    %v2471 = vunpack.c.l.b16 %v581
    %v2472 = vunpack.c.h.b16 %v581
    %v2473 = vunpack.c.l.b16 %v582
    %v2474 = vunpack.c.h.b16 %v582
    %v2475 = vunpack.c.l.b16 %v583
    %v2476 = vunpack.c.h.b16 %v583
    %v2477 = vunpack.c.l.b16 %v584
    %v2478 = vunpack.c.h.b16 %v584
    %v2479 = vunpack.c.l.b16 %v585
    %v2480 = vunpack.c.h.b16 %v585
    %v2481 = vunpack.c.l.b16 %v586
    %v2482 = vunpack.c.h.b16 %v586
    %v2483 = vunpack.c.l.b16 %v587
    %v2484 = vunpack.c.h.b16 %v587
    %v2485 = vunpack.c.l.b16 %v588
    %v2486 = vunpack.c.h.b16 %v588
    %v2487 = vunpack.c.l.b16 %v589
    %v2488 = vunpack.c.l.b16 %v590
    %v2489 = vunpack.c.h.b16 %v590
    %v2490 = vunpack.c.l.b16 %v591
    %v2491 = vunpack.c.h.b16 %v591
    %v2492 = vunpack.c.l.b16 %v592
    %v2493 = vunpack.c.h.b16 %v592
    %v2494 = vunpack.c.l.b16 %v593
    %v2495 = vunpack.c.h.b16 %v593
    %v2496 = vunpack.c.l.b16 %v594
    %v2497 = vunpack.c.h.b16 %v594
    %v2498 = vunpack.c.l.b16 %v595
    %v2499 = vunpack.c.h.b16 %v595
    %v2500 = vunpack.c.l.b16 %v596
    %v2501 = vunpack.c.h.b16 %v596
    %v2502 = vunpack.c.l.b16 %v597
    %v2503 = vunpack.c.h.b16 %v597
    %v2504 = vunpack.c.l.b16 %v598
    %v2505 = vunpack.c.h.b16 %v598
    %v2506 = vunpack.c.l.b16 %v599
    %v2507 = vunpack.c.h.b16 %v599
    %v2508 = vunpack.c.l.b16 %v600
    %v2509 = vunpack.c.l.b16 %v601
    %v2510 = vunpack.c.h.b16 %v601
    %v2511 = vunpack.c.l.b16 %v602
    %v2512 = vunpack.c.h.b16 %v602
    %v2513 = vunpack.c.l.b16 %v603
    %v2514 = vunpack.c.h.b16 %v603
    %v2515 = vunpack.c.l.b16 %v604
    %v2516 = vunpack.c.h.b16 %v604
    %v2517 = vunpack.c.l.b16 %v605
    %v2518 = vunpack.c.h.b16 %v605
    %v2519 = vunpack.c.l.b16 %v606
    %v2520 = vunpack.c.h.b16 %v606
    %v2521 = vunpack.c.l.b16 %v607
    %v2522 = vunpack.c.h.b16 %v607
    %v2523 = vunpack.c.l.b16 %v608
    %v2524 = vunpack.c.h.b16 %v608
    %v2525 = vunpack.c.l.b16 %v609
    %v2526 = vunpack.c.h.b16 %v609
    %v2527 = vunpack.c.l.b16 %v610
    %v2528 = vunpack.c.h.b16 %v610
    %v2529 = vunpack.c.l.b16 %v611
    %v2530 = vunpack.c.l.b16 %v612
    %v2531 = vunpack.c.h.b16 %v612
    %v2532 = vunpack.c.l.b16 %v613
    %v2533 = vunpack.c.h.b16 %v613
    %v2534 = vunpack.c.l.b16 %v614
    %v2535 = vunpack.c.h.b16 %v614
    %v2536 = vunpack.c.l.b16 %v615
    %v2537 = vunpack.c.h.b16 %v615
    %v2538 = vunpack.c.l.b16 %v616
    %v2539 = vunpack.c.h.b16 %v616
    %v2540 = vunpack.c.l.b16 %v617
    %v2541 = vunpack.c.h.b16 %v617
    %v2542 = vunpack.c.l.b16 %v618
    %v2543 = vunpack.c.h.b16 %v618
    %v2544 = vunpack.c.l.b16 %v619
    %v2545 = vunpack.c.h.b16 %v619
    %v2546 = vunpack.c.l.b16 %v620
    %v2547 = vunpack.c.h.b16 %v620
    %v2548 = vunpack.c.l.b16 %v621
    %v2549 = vunpack.c.h.b16 %v621
    %v2550 = vunpack.c.l.b16 %v622
    %v2551 = vunpack.c.l.b16 %v623
    %v2552 = vunpack.c.h.b16 %v623
    %v2553 = vunpack.c.l.b16 %v624
    %v2554 = vunpack.c.h.b16 %v624
    %v2555 = vunpack.c.l.b16 %v625
    %v2556 = vunpack.c.h.b16 %v625
    %v2557 = vunpack.c.l.b16 %v626
    %v2558 = vunpack.c.h.b16 %v626
    %v2559 = vunpack.c.l.b16 %v627
    %v2560 = vunpack.c.h.b16 %v627
    %v2561 = vunpack.c.l.b16 %v628
    %v2562 = vunpack.c.h.b16 %v628
    %v2563 = vunpack.c.l.b16 %v629
    %v2564 = vunpack.c.h.b16 %v629
    %v2565 = vunpack.c.l.b16 %v630
    %v2566 = vunpack.c.h.b16 %v630
    %v2567 = vunpack.c.l.b16 %v631
    %v2568 = vunpack.c.h.b16 %v631
    %v2569 = vunpack.c.l.b16 %v632
    %v2570 = vunpack.c.h.b16 %v632
    %v2571 = vunpack.c.l.b16 %v633
    %v2572 = vunpack.c.l.b16 %v634
    %v2573 = vunpack.c.h.b16 %v634
    %v2574 = vunpack.c.l.b16 %v635
    %v2575 = vunpack.c.h.b16 %v635
    %v2576 = vunpack.c.l.b16 %v636
    %v2577 = vunpack.c.h.b16 %v636
    %v2578 = vunpack.c.l.b16 %v637
    %v2579 = vunpack.c.h.b16 %v637
    %v2580 = vunpack.c.l.b16 %v638
    %v2581 = vunpack.c.h.b16 %v638
    %v2582 = vunpack.c.l.b16 %v639
    %v2583 = vunpack.c.h.b16 %v639
    %v2584 = vunpack.c.l.b16 %v640
    %v2585 = vunpack.c.h.b16 %v640
    %v2586 = vunpack.c.l.b16 %v641
    %v2587 = vunpack.c.h.b16 %v641
    %v2588 = vunpack.c.l.b16 %v642
    %v2589 = vunpack.c.h.b16 %v642
    %v2590 = vunpack.c.l.b16 %v643
    %v2591 = vunpack.c.h.b16 %v643
    %v2592 = vunpack.c.l.b16 %v644
    %v2593 = vunpack.c.l.b16 %v645
    %v2594 = vunpack.c.h.b16 %v645
    %v2595 = vunpack.c.l.b16 %v646
    %v2596 = vunpack.c.h.b16 %v646
    %v2597 = vunpack.c.l.b16 %v647
    %v2598 = vunpack.c.h.b16 %v647
    %v2599 = vunpack.c.l.b16 %v648
    %v2600 = vunpack.c.h.b16 %v648
    %v2601 = vunpack.c.l.b16 %v649
    %v2602 = vunpack.c.h.b16 %v649
    %v2603 = vunpack.c.l.b16 %v650
    %v2604 = vunpack.c.h.b16 %v650
    %v2605 = vunpack.c.l.b16 %v651
    %v2606 = vunpack.c.h.b16 %v651
    %v2607 = vunpack.c.l.b16 %v652
    %v2608 = vunpack.c.h.b16 %v652
    %v2609 = vunpack.c.l.b16 %v653
    %v2610 = vunpack.c.h.b16 %v653
    %v2611 = vunpack.c.l.b16 %v654
    %v2612 = vunpack.c.h.b16 %v654
    %v2613 = vunpack.c.l.b16 %v655
    %v2614 = vunpack.c.l.b16 %v656
    %v2615 = vunpack.c.h.b16 %v656
    %v2616 = vunpack.c.l.b16 %v657
    %v2617 = vunpack.c.h.b16 %v657
    %v2618 = vunpack.c.l.b16 %v658
    %v2619 = vunpack.c.h.b16 %v658
    %v2620 = vunpack.c.l.b16 %v659
    %v2621 = vunpack.c.h.b16 %v659
    %v2622 = vunpack.c.l.b16 %v660
    %v2623 = vunpack.c.h.b16 %v660
    %v2624 = vunpack.c.l.b16 %v661
    %v2625 = vunpack.c.h.b16 %v661
    %v2626 = vunpack.c.l.b16 %v662
    %v2627 = vunpack.c.h.b16 %v662
    %v2628 = vunpack.c.l.b16 %v663
    %v2629 = vunpack.c.h.b16 %v663
    %v2630 = vunpack.c.l.b16 %v664
    %v2631 = vunpack.c.h.b16 %v664
    %v2632 = vunpack.c.l.b16 %v665
    %v2633 = vunpack.c.h.b16 %v665
    %v2634 = vunpack.c.l.b16 %v666
    %v2635 = vunpack.c.l.b16 %v667
    %v2636 = vunpack.c.h.b16 %v667
    %v2637 = vunpack.c.l.b16 %v668
    %v2638 = vunpack.c.h.b16 %v668
    %v2639 = vunpack.c.l.b16 %v669
    %v2640 = vunpack.c.h.b16 %v669
    %v2641 = vunpack.c.l.b16 %v670
    %v2642 = vunpack.c.h.b16 %v670
    %v2643 = vunpack.c.l.b16 %v671
    %v2644 = vunpack.c.h.b16 %v671
    %v2645 = vunpack.c.l.b16 %v672
    %v2646 = vunpack.c.h.b16 %v672
    %v2647 = vunpack.c.l.b16 %v673
    %v2648 = vunpack.c.h.b16 %v673
    %v2649 = vunpack.c.l.b16 %v674
    %v2650 = vunpack.c.h.b16 %v674
    %v2651 = vunpack.c.l.b16 %v675
    %v2652 = vunpack.c.h.b16 %v675
    %v2653 = vunpack.c.l.b16 %v676
    %v2654 = vunpack.c.h.b16 %v676
    %v2655 = vunpack.c.l.b16 %v677
    %v2656 = vunpack.c.l.b16 %v678
    %v2657 = vunpack.c.h.b16 %v678
    %v2658 = vunpack.c.l.b16 %v679
    %v2659 = vunpack.c.h.b16 %v679
    %v2660 = vunpack.c.l.b16 %v680
    %v2661 = vunpack.c.h.b16 %v680
    %v2662 = vunpack.c.l.b16 %v681
    %v2663 = vunpack.c.h.b16 %v681
    %v2664 = vunpack.c.l.b16 %v682
    %v2665 = vunpack.c.h.b16 %v682
    %v2666 = vunpack.c.l.b16 %v683
    %v2667 = vunpack.c.h.b16 %v683
    %v2668 = vunpack.c.l.b16 %v684
    %v2669 = vunpack.c.h.b16 %v684
    %v2670 = vunpack.c.l.b16 %v685
    %v2671 = vunpack.c.h.b16 %v685
    %v2672 = vunpack.c.l.b16 %v686
    %v2673 = vunpack.c.h.b16 %v686
    %v2674 = vunpack.c.l.b16 %v687
    %v2675 = vunpack.c.h.b16 %v687
    %v2676 = vunpack.c.l.b16 %v688
    %v2677 = vunpack.c.l.b16 %v689
    %v2678 = vunpack.c.h.b16 %v689
    %v2679 = vunpack.c.l.b16 %v690
    %v2680 = vunpack.c.h.b16 %v690
    %v2681 = vunpack.c.l.b16 %v691
    %v2682 = vunpack.c.h.b16 %v691
    %v2683 = vunpack.c.l.b16 %v692
    %v2684 = vunpack.c.h.b16 %v692
    %v2685 = vunpack.c.l.b16 %v693
    %v2686 = vunpack.c.h.b16 %v693
    %v2687 = vunpack.c.l.b16 %v694
    %v2688 = vunpack.c.h.b16 %v694
    %v2689 = vunpack.c.l.b16 %v695
    %v2690 = vunpack.c.h.b16 %v695
    %v2691 = vunpack.c.l.b16 %v696
    %v2692 = vunpack.c.h.b16 %v696
    %v2693 = vunpack.c.l.b16 %v697
    %v2694 = vunpack.c.h.b16 %v697
    %v2695 = vunpack.c.l.b16 %v698
    %v2696 = vunpack.c.h.b16 %v698
    %v2697 = vunpack.c.l.b16 %v699
    %v2698 = vunpack.c.l.b16 %v700
    %v2699 = vunpack.c.h.b16 %v700
    %v2700 = vunpack.c.l.b16 %v701
    %v2701 = vunpack.c.h.b16 %v701
    %v2702 = vunpack.c.l.b16 %v702
    %v2703 = vunpack.c.h.b16 %v702
    %v2704 = vunpack.c.l.b16 %v703
    %v2705 = vunpack.c.h.b16 %v703
    %v2706 = vunpack.c.l.b16 %v704
    %v2707 = vunpack.c.h.b16 %v704
    %v2708 = vunpack.c.l.b16 %v705
    %v2709 = vunpack.c.h.b16 %v705
    %v2710 = vunpack.c.l.b16 %v706
    %v2711 = vunpack.c.h.b16 %v706
    %v2712 = vunpack.c.l.b16 %v707
    %v2713 = vunpack.c.h.b16 %v707
    %v2714 = vunpack.c.l.b16 %v708
    %v2715 = vunpack.c.h.b16 %v708
    %v2716 = vunpack.c.l.b16 %v709
    %v2717 = vunpack.c.h.b16 %v709
    %v2718 = vunpack.c.l.b16 %v710
    %v2719 = vunpack.c.l.b16 %v711
    %v2720 = vunpack.c.h.b16 %v711
    %v2721 = vunpack.c.l.b16 %v712
    %v2722 = vunpack.c.h.b16 %v712
    %v2723 = vunpack.c.l.b16 %v713
    %v2724 = vunpack.c.h.b16 %v713
    %v2725 = vunpack.c.l.b16 %v714
    %v2726 = vunpack.c.h.b16 %v714
    %v2727 = vunpack.c.l.b16 %v715
    %v2728 = vunpack.c.h.b16 %v715
    %v2729 = vunpack.c.l.b16 %v716
    %v2730 = vunpack.c.h.b16 %v716
    %v2731 = vunpack.c.l.b16 %v717
    %v2732 = vunpack.c.h.b16 %v717
    %v2733 = vunpack.c.l.b16 %v718
    %v2734 = vunpack.c.h.b16 %v718
    %v2735 = vunpack.c.l.b16 %v719
    %v2736 = vunpack.c.h.b16 %v719
    %v2737 = vunpack.c.l.b16 %v720
    %v2738 = vunpack.c.h.b16 %v720
    %v2739 = vunpack.c.l.b16 %v721
    %v2740 = vunpack.c.l.b16 %v722
    %v2741 = vunpack.c.h.b16 %v722
    %v2742 = vunpack.c.l.b16 %v723
    %v2743 = vunpack.c.h.b16 %v723
    %v2744 = vunpack.c.l.b16 %v724
    %v2745 = vunpack.c.h.b16 %v724
    %v2746 = vunpack.c.l.b16 %v725
    %v2747 = vunpack.c.h.b16 %v725
    %v2748 = vunpack.c.l.b16 %v726
    %v2749 = vunpack.c.h.b16 %v726
    %v2750 = vunpack.c.l.b16 %v727
    %v2751 = vunpack.c.h.b16 %v727
    %v2752 = vunpack.c.l.b16 %v728
    %v2753 = vunpack.c.h.b16 %v728
    %v2754 = vunpack.c.l.b16 %v729
    %v2755 = vunpack.c.h.b16 %v729
    %v2756 = vunpack.c.l.b16 %v730
    %v2757 = vunpack.c.h.b16 %v730
    %v2758 = vunpack.c.l.b16 %v731
    %v2759 = vunpack.c.h.b16 %v731
    %v2760 = vunpack.c.l.b16 %v732
    %v2761 = vunpack.c.l.b16 %v733
    %v2762 = vunpack.c.h.b16 %v733
    %v2763 = vunpack.c.l.b16 %v734
    %v2764 = vunpack.c.h.b16 %v734
    %v2765 = vunpack.c.l.b16 %v735
    %v2766 = vunpack.c.h.b16 %v735
    %v2767 = vunpack.c.l.b16 %v736
    %v2768 = vunpack.c.h.b16 %v736
    %v2769 = vunpack.c.l.b16 %v737
    %v2770 = vunpack.c.h.b16 %v737
    %v2771 = vunpack.c.l.b16 %v738
    %v2772 = vunpack.c.h.b16 %v738
    %v2773 = vunpack.c.l.b16 %v739
    %v2774 = vunpack.c.h.b16 %v739
    %v2775 = vunpack.c.l.b16 %v740
    %v2776 = vunpack.c.h.b16 %v740
    %v2777 = vunpack.c.l.b16 %v741
    %v2778 = vunpack.c.h.b16 %v741
    %v2779 = vunpack.c.l.b16 %v742
    %v2780 = vunpack.c.h.b16 %v742
    %v2781 = vunpack.c.l.b16 %v743
    %v2782 = vunpack.c.l.b16 %v744
    %v2783 = vunpack.c.h.b16 %v744
    %v2784 = vunpack.c.l.b16 %v745
    %v2785 = vunpack.c.h.b16 %v745
    %v2786 = vunpack.c.l.b16 %v746
    %v2787 = vunpack.c.h.b16 %v746
    %v2788 = vunpack.c.l.b16 %v747
    %v2789 = vunpack.c.h.b16 %v747
    %v2790 = vunpack.c.l.b16 %v748
    %v2791 = vunpack.c.h.b16 %v748
    %v2792 = vunpack.c.l.b16 %v749
    %v2793 = vunpack.c.h.b16 %v749
    %v2794 = vunpack.c.l.b16 %v750
    %v2795 = vunpack.c.h.b16 %v750
    %v2796 = vunpack.c.l.b16 %v751
    %v2797 = vunpack.c.h.b16 %v751
    %v2798 = vunpack.c.l.b16 %v752
    %v2799 = vunpack.c.h.b16 %v752
    %v2800 = vunpack.c.l.b16 %v753
    %v2801 = vunpack.c.h.b16 %v753
    %v2802 = vunpack.c.l.b16 %v754
    %v2803 = vpack.c.b16 %v1480, %v1459
    %v2804 = vpack.c.b16 %v1481, %v1460
    %v2805 = vpack.c.b16 %v1482, %v1461
    %v2806 = vpack.c.b16 %v1483, %v1462
    %v2807 = vpack.c.b16 %v1484, %v1463
    %v2808 = vpack.c.b16 %v1485, %v1464
    %v2809 = vpack.c.b16 %v1486, %v1465
    %v2810 = vpack.c.b16 %v1487, %v1466
    %v2811 = vpack.c.b16 %v1488, %v1467
    %v2812 = vpack.c.b16 %v1489, %v1468
    %v2813 = vpack.c.b16 %v1490, %v1469
    %v2814 = vpack.c.b16 %v1491, %v1470
    %v2815 = vpack.c.b16 %v1492, %v1471
    %v2816 = vpack.c.b16 %v1493, %v1472
    %v2817 = vpack.c.b16 %v1494, %v1473
    %v2818 = vpack.c.b16 %v1495, %v1474
    %v2819 = vpack.c.b16 %v1496, %v1475
    %v2820 = vpack.c.b16 %v1497, %v1476
    %v2821 = vpack.c.b16 %v1498, %v1477
    %v2822 = vpack.c.b16 %v1499, %v1478
    %v2823 = vpack.c.b16 %v1500, %v1479
    %v2824 = vpack.c.b16 %v1522, %v1501
    %v2825 = vpack.c.b16 %v1523, %v1502
    %v2826 = vpack.c.b16 %v1524, %v1503
    %v2827 = vpack.c.b16 %v1525, %v1504
    %v2828 = vpack.c.b16 %v1526, %v1505
    %v2829 = vpack.c.b16 %v1527, %v1506
    %v2830 = vpack.c.b16 %v1528, %v1507
    %v2831 = vpack.c.b16 %v1529, %v1508
    %v2832 = vpack.c.b16 %v1530, %v1509
    %v2833 = vpack.c.b16 %v1531, %v1510
    %v2834 = vpack.c.b16 %v1532, %v1511
    %v2835 = vpack.c.b16 %v1533, %v1512
    %v2836 = vpack.c.b16 %v1534, %v1513
    %v2837 = vpack.c.b16 %v1535, %v1514
    %v2838 = vpack.c.b16 %v1536, %v1515
    %v2839 = vpack.c.b16 %v1537, %v1516
    %v2840 = vpack.c.b16 %v1538, %v1517
    %v2841 = vpack.c.b16 %v1539, %v1518
    %v2842 = vpack.c.b16 %v1540, %v1519
    %v2843 = vpack.c.b16 %v1541, %v1520
    %v2844 = vpack.c.b16 %v1542, %v1521
    %v2845 = vpack.c.b16 %v1564, %v1543
    %v2846 = vpack.c.b16 %v1565, %v1544
    %v2847 = vpack.c.b16 %v1566, %v1545
    %v2848 = vpack.c.b16 %v1567, %v1546
    %v2849 = vpack.c.b16 %v1568, %v1547
    %v2850 = vpack.c.b16 %v1569, %v1548
    %v2851 = vpack.c.b16 %v1570, %v1549
    %v2852 = vpack.c.b16 %v1571, %v1550
    %v2853 = vpack.c.b16 %v1572, %v1551
    %v2854 = vpack.c.b16 %v1573, %v1552
    %v2855 = vpack.c.b16 %v1574, %v1553
    %v2856 = vpack.c.b16 %v1575, %v1554
    %v2857 = vpack.c.b16 %v1576, %v1555
    %v2858 = vpack.c.b16 %v1577, %v1556
    %v2859 = vpack.c.b16 %v1578, %v1557
    %v2860 = vpack.c.b16 %v1579, %v1558
    %v2861 = vpack.c.b16 %v1580, %v1559
    %v2862 = vpack.c.b16 %v1581, %v1560
    %v2863 = vpack.c.b16 %v1582, %v1561
    %v2864 = vpack.c.b16 %v1583, %v1562
    %v2865 = vpack.c.b16 %v1584, %v1563
    %v2866 = vpack.c.b16 %v1606, %v1585
    %v2867 = vpack.c.b16 %v1607, %v1586
    %v2868 = vpack.c.b16 %v1608, %v1587
    %v2869 = vpack.c.b16 %v1609, %v1588
    %v2870 = vpack.c.b16 %v1610, %v1589
    %v2871 = vpack.c.b16 %v1611, %v1590
    %v2872 = vpack.c.b16 %v1612, %v1591
    %v2873 = vpack.c.b16 %v1613, %v1592
    %v2874 = vpack.c.b16 %v1614, %v1593
    %v2875 = vpack.c.b16 %v1615, %v1594
    %v2876 = vpack.c.b16 %v1616, %v1595
    %v2877 = vpack.c.b16 %v1617, %v1596
    %v2878 = vpack.c.b16 %v1618, %v1597
    %v2879 = vpack.c.b16 %v1619, %v1598
    %v2880 = vpack.c.b16 %v1620, %v1599
    %v2881 = vpack.c.b16 %v1621, %v1600
    %v2882 = vpack.c.b16 %v1622, %v1601
    %v2883 = vpack.c.b16 %v1623, %v1602
    %v2884 = vpack.c.b16 %v1624, %v1603
    %v2885 = vpack.c.b16 %v1625, %v1604
    %v2886 = vpack.c.b16 %v1626, %v1605
    %v2887 = vpack.c.b16 %v1648, %v1627
    %v2888 = vpack.c.b16 %v1649, %v1628
    %v2889 = vpack.c.b16 %v1650, %v1629
    %v2890 = vpack.c.b16 %v1651, %v1630
    %v2891 = vpack.c.b16 %v1652, %v1631
    %v2892 = vpack.c.b16 %v1653, %v1632
    %v2893 = vpack.c.b16 %v1654, %v1633
    %v2894 = vpack.c.b16 %v1655, %v1634
    %v2895 = vpack.c.b16 %v1656, %v1635
    %v2896 = vpack.c.b16 %v1657, %v1636
    %v2897 = vpack.c.b16 %v1658, %v1637
    %v2898 = vpack.c.b16 %v1659, %v1638
    %v2899 = vpack.c.b16 %v1660, %v1639
    %v2900 = vpack.c.b16 %v1661, %v1640
    %v2901 = vpack.c.b16 %v1662, %v1641
    %v2902 = vpack.c.b16 %v1663, %v1642
    %v2903 = vpack.c.b16 %v1664, %v1643
    %v2904 = vpack.c.b16 %v1665, %v1644
    %v2905 = vpack.c.b16 %v1666, %v1645
    %v2906 = vpack.c.b16 %v1667, %v1646
    %v2907 = vpack.c.b16 %v1668, %v1647
    %v2908 = vpack.c.b16 %v1690, %v1669
    %v2909 = vpack.c.b16 %v1691, %v1670
    %v2910 = vpack.c.b16 %v1692, %v1671
    %v2911 = vpack.c.b16 %v1693, %v1672
    %v2912 = vpack.c.b16 %v1694, %v1673
    %v2913 = vpack.c.b16 %v1695, %v1674
    %v2914 = vpack.c.b16 %v1696, %v1675
    %v2915 = vpack.c.b16 %v1697, %v1676
    %v2916 = vpack.c.b16 %v1698, %v1677
    %v2917 = vpack.c.b16 %v1699, %v1678
    %v2918 = vpack.c.b16 %v1700, %v1679
    %v2919 = vpack.c.b16 %v1701, %v1680
    %v2920 = vpack.c.b16 %v1702, %v1681
    %v2921 = vpack.c.b16 %v1703, %v1682
    %v2922 = vpack.c.b16 %v1704, %v1683
    %v2923 = vpack.c.b16 %v1705, %v1684
    %v2924 = vpack.c.b16 %v1706, %v1685
    %v2925 = vpack.c.b16 %v1707, %v1686
    %v2926 = vpack.c.b16 %v1708, %v1687
    %v2927 = vpack.c.b16 %v1709, %v1688
    %v2928 = vpack.c.b16 %v1710, %v1689
    %v2929 = vpack.c.b16 %v1732, %v1711
    %v2930 = vpack.c.b16 %v1733, %v1712
    %v2931 = vpack.c.b16 %v1734, %v1713
    %v2932 = vpack.c.b16 %v1735, %v1714
    %v2933 = vpack.c.b16 %v1736, %v1715
    %v2934 = vpack.c.b16 %v1737, %v1716
    %v2935 = vpack.c.b16 %v1738, %v1717
    %v2936 = vpack.c.b16 %v1739, %v1718
    %v2937 = vpack.c.b16 %v1740, %v1719
    %v2938 = vpack.c.b16 %v1741, %v1720
    %v2939 = vpack.c.b16 %v1742, %v1721
    %v2940 = vpack.c.b16 %v1743, %v1722
    %v2941 = vpack.c.b16 %v1744, %v1723
    %v2942 = vpack.c.b16 %v1745, %v1724
    %v2943 = vpack.c.b16 %v1746, %v1725
    %v2944 = vpack.c.b16 %v1747, %v1726
    %v2945 = vpack.c.b16 %v1748, %v1727
    %v2946 = vpack.c.b16 %v1749, %v1728
    %v2947 = vpack.c.b16 %v1750, %v1729
    %v2948 = vpack.c.b16 %v1751, %v1730
    %v2949 = vpack.c.b16 %v1752, %v1731
    %v2950 = vpack.c.b16 %v1774, %v1753
    %v2951 = vpack.c.b16 %v1775, %v1754
    %v2952 = vpack.c.b16 %v1776, %v1755
    %v2953 = vpack.c.b16 %v1777, %v1756
    %v2954 = vpack.c.b16 %v1778, %v1757
    %v2955 = vpack.c.b16 %v1779, %v1758
    %v2956 = vpack.c.b16 %v1780, %v1759
    %v2957 = vpack.c.b16 %v1781, %v1760
    %v2958 = vpack.c.b16 %v1782, %v1761
    %v2959 = vpack.c.b16 %v1783, %v1762
    %v2960 = vpack.c.b16 %v1784, %v1763
    %v2961 = vpack.c.b16 %v1785, %v1764
    %v2962 = vpack.c.b16 %v1786, %v1765
    %v2963 = vpack.c.b16 %v1787, %v1766
    %v2964 = vpack.c.b16 %v1788, %v1767
    %v2965 = vpack.c.b16 %v1789, %v1768
    %v2966 = vpack.c.b16 %v1790, %v1769
    %v2967 = vpack.c.b16 %v1791, %v1770
    %v2968 = vpack.c.b16 %v1792, %v1771
    %v2969 = vpack.c.b16 %v1793, %v1772
    %v2970 = vpack.c.b16 %v1794, %v1773
    %v2971 = vpack.c.b16 %v1816, %v1795
    %v2972 = vpack.c.b16 %v1817, %v1796
    %v2973 = vpack.c.b16 %v1818, %v1797
    %v2974 = vpack.c.b16 %v1819, %v1798
    %v2975 = vpack.c.b16 %v1820, %v1799
    %v2976 = vpack.c.b16 %v1821, %v1800
    %v2977 = vpack.c.b16 %v1822, %v1801
    %v2978 = vpack.c.b16 %v1823, %v1802
    %v2979 = vpack.c.b16 %v1824, %v1803
    %v2980 = vpack.c.b16 %v1825, %v1804
    %v2981 = vpack.c.b16 %v1826, %v1805
    %v2982 = vpack.c.b16 %v1827, %v1806
    %v2983 = vpack.c.b16 %v1828, %v1807
    %v2984 = vpack.c.b16 %v1829, %v1808
    %v2985 = vpack.c.b16 %v1830, %v1809
    %v2986 = vpack.c.b16 %v1831, %v1810
    %v2987 = vpack.c.b16 %v1832, %v1811
    %v2988 = vpack.c.b16 %v1833, %v1812
    %v2989 = vpack.c.b16 %v1834, %v1813
    %v2990 = vpack.c.b16 %v1835, %v1814
    %v2991 = vpack.c.b16 %v1836, %v1815
    %v2992 = vpack.c.b16 %v1858, %v1837
    %v2993 = vpack.c.b16 %v1859, %v1838
    %v2994 = vpack.c.b16 %v1860, %v1839
    %v2995 = vpack.c.b16 %v1861, %v1840
    %v2996 = vpack.c.b16 %v1862, %v1841
    %v2997 = vpack.c.b16 %v1863, %v1842
    %v2998 = vpack.c.b16 %v1864, %v1843
    %v2999 = vpack.c.b16 %v1865, %v1844
    %v3000 = vpack.c.b16 %v1866, %v1845
    %v3001 = vpack.c.b16 %v1867, %v1846
    %v3002 = vpack.c.b16 %v1868, %v1847
    %v3003 = vpack.c.b16 %v1869, %v1848
    %v3004 = vpack.c.b16 %v1870, %v1849
    %v3005 = vpack.c.b16 %v1871, %v1850
    %v3006 = vpack.c.b16 %v1872, %v1851
    %v3007 = vpack.c.b16 %v1873, %v1852
    %v3008 = vpack.c.b16 %v1874, %v1853
    %v3009 = vpack.c.b16 %v1875, %v1854
    %v3010 = vpack.c.b16 %v1876, %v1855
    %v3011 = vpack.c.b16 %v1877, %v1856
    %v3012 = vpack.c.b16 %v1878, %v1857
    %v3013 = vpack.c.b16 %v1900, %v1879
    %v3014 = vpack.c.b16 %v1901, %v1880
    %v3015 = vpack.c.b16 %v1902, %v1881
    %v3016 = vpack.c.b16 %v1903, %v1882
    %v3017 = vpack.c.b16 %v1904, %v1883
    %v3018 = vpack.c.b16 %v1905, %v1884
    %v3019 = vpack.c.b16 %v1906, %v1885
    %v3020 = vpack.c.b16 %v1907, %v1886
    %v3021 = vpack.c.b16 %v1908, %v1887
    %v3022 = vpack.c.b16 %v1909, %v1888
    %v3023 = vpack.c.b16 %v1910, %v1889
    %v3024 = vpack.c.b16 %v1911, %v1890
    %v3025 = vpack.c.b16 %v1912, %v1891
    %v3026 = vpack.c.b16 %v1913, %v1892
    %v3027 = vpack.c.b16 %v1914, %v1893
    %v3028 = vpack.c.b16 %v1915, %v1894
    %v3029 = vpack.c.b16 %v1916, %v1895
    %v3030 = vpack.c.b16 %v1917, %v1896
    %v3031 = vpack.c.b16 %v1918, %v1897
    %v3032 = vpack.c.b16 %v1919, %v1898
    %v3033 = vpack.c.b16 %v1920, %v1899
    %v3034 = vpack.c.b16 %v1942, %v1921
    %v3035 = vpack.c.b16 %v1943, %v1922
    %v3036 = vpack.c.b16 %v1944, %v1923
    %v3037 = vpack.c.b16 %v1945, %v1924
    %v3038 = vpack.c.b16 %v1946, %v1925
    %v3039 = vpack.c.b16 %v1947, %v1926
    %v3040 = vpack.c.b16 %v1948, %v1927
    %v3041 = vpack.c.b16 %v1949, %v1928
    %v3042 = vpack.c.b16 %v1950, %v1929
    %v3043 = vpack.c.b16 %v1951, %v1930
    %v3044 = vpack.c.b16 %v1952, %v1931
    %v3045 = vpack.c.b16 %v1953, %v1932
    %v3046 = vpack.c.b16 %v1954, %v1933
    %v3047 = vpack.c.b16 %v1955, %v1934
    %v3048 = vpack.c.b16 %v1956, %v1935
    %v3049 = vpack.c.b16 %v1957, %v1936
    %v3050 = vpack.c.b16 %v1958, %v1937
    %v3051 = vpack.c.b16 %v1959, %v1938
    %v3052 = vpack.c.b16 %v1960, %v1939
    %v3053 = vpack.c.b16 %v1961, %v1940
    %v3054 = vpack.c.b16 %v1962, %v1941
    %v3055 = vpack.c.b16 %v1984, %v1963
    %v3056 = vpack.c.b16 %v1985, %v1964
    %v3057 = vpack.c.b16 %v1986, %v1965
    %v3058 = vpack.c.b16 %v1987, %v1966
    %v3059 = vpack.c.b16 %v1988, %v1967
    %v3060 = vpack.c.b16 %v1989, %v1968
    %v3061 = vpack.c.b16 %v1990, %v1969
    %v3062 = vpack.c.b16 %v1991, %v1970
    %v3063 = vpack.c.b16 %v1992, %v1971
    %v3064 = vpack.c.b16 %v1993, %v1972
    %v3065 = vpack.c.b16 %v1994, %v1973
    %v3066 = vpack.c.b16 %v1995, %v1974
    %v3067 = vpack.c.b16 %v1996, %v1975
    %v3068 = vpack.c.b16 %v1997, %v1976
    %v3069 = vpack.c.b16 %v1998, %v1977
    %v3070 = vpack.c.b16 %v1999, %v1978
    %v3071 = vpack.c.b16 %v2000, %v1979
    %v3072 = vpack.c.b16 %v2001, %v1980
    %v3073 = vpack.c.b16 %v2002, %v1981
    %v3074 = vpack.c.b16 %v2003, %v1982
    %v3075 = vpack.c.b16 %v2004, %v1983
    %v3076 = vpack.c.b16 %v2026, %v2005
    %v3077 = vpack.c.b16 %v2027, %v2006
    %v3078 = vpack.c.b16 %v2028, %v2007
    %v3079 = vpack.c.b16 %v2029, %v2008
    %v3080 = vpack.c.b16 %v2030, %v2009
    %v3081 = vpack.c.b16 %v2031, %v2010
    %v3082 = vpack.c.b16 %v2032, %v2011
    %v3083 = vpack.c.b16 %v2033, %v2012
    %v3084 = vpack.c.b16 %v2034, %v2013
    %v3085 = vpack.c.b16 %v2035, %v2014
    %v3086 = vpack.c.b16 %v2036, %v2015
    %v3087 = vpack.c.b16 %v2037, %v2016
    %v3088 = vpack.c.b16 %v2038, %v2017
    %v3089 = vpack.c.b16 %v2039, %v2018
    %v3090 = vpack.c.b16 %v2040, %v2019
    %v3091 = vpack.c.b16 %v2041, %v2020
    %v3092 = vpack.c.b16 %v2042, %v2021
    %v3093 = vpack.c.b16 %v2043, %v2022
    %v3094 = vpack.c.b16 %v2044, %v2023
    %v3095 = vpack.c.b16 %v2045, %v2024
    %v3096 = vpack.c.b16 %v2046, %v2025
    %v3097 = vpack.c.b16 %v2068, %v2047
    %v3098 = vpack.c.b16 %v2069, %v2048
    %v3099 = vpack.c.b16 %v2070, %v2049
    %v3100 = vpack.c.b16 %v2071, %v2050
    %v3101 = vpack.c.b16 %v2072, %v2051
    %v3102 = vpack.c.b16 %v2073, %v2052
    %v3103 = vpack.c.b16 %v2074, %v2053
    %v3104 = vpack.c.b16 %v2075, %v2054
    %v3105 = vpack.c.b16 %v2076, %v2055
    %v3106 = vpack.c.b16 %v2077, %v2056
    %v3107 = vpack.c.b16 %v2078, %v2057
    %v3108 = vpack.c.b16 %v2079, %v2058
    %v3109 = vpack.c.b16 %v2080, %v2059
    %v3110 = vpack.c.b16 %v2081, %v2060
    %v3111 = vpack.c.b16 %v2082, %v2061
    %v3112 = vpack.c.b16 %v2083, %v2062
    %v3113 = vpack.c.b16 %v2084, %v2063
    %v3114 = vpack.c.b16 %v2085, %v2064
    %v3115 = vpack.c.b16 %v2086, %v2065
    %v3116 = vpack.c.b16 %v2087, %v2066
    %v3117 = vpack.c.b16 %v2088, %v2067
    %v3118 = vpack.c.b16 %v2110, %v2089
    %v3119 = vpack.c.b16 %v2111, %v2090
    %v3120 = vpack.c.b16 %v2112, %v2091
    %v3121 = vpack.c.b16 %v2113, %v2092
    %v3122 = vpack.c.b16 %v2114, %v2093
    %v3123 = vpack.c.b16 %v2115, %v2094
    %v3124 = vpack.c.b16 %v2116, %v2095
    %v3125 = vpack.c.b16 %v2117, %v2096
    %v3126 = vpack.c.b16 %v2118, %v2097
    %v3127 = vpack.c.b16 %v2119, %v2098
    %v3128 = vpack.c.b16 %v2120, %v2099
    %v3129 = vpack.c.b16 %v2121, %v2100
    %v3130 = vpack.c.b16 %v2122, %v2101
    %v3131 = vpack.c.b16 %v2123, %v2102
    %v3132 = vpack.c.b16 %v2124, %v2103
    %v3133 = vpack.c.b16 %v2125, %v2104
    %v3134 = vpack.c.b16 %v2126, %v2105
    %v3135 = vpack.c.b16 %v2127, %v2106
    %v3136 = vpack.c.b16 %v2128, %v2107
    %v3137 = vpack.c.b16 %v2129, %v2108
    %v3138 = vpack.c.b16 %v2130, %v2109
    %v3139 = vpack.c.b16 %v2152, %v2131
    %v3140 = vpack.c.b16 %v2153, %v2132
    %v3141 = vpack.c.b16 %v2154, %v2133
    %v3142 = vpack.c.b16 %v2155, %v2134
    %v3143 = vpack.c.b16 %v2156, %v2135
    %v3144 = vpack.c.b16 %v2157, %v2136
    %v3145 = vpack.c.b16 %v2158, %v2137
    %v3146 = vpack.c.b16 %v2159, %v2138
    %v3147 = vpack.c.b16 %v2160, %v2139
    %v3148 = vpack.c.b16 %v2161, %v2140
    %v3149 = vpack.c.b16 %v2162, %v2141
    %v3150 = vpack.c.b16 %v2163, %v2142
    %v3151 = vpack.c.b16 %v2164, %v2143
    %v3152 = vpack.c.b16 %v2165, %v2144
    %v3153 = vpack.c.b16 %v2166, %v2145
    %v3154 = vpack.c.b16 %v2167, %v2146
    %v3155 = vpack.c.b16 %v2168, %v2147
    %v3156 = vpack.c.b16 %v2169, %v2148
    %v3157 = vpack.c.b16 %v2170, %v2149
    %v3158 = vpack.c.b16 %v2171, %v2150
    %v3159 = vpack.c.b16 %v2172, %v2151
    %v3160 = vpack.c.b16 %v2194, %v2173
    %v3161 = vpack.c.b16 %v2195, %v2174
    %v3162 = vpack.c.b16 %v2196, %v2175
    %v3163 = vpack.c.b16 %v2197, %v2176
    %v3164 = vpack.c.b16 %v2198, %v2177
    %v3165 = vpack.c.b16 %v2199, %v2178
    %v3166 = vpack.c.b16 %v2200, %v2179
    %v3167 = vpack.c.b16 %v2201, %v2180
    %v3168 = vpack.c.b16 %v2202, %v2181
    %v3169 = vpack.c.b16 %v2203, %v2182
    %v3170 = vpack.c.b16 %v2204, %v2183
    %v3171 = vpack.c.b16 %v2205, %v2184
    %v3172 = vpack.c.b16 %v2206, %v2185
    %v3173 = vpack.c.b16 %v2207, %v2186
    %v3174 = vpack.c.b16 %v2208, %v2187
    %v3175 = vpack.c.b16 %v2209, %v2188
    %v3176 = vpack.c.b16 %v2210, %v2189
    %v3177 = vpack.c.b16 %v2211, %v2190
    %v3178 = vpack.c.b16 %v2212, %v2191
    %v3179 = vpack.c.b16 %v2213, %v2192
    %v3180 = vpack.c.b16 %v2214, %v2193
    %v3181 = vpack.c.b16 %v2236, %v2215
    %v3182 = vpack.c.b16 %v2237, %v2216
    %v3183 = vpack.c.b16 %v2238, %v2217
    %v3184 = vpack.c.b16 %v2239, %v2218
    %v3185 = vpack.c.b16 %v2240, %v2219
    %v3186 = vpack.c.b16 %v2241, %v2220
    %v3187 = vpack.c.b16 %v2242, %v2221
    %v3188 = vpack.c.b16 %v2243, %v2222
    %v3189 = vpack.c.b16 %v2244, %v2223
    %v3190 = vpack.c.b16 %v2245, %v2224
    %v3191 = vpack.c.b16 %v2246, %v2225
    %v3192 = vpack.c.b16 %v2247, %v2226
    %v3193 = vpack.c.b16 %v2248, %v2227
    %v3194 = vpack.c.b16 %v2249, %v2228
    %v3195 = vpack.c.b16 %v2250, %v2229
    %v3196 = vpack.c.b16 %v2251, %v2230
    %v3197 = vpack.c.b16 %v2252, %v2231
    %v3198 = vpack.c.b16 %v2253, %v2232
    %v3199 = vpack.c.b16 %v2254, %v2233
    %v3200 = vpack.c.b16 %v2255, %v2234
    %v3201 = vpack.c.b16 %v2256, %v2235
    %v3202 = vpack.c.b16 %v2278, %v2257
    %v3203 = vpack.c.b16 %v2279, %v2258
    %v3204 = vpack.c.b16 %v2280, %v2259
    %v3205 = vpack.c.b16 %v2281, %v2260
    %v3206 = vpack.c.b16 %v2282, %v2261
    %v3207 = vpack.c.b16 %v2283, %v2262
    %v3208 = vpack.c.b16 %v2284, %v2263
    %v3209 = vpack.c.b16 %v2285, %v2264
    %v3210 = vpack.c.b16 %v2286, %v2265
    %v3211 = vpack.c.b16 %v2287, %v2266
    %v3212 = vpack.c.b16 %v2288, %v2267
    %v3213 = vpack.c.b16 %v2289, %v2268
    %v3214 = vpack.c.b16 %v2290, %v2269
    %v3215 = vpack.c.b16 %v2291, %v2270
    %v3216 = vpack.c.b16 %v2292, %v2271
    %v3217 = vpack.c.b16 %v2293, %v2272
    %v3218 = vpack.c.b16 %v2294, %v2273
    %v3219 = vpack.c.b16 %v2295, %v2274
    %v3220 = vpack.c.b16 %v2296, %v2275
    %v3221 = vpack.c.b16 %v2297, %v2276
    %v3222 = vpack.c.b16 %v2298, %v2277
    %v3223 = vpack.c.b16 %v2320, %v2299
    %v3224 = vpack.c.b16 %v2321, %v2300
    %v3225 = vpack.c.b16 %v2322, %v2301
    %v3226 = vpack.c.b16 %v2323, %v2302
    %v3227 = vpack.c.b16 %v2324, %v2303
    %v3228 = vpack.c.b16 %v2325, %v2304
    %v3229 = vpack.c.b16 %v2326, %v2305
    %v3230 = vpack.c.b16 %v2327, %v2306
    %v3231 = vpack.c.b16 %v2328, %v2307
    %v3232 = vpack.c.b16 %v2329, %v2308
    %v3233 = vpack.c.b16 %v2330, %v2309
    %v3234 = vpack.c.b16 %v2331, %v2310
    %v3235 = vpack.c.b16 %v2332, %v2311
    %v3236 = vpack.c.b16 %v2333, %v2312
    %v3237 = vpack.c.b16 %v2334, %v2313
    %v3238 = vpack.c.b16 %v2335, %v2314
    %v3239 = vpack.c.b16 %v2336, %v2315
    %v3240 = vpack.c.b16 %v2337, %v2316
    %v3241 = vpack.c.b16 %v2338, %v2317
    %v3242 = vpack.c.b16 %v2339, %v2318
    %v3243 = vpack.c.b16 %v2340, %v2319
    %v3244 = vpack.c.b16 %v2362, %v2341
    %v3245 = vpack.c.b16 %v2363, %v2342
    %v3246 = vpack.c.b16 %v2364, %v2343
    %v3247 = vpack.c.b16 %v2365, %v2344
    %v3248 = vpack.c.b16 %v2366, %v2345
    %v3249 = vpack.c.b16 %v2367, %v2346
    %v3250 = vpack.c.b16 %v2368, %v2347
    %v3251 = vpack.c.b16 %v2369, %v2348
    %v3252 = vpack.c.b16 %v2370, %v2349
    %v3253 = vpack.c.b16 %v2371, %v2350
    %v3254 = vpack.c.b16 %v2372, %v2351
    %v3255 = vpack.c.b16 %v2373, %v2352
    %v3256 = vpack.c.b16 %v2374, %v2353
    %v3257 = vpack.c.b16 %v2375, %v2354
    %v3258 = vpack.c.b16 %v2376, %v2355
    %v3259 = vpack.c.b16 %v2377, %v2356
    %v3260 = vpack.c.b16 %v2378, %v2357
    %v3261 = vpack.c.b16 %v2379, %v2358
    %v3262 = vpack.c.b16 %v2380, %v2359
    %v3263 = vpack.c.b16 %v2381, %v2360
    %v3264 = vpack.c.b16 %v2382, %v2361
    %v3265 = vpack.c.b16 %v2404, %v2383
    %v3266 = vpack.c.b16 %v2405, %v2384
    %v3267 = vpack.c.b16 %v2406, %v2385
    %v3268 = vpack.c.b16 %v2407, %v2386
    %v3269 = vpack.c.b16 %v2408, %v2387
    %v3270 = vpack.c.b16 %v2409, %v2388
    %v3271 = vpack.c.b16 %v2410, %v2389
    %v3272 = vpack.c.b16 %v2411, %v2390
    %v3273 = vpack.c.b16 %v2412, %v2391
    %v3274 = vpack.c.b16 %v2413, %v2392
    %v3275 = vpack.c.b16 %v2414, %v2393
    %v3276 = vpack.c.b16 %v2415, %v2394
    %v3277 = vpack.c.b16 %v2416, %v2395
    %v3278 = vpack.c.b16 %v2417, %v2396
    %v3279 = vpack.c.b16 %v2418, %v2397
    %v3280 = vpack.c.b16 %v2419, %v2398
    %v3281 = vpack.c.b16 %v2420, %v2399
    %v3282 = vpack.c.b16 %v2421, %v2400
    %v3283 = vpack.c.b16 %v2422, %v2401
    %v3284 = vpack.c.b16 %v2423, %v2402
    %v3285 = vpack.c.b16 %v2424, %v2403
    %v3286 = vpack.c.b16 %v2446, %v2425
    %v3287 = vpack.c.b16 %v2447, %v2426
    %v3288 = vpack.c.b16 %v2448, %v2427
    %v3289 = vpack.c.b16 %v2449, %v2428
    %v3290 = vpack.c.b16 %v2450, %v2429
    %v3291 = vpack.c.b16 %v2451, %v2430
    %v3292 = vpack.c.b16 %v2452, %v2431
    %v3293 = vpack.c.b16 %v2453, %v2432
    %v3294 = vpack.c.b16 %v2454, %v2433
    %v3295 = vpack.c.b16 %v2455, %v2434
    %v3296 = vpack.c.b16 %v2456, %v2435
    %v3297 = vpack.c.b16 %v2457, %v2436
    %v3298 = vpack.c.b16 %v2458, %v2437
    %v3299 = vpack.c.b16 %v2459, %v2438
    %v3300 = vpack.c.b16 %v2460, %v2439
    %v3301 = vpack.c.b16 %v2461, %v2440
    %v3302 = vpack.c.b16 %v2462, %v2441
    %v3303 = vpack.c.b16 %v2463, %v2442
    %v3304 = vpack.c.b16 %v2464, %v2443
    %v3305 = vpack.c.b16 %v2465, %v2444
    %v3306 = vpack.c.b16 %v2466, %v2445
    %v3307 = vpack.c.b16 %v2488, %v2467
    %v3308 = vpack.c.b16 %v2489, %v2468
    %v3309 = vpack.c.b16 %v2490, %v2469
    %v3310 = vpack.c.b16 %v2491, %v2470
    %v3311 = vpack.c.b16 %v2492, %v2471
    %v3312 = vpack.c.b16 %v2493, %v2472
    %v3313 = vpack.c.b16 %v2494, %v2473
    %v3314 = vpack.c.b16 %v2495, %v2474
    %v3315 = vpack.c.b16 %v2496, %v2475
    %v3316 = vpack.c.b16 %v2497, %v2476
    %v3317 = vpack.c.b16 %v2498, %v2477
    %v3318 = vpack.c.b16 %v2499, %v2478
    %v3319 = vpack.c.b16 %v2500, %v2479
    %v3320 = vpack.c.b16 %v2501, %v2480
    %v3321 = vpack.c.b16 %v2502, %v2481
    %v3322 = vpack.c.b16 %v2503, %v2482
    %v3323 = vpack.c.b16 %v2504, %v2483
    %v3324 = vpack.c.b16 %v2505, %v2484
    %v3325 = vpack.c.b16 %v2506, %v2485
    %v3326 = vpack.c.b16 %v2507, %v2486
    %v3327 = vpack.c.b16 %v2508, %v2487
    %v3328 = vpack.c.b16 %v2530, %v2509
    %v3329 = vpack.c.b16 %v2531, %v2510
    %v3330 = vpack.c.b16 %v2532, %v2511
    %v3331 = vpack.c.b16 %v2533, %v2512
    %v3332 = vpack.c.b16 %v2534, %v2513
    %v3333 = vpack.c.b16 %v2535, %v2514
    %v3334 = vpack.c.b16 %v2536, %v2515
    %v3335 = vpack.c.b16 %v2537, %v2516
    %v3336 = vpack.c.b16 %v2538, %v2517
    %v3337 = vpack.c.b16 %v2539, %v2518
    %v3338 = vpack.c.b16 %v2540, %v2519
    %v3339 = vpack.c.b16 %v2541, %v2520
    %v3340 = vpack.c.b16 %v2542, %v2521
    %v3341 = vpack.c.b16 %v2543, %v2522
    %v3342 = vpack.c.b16 %v2544, %v2523
    %v3343 = vpack.c.b16 %v2545, %v2524
    %v3344 = vpack.c.b16 %v2546, %v2525
    %v3345 = vpack.c.b16 %v2547, %v2526
    %v3346 = vpack.c.b16 %v2548, %v2527
    %v3347 = vpack.c.b16 %v2549, %v2528
    %v3348 = vpack.c.b16 %v2550, %v2529
    %v3349 = vpack.c.b16 %v2572, %v2551
    %v3350 = vpack.c.b16 %v2573, %v2552
    %v3351 = vpack.c.b16 %v2574, %v2553
    %v3352 = vpack.c.b16 %v2575, %v2554
    %v3353 = vpack.c.b16 %v2576, %v2555
    %v3354 = vpack.c.b16 %v2577, %v2556
    %v3355 = vpack.c.b16 %v2578, %v2557
    %v3356 = vpack.c.b16 %v2579, %v2558
    %v3357 = vpack.c.b16 %v2580, %v2559
    %v3358 = vpack.c.b16 %v2581, %v2560
    %v3359 = vpack.c.b16 %v2582, %v2561
    %v3360 = vpack.c.b16 %v2583, %v2562
    %v3361 = vpack.c.b16 %v2584, %v2563
    %v3362 = vpack.c.b16 %v2585, %v2564
    %v3363 = vpack.c.b16 %v2586, %v2565
    %v3364 = vpack.c.b16 %v2587, %v2566
    %v3365 = vpack.c.b16 %v2588, %v2567
    %v3366 = vpack.c.b16 %v2589, %v2568
    %v3367 = vpack.c.b16 %v2590, %v2569
    %v3368 = vpack.c.b16 %v2591, %v2570
    %v3369 = vpack.c.b16 %v2592, %v2571
    %v3370 = vpack.c.b16 %v2614, %v2593
    %v3371 = vpack.c.b16 %v2615, %v2594
    %v3372 = vpack.c.b16 %v2616, %v2595
    %v3373 = vpack.c.b16 %v2617, %v2596
    %v3374 = vpack.c.b16 %v2618, %v2597
    %v3375 = vpack.c.b16 %v2619, %v2598
    %v3376 = vpack.c.b16 %v2620, %v2599
    %v3377 = vpack.c.b16 %v2621, %v2600
    %v3378 = vpack.c.b16 %v2622, %v2601
    %v3379 = vpack.c.b16 %v2623, %v2602
    %v3380 = vpack.c.b16 %v2624, %v2603
    %v3381 = vpack.c.b16 %v2625, %v2604
    %v3382 = vpack.c.b16 %v2626, %v2605
    %v3383 = vpack.c.b16 %v2627, %v2606
    %v3384 = vpack.c.b16 %v2628, %v2607
    %v3385 = vpack.c.b16 %v2629, %v2608
    %v3386 = vpack.c.b16 %v2630, %v2609
    %v3387 = vpack.c.b16 %v2631, %v2610
    %v3388 = vpack.c.b16 %v2632, %v2611
    %v3389 = vpack.c.b16 %v2633, %v2612
    %v3390 = vpack.c.b16 %v2634, %v2613
    %v3391 = vpack.c.b16 %v2656, %v2635
    %v3392 = vpack.c.b16 %v2657, %v2636
    %v3393 = vpack.c.b16 %v2658, %v2637
    %v3394 = vpack.c.b16 %v2659, %v2638
    %v3395 = vpack.c.b16 %v2660, %v2639
    %v3396 = vpack.c.b16 %v2661, %v2640
    %v3397 = vpack.c.b16 %v2662, %v2641
    %v3398 = vpack.c.b16 %v2663, %v2642
    %v3399 = vpack.c.b16 %v2664, %v2643
    %v3400 = vpack.c.b16 %v2665, %v2644
    %v3401 = vpack.c.b16 %v2666, %v2645
    %v3402 = vpack.c.b16 %v2667, %v2646
    %v3403 = vpack.c.b16 %v2668, %v2647
    %v3404 = vpack.c.b16 %v2669, %v2648
    %v3405 = vpack.c.b16 %v2670, %v2649
    %v3406 = vpack.c.b16 %v2671, %v2650
    %v3407 = vpack.c.b16 %v2672, %v2651
    %v3408 = vpack.c.b16 %v2673, %v2652
    %v3409 = vpack.c.b16 %v2674, %v2653
    %v3410 = vpack.c.b16 %v2675, %v2654
    %v3411 = vpack.c.b16 %v2676, %v2655
    %v3412 = vpack.c.b16 %v2698, %v2677
    %v3413 = vpack.c.b16 %v2699, %v2678
    %v3414 = vpack.c.b16 %v2700, %v2679
    %v3415 = vpack.c.b16 %v2701, %v2680
    %v3416 = vpack.c.b16 %v2702, %v2681
    %v3417 = vpack.c.b16 %v2703, %v2682
    %v3418 = vpack.c.b16 %v2704, %v2683
    %v3419 = vpack.c.b16 %v2705, %v2684
    %v3420 = vpack.c.b16 %v2706, %v2685
    %v3421 = vpack.c.b16 %v2707, %v2686
    %v3422 = vpack.c.b16 %v2708, %v2687
    %v3423 = vpack.c.b16 %v2709, %v2688
    %v3424 = vpack.c.b16 %v2710, %v2689
    %v3425 = vpack.c.b16 %v2711, %v2690
    %v3426 = vpack.c.b16 %v2712, %v2691
    %v3427 = vpack.c.b16 %v2713, %v2692
    %v3428 = vpack.c.b16 %v2714, %v2693
    %v3429 = vpack.c.b16 %v2715, %v2694
    %v3430 = vpack.c.b16 %v2716, %v2695
    %v3431 = vpack.c.b16 %v2717, %v2696
    %v3432 = vpack.c.b16 %v2718, %v2697
    %v3433 = vpack.c.b16 %v2740, %v2719
    %v3434 = vpack.c.b16 %v2741, %v2720
    %v3435 = vpack.c.b16 %v2742, %v2721
    %v3436 = vpack.c.b16 %v2743, %v2722
    %v3437 = vpack.c.b16 %v2744, %v2723
    %v3438 = vpack.c.b16 %v2745, %v2724
    %v3439 = vpack.c.b16 %v2746, %v2725
    %v3440 = vpack.c.b16 %v2747, %v2726
    %v3441 = vpack.c.b16 %v2748, %v2727
    %v3442 = vpack.c.b16 %v2749, %v2728
    %v3443 = vpack.c.b16 %v2750, %v2729
    %v3444 = vpack.c.b16 %v2751, %v2730
    %v3445 = vpack.c.b16 %v2752, %v2731
    %v3446 = vpack.c.b16 %v2753, %v2732
    %v3447 = vpack.c.b16 %v2754, %v2733
    %v3448 = vpack.c.b16 %v2755, %v2734
    %v3449 = vpack.c.b16 %v2756, %v2735
    %v3450 = vpack.c.b16 %v2757, %v2736
    %v3451 = vpack.c.b16 %v2758, %v2737
    %v3452 = vpack.c.b16 %v2759, %v2738
    %v3453 = vpack.c.b16 %v2760, %v2739
    %v3454 = vpack.c.b16 %v2782, %v2761
    %v3455 = vpack.c.b16 %v2783, %v2762
    %v3456 = vpack.c.b16 %v2784, %v2763
    %v3457 = vpack.c.b16 %v2785, %v2764
    %v3458 = vpack.c.b16 %v2786, %v2765
    %v3459 = vpack.c.b16 %v2787, %v2766
    %v3460 = vpack.c.b16 %v2788, %v2767
    %v3461 = vpack.c.b16 %v2789, %v2768
    %v3462 = vpack.c.b16 %v2790, %v2769
    %v3463 = vpack.c.b16 %v2791, %v2770
    %v3464 = vpack.c.b16 %v2792, %v2771
    %v3465 = vpack.c.b16 %v2793, %v2772
    %v3466 = vpack.c.b16 %v2794, %v2773
    %v3467 = vpack.c.b16 %v2795, %v2774
    %v3468 = vpack.c.b16 %v2796, %v2775
    %v3469 = vpack.c.b16 %v2797, %v2776
    %v3470 = vpack.c.b16 %v2798, %v2777
    %v3471 = vpack.c.b16 %v2799, %v2778
    %v3472 = vpack.c.b16 %v2800, %v2779
    %v3473 = vpack.c.b16 %v2801, %v2780
    %v3474 = vpack.c.b16 %v2802, %v2781
    %4147 = vmatprep.subr.bf16.mxu0 %v2951
    %4148 = vmatpush1.bf16.msra.mxu0 %v2950
    %4149 = vmatprep.subr.bf16.mxu0 %v2930
    %4150 = vmatpush1.bf16.msra.mxu0 %v2929
    %4151 = vmatprep.subr.bf16.mxu0 %v2909
    %4152 = vmatpush1.bf16.msra.mxu0 %v2908
    %4153 = vmatprep.subr.bf16.mxu0 %v2888
    %4154 = vmatpush1.bf16.msra.mxu0 %v2887
    %4155 = vmatprep.subr.bf16.mxu0 %v2867
    %4156 = vmatpush1.bf16.msra.mxu0 %v2866
    %4157 = vmatprep.subr.bf16.mxu0 %v2846
    %4158 = vmatpush1.bf16.msra.mxu0 %v2845
    %4159 = vmatprep.subr.bf16.mxu0 %v2825
    %4160 = vmatpush1.bf16.msra.mxu0 %v2824
    %4161 = vmatprep.subr.bf16.mxu0 %v2804
    %4162 = vmatpush1.bf16.msra.mxu0 %v2803
    %4163 = vmatprep.subr.bf16.mxu0 %v3119
    %4164 = vmatpush2.bf16.msra.mxu0 %v3118
    %4165 = vmatprep.subr.bf16.mxu0 %v3098
    %4166 = vmatpush2.bf16.msra.mxu0 %v3097
    %4167 = vmatprep.subr.bf16.mxu0 %v3077
    %4168 = vmatpush2.bf16.msra.mxu0 %v3076
    %4169 = vmatprep.subr.bf16.mxu0 %v3056
    %4170 = vmatpush2.bf16.msra.mxu0 %v3055
    %4171 = vmatprep.subr.bf16.mxu0 %v3035
    %4172 = vmatpush2.bf16.msra.mxu0 %v3034
    %4173 = vmatprep.subr.bf16.mxu0 %v3014
    %4174 = vmatpush2.bf16.msra.mxu0 %v3013
    %4175 = vmatprep.subr.bf16.mxu0 %v2993
    %4176 = vmatpush2.bf16.msra.mxu0 %v2992
    %4177 = vmatprep.subr.bf16.mxu0 %v2972
    %4178 = vmatpush2.bf16.msra.mxu0 %v2971
    %4179 = vmatprep.mubr.bf16.mxu0 %v48
    %4180 = vmatmul.mubr.bf16.gmra.mxu0 %v47
    %v4181 = vpop.f32.mrf.mxu0
    %v4182 = vadd.f32 0.0, %v4181
    %v4183 = vpop.f32.mrf.mxu0
    %v4184 = vadd.f32 0.0, %v4183
    %v4185 = vpop.f32.mrf.mxu0
    %v4186 = vpop.f32.mrf.mxu0
    %4187 = vdwg.mxu0
    %4188 = vmatprep.subr.bf16.mxu0 %v3287
    %4189 = vmatpush1.bf16.msra.mxu0 %v3286
    %4190 = vmatprep.subr.bf16.mxu0 %v3266
    %4191 = vmatpush1.bf16.msra.mxu0 %v3265
    %4192 = vmatprep.subr.bf16.mxu0 %v3245
    %4193 = vmatpush1.bf16.msra.mxu0 %v3244
    %4194 = vmatprep.subr.bf16.mxu0 %v3224
    %4195 = vmatpush1.bf16.msra.mxu0 %v3223
    %4196 = vmatprep.subr.bf16.mxu0 %v3203
    %4197 = vmatpush1.bf16.msra.mxu0 %v3202
    %4198 = vmatprep.subr.bf16.mxu0 %v3182
    %4199 = vmatpush1.bf16.msra.mxu0 %v3181
    %4200 = vmatprep.subr.bf16.mxu0 %v3161
    %4201 = vmatpush1.bf16.msra.mxu0 %v3160
    %4202 = vmatprep.subr.bf16.mxu0 %v3140
    %4203 = vmatpush1.bf16.msra.mxu0 %v3139
    %4204 = vmatprep.subr.bf16.mxu0 %v3455
    %4205 = vmatpush2.bf16.msra.mxu0 %v3454
    %4206 = vmatprep.subr.bf16.mxu0 %v3434
    %4207 = vmatpush2.bf16.msra.mxu0 %v3433
    %4208 = vmatprep.subr.bf16.mxu0 %v3413
    %4209 = vmatpush2.bf16.msra.mxu0 %v3412
    %4210 = vmatprep.subr.bf16.mxu0 %v3392
    %4211 = vmatpush2.bf16.msra.mxu0 %v3391
    %4212 = vmatprep.subr.bf16.mxu0 %v3371
    %4213 = vmatpush2.bf16.msra.mxu0 %v3370
    %4214 = vmatprep.subr.bf16.mxu0 %v3350
    %4215 = vmatpush2.bf16.msra.mxu0 %v3349
    %4216 = vmatprep.subr.bf16.mxu0 %v3329
    %4217 = vmatpush2.bf16.msra.mxu0 %v3328
    %4218 = vmatprep.subr.bf16.mxu0 %v3308
    %4219 = vmatpush2.bf16.msra.mxu0 %v3307
    %4220 = vmatprep.mubr.bf16.mxu0 %v50
    %4221 = vmatmul.mubr.bf16.gmra.mxu0 %v49
    %v4222 = vpop.f32.mrf.mxu0
    %v4223 = vadd.f32 %v4182, %v4222
    %v4224 = vpop.f32.mrf.mxu0
    %v4225 = vadd.f32 %v4184, %v4224
    %v4226 = vpop.f32.mrf.mxu0
    %v4227 = vpop.f32.mrf.mxu0
    %4228 = vdwg.mxu0
    %4229 = vmatprep.subr.bf16.mxu0 %v2953
    %4230 = vmatpush1.bf16.msra.mxu0 %v2952
    %4231 = vmatprep.subr.bf16.mxu0 %v2932
    %4232 = vmatpush1.bf16.msra.mxu0 %v2931
    %4233 = vmatprep.subr.bf16.mxu0 %v2911
    %4234 = vmatpush1.bf16.msra.mxu0 %v2910
    %4235 = vmatprep.subr.bf16.mxu0 %v2890
    %4236 = vmatpush1.bf16.msra.mxu0 %v2889
    %4237 = vmatprep.subr.bf16.mxu0 %v2869
    %4238 = vmatpush1.bf16.msra.mxu0 %v2868
    %4239 = vmatprep.subr.bf16.mxu0 %v2848
    %4240 = vmatpush1.bf16.msra.mxu0 %v2847
    %4241 = vmatprep.subr.bf16.mxu0 %v2827
    %4242 = vmatpush1.bf16.msra.mxu0 %v2826
    %4243 = vmatprep.subr.bf16.mxu0 %v2806
    %4244 = vmatpush1.bf16.msra.mxu0 %v2805
    %4245 = vmatprep.subr.bf16.mxu0 %v3121
    %4246 = vmatpush2.bf16.msra.mxu0 %v3120
    %4247 = vmatprep.subr.bf16.mxu0 %v3100
    %4248 = vmatpush2.bf16.msra.mxu0 %v3099
    %4249 = vmatprep.subr.bf16.mxu0 %v3079
    %4250 = vmatpush2.bf16.msra.mxu0 %v3078
    %4251 = vmatprep.subr.bf16.mxu0 %v3058
    %4252 = vmatpush2.bf16.msra.mxu0 %v3057
    %4253 = vmatprep.subr.bf16.mxu0 %v3037
    %4254 = vmatpush2.bf16.msra.mxu0 %v3036
    %4255 = vmatprep.subr.bf16.mxu0 %v3016
    %4256 = vmatpush2.bf16.msra.mxu0 %v3015
    %4257 = vmatprep.subr.bf16.mxu0 %v2995
    %4258 = vmatpush2.bf16.msra.mxu0 %v2994
    %4259 = vmatprep.subr.bf16.mxu0 %v2974
    %4260 = vmatpush2.bf16.msra.mxu0 %v2973
    %4261 = vmatprep.mubr.bf16.mxu0 %v48
    %4262 = vmatmul.mubr.bf16.gmra.mxu0 %v47
    %v4263 = vpop.f32.mrf.mxu0
    %v4264 = vadd.f32 0.0, %v4263
    %v4265 = vpop.f32.mrf.mxu0
    %v4266 = vadd.f32 0.0, %v4265
    %v4267 = vpop.f32.mrf.mxu0
    %v4268 = vpop.f32.mrf.mxu0
    %4269 = vdwg.mxu0
    %4270 = vmatprep.subr.bf16.mxu0 %v3289
    %4271 = vmatpush1.bf16.msra.mxu0 %v3288
    %4272 = vmatprep.subr.bf16.mxu0 %v3268
    %4273 = vmatpush1.bf16.msra.mxu0 %v3267
    %4274 = vmatprep.subr.bf16.mxu0 %v3247
    %4275 = vmatpush1.bf16.msra.mxu0 %v3246
    %4276 = vmatprep.subr.bf16.mxu0 %v3226
    %4277 = vmatpush1.bf16.msra.mxu0 %v3225
    %4278 = vmatprep.subr.bf16.mxu0 %v3205
    %4279 = vmatpush1.bf16.msra.mxu0 %v3204
    %4280 = vmatprep.subr.bf16.mxu0 %v3184
    %4281 = vmatpush1.bf16.msra.mxu0 %v3183
    %4282 = vmatprep.subr.bf16.mxu0 %v3163
    %4283 = vmatpush1.bf16.msra.mxu0 %v3162
    %4284 = vmatprep.subr.bf16.mxu0 %v3142
    %4285 = vmatpush1.bf16.msra.mxu0 %v3141
    %4286 = vmatprep.subr.bf16.mxu0 %v3457
    %4287 = vmatpush2.bf16.msra.mxu0 %v3456
    %4288 = vmatprep.subr.bf16.mxu0 %v3436
    %4289 = vmatpush2.bf16.msra.mxu0 %v3435
    %4290 = vmatprep.subr.bf16.mxu0 %v3415
    %4291 = vmatpush2.bf16.msra.mxu0 %v3414
    %4292 = vmatprep.subr.bf16.mxu0 %v3394
    %4293 = vmatpush2.bf16.msra.mxu0 %v3393
    %4294 = vmatprep.subr.bf16.mxu0 %v3373
    %4295 = vmatpush2.bf16.msra.mxu0 %v3372
    %4296 = vmatprep.subr.bf16.mxu0 %v3352
    %4297 = vmatpush2.bf16.msra.mxu0 %v3351
    %4298 = vmatprep.subr.bf16.mxu0 %v3331
    %4299 = vmatpush2.bf16.msra.mxu0 %v3330
    %4300 = vmatprep.subr.bf16.mxu0 %v3310
    %4301 = vmatpush2.bf16.msra.mxu0 %v3309
    %4302 = vmatprep.mubr.bf16.mxu0 %v50
    %4303 = vmatmul.mubr.bf16.gmra.mxu0 %v49
    %v4304 = vpop.f32.mrf.mxu0
    %v4305 = vadd.f32 %v4264, %v4304
    %v4306 = vpop.f32.mrf.mxu0
    %v4307 = vadd.f32 %v4266, %v4306
    %v4308 = vpop.f32.mrf.mxu0
    %v4309 = vpop.f32.mrf.mxu0
    %4310 = vdwg.mxu0
    %4311 = vmatprep.subr.bf16.mxu0 %v2955
    %4312 = vmatpush1.bf16.msra.mxu0 %v2954
    %4313 = vmatprep.subr.bf16.mxu0 %v2934
    %4314 = vmatpush1.bf16.msra.mxu0 %v2933
    %4315 = vmatprep.subr.bf16.mxu0 %v2913
    %4316 = vmatpush1.bf16.msra.mxu0 %v2912
    %4317 = vmatprep.subr.bf16.mxu0 %v2892
    %4318 = vmatpush1.bf16.msra.mxu0 %v2891
    %4319 = vmatprep.subr.bf16.mxu0 %v2871
    %4320 = vmatpush1.bf16.msra.mxu0 %v2870
    %4321 = vmatprep.subr.bf16.mxu0 %v2850
    %4322 = vmatpush1.bf16.msra.mxu0 %v2849
    %4323 = vmatprep.subr.bf16.mxu0 %v2829
    %4324 = vmatpush1.bf16.msra.mxu0 %v2828
    %4325 = vmatprep.subr.bf16.mxu0 %v2808
    %4326 = vmatpush1.bf16.msra.mxu0 %v2807
    %4327 = vmatprep.subr.bf16.mxu0 %v3123
    %4328 = vmatpush2.bf16.msra.mxu0 %v3122
    %4329 = vmatprep.subr.bf16.mxu0 %v3102
    %4330 = vmatpush2.bf16.msra.mxu0 %v3101
    %4331 = vmatprep.subr.bf16.mxu0 %v3081
    %4332 = vmatpush2.bf16.msra.mxu0 %v3080
    %4333 = vmatprep.subr.bf16.mxu0 %v3060
    %4334 = vmatpush2.bf16.msra.mxu0 %v3059
    %4335 = vmatprep.subr.bf16.mxu0 %v3039
    %4336 = vmatpush2.bf16.msra.mxu0 %v3038
    %4337 = vmatprep.subr.bf16.mxu0 %v3018
    %4338 = vmatpush2.bf16.msra.mxu0 %v3017
    %4339 = vmatprep.subr.bf16.mxu0 %v2997
    %4340 = vmatpush2.bf16.msra.mxu0 %v2996
    %4341 = vmatprep.subr.bf16.mxu0 %v2976
    %4342 = vmatpush2.bf16.msra.mxu0 %v2975
    %4343 = vmatprep.mubr.bf16.mxu0 %v48
    %4344 = vmatmul.mubr.bf16.gmra.mxu0 %v47
    %v4345 = vpop.f32.mrf.mxu0
    %v4346 = vadd.f32 0.0, %v4345
    %v4347 = vpop.f32.mrf.mxu0
    %v4348 = vadd.f32 0.0, %v4347
    %v4349 = vpop.f32.mrf.mxu0
    %v4350 = vpop.f32.mrf.mxu0
    %4351 = vdwg.mxu0
    %4352 = vmatprep.subr.bf16.mxu0 %v3291
    %4353 = vmatpush1.bf16.msra.mxu0 %v3290
    %4354 = vmatprep.subr.bf16.mxu0 %v3270
    %4355 = vmatpush1.bf16.msra.mxu0 %v3269
    %4356 = vmatprep.subr.bf16.mxu0 %v3249
    %4357 = vmatpush1.bf16.msra.mxu0 %v3248
    %4358 = vmatprep.subr.bf16.mxu0 %v3228
    %4359 = vmatpush1.bf16.msra.mxu0 %v3227
    %4360 = vmatprep.subr.bf16.mxu0 %v3207
    %4361 = vmatpush1.bf16.msra.mxu0 %v3206
    %4362 = vmatprep.subr.bf16.mxu0 %v3186
    %4363 = vmatpush1.bf16.msra.mxu0 %v3185
    %4364 = vmatprep.subr.bf16.mxu0 %v3165
    %4365 = vmatpush1.bf16.msra.mxu0 %v3164
    %4366 = vmatprep.subr.bf16.mxu0 %v3144
    %4367 = vmatpush1.bf16.msra.mxu0 %v3143
    %4368 = vmatprep.subr.bf16.mxu0 %v3459
    %4369 = vmatpush2.bf16.msra.mxu0 %v3458
    %4370 = vmatprep.subr.bf16.mxu0 %v3438
    %4371 = vmatpush2.bf16.msra.mxu0 %v3437
    %4372 = vmatprep.subr.bf16.mxu0 %v3417
    %4373 = vmatpush2.bf16.msra.mxu0 %v3416
    %4374 = vmatprep.subr.bf16.mxu0 %v3396
    %4375 = vmatpush2.bf16.msra.mxu0 %v3395
    %4376 = vmatprep.subr.bf16.mxu0 %v3375
    %4377 = vmatpush2.bf16.msra.mxu0 %v3374
    %4378 = vmatprep.subr.bf16.mxu0 %v3354
    %4379 = vmatpush2.bf16.msra.mxu0 %v3353
    %4380 = vmatprep.subr.bf16.mxu0 %v3333
    %4381 = vmatpush2.bf16.msra.mxu0 %v3332
    %4382 = vmatprep.subr.bf16.mxu0 %v3312
    %4383 = vmatpush2.bf16.msra.mxu0 %v3311
    %4384 = vmatprep.mubr.bf16.mxu0 %v50
    %4385 = vmatmul.mubr.bf16.gmra.mxu0 %v49
    %v4386 = vpop.f32.mrf.mxu0
    %v4387 = vadd.f32 %v4346, %v4386
    %v4388 = vpop.f32.mrf.mxu0
    %v4389 = vadd.f32 %v4348, %v4388
    %v4390 = vpop.f32.mrf.mxu0
    %v4391 = vpop.f32.mrf.mxu0
    %4392 = vdwg.mxu0
    %4393 = vmatprep.subr.bf16.mxu0 %v2957
    %4394 = vmatpush1.bf16.msra.mxu0 %v2956
    %4395 = vmatprep.subr.bf16.mxu0 %v2936
    %4396 = vmatpush1.bf16.msra.mxu0 %v2935
    %4397 = vmatprep.subr.bf16.mxu0 %v2915
    %4398 = vmatpush1.bf16.msra.mxu0 %v2914
    %4399 = vmatprep.subr.bf16.mxu0 %v2894
    %4400 = vmatpush1.bf16.msra.mxu0 %v2893
    %4401 = vmatprep.subr.bf16.mxu0 %v2873
    %4402 = vmatpush1.bf16.msra.mxu0 %v2872
    %4403 = vmatprep.subr.bf16.mxu0 %v2852
    %4404 = vmatpush1.bf16.msra.mxu0 %v2851
    %4405 = vmatprep.subr.bf16.mxu0 %v2831
    %4406 = vmatpush1.bf16.msra.mxu0 %v2830
    %4407 = vmatprep.subr.bf16.mxu0 %v2810
    %4408 = vmatpush1.bf16.msra.mxu0 %v2809
    %4409 = vmatprep.subr.bf16.mxu0 %v3125
    %4410 = vmatpush2.bf16.msra.mxu0 %v3124
    %4411 = vmatprep.subr.bf16.mxu0 %v3104
    %4412 = vmatpush2.bf16.msra.mxu0 %v3103
    %4413 = vmatprep.subr.bf16.mxu0 %v3083
    %4414 = vmatpush2.bf16.msra.mxu0 %v3082
    %4415 = vmatprep.subr.bf16.mxu0 %v3062
    %4416 = vmatpush2.bf16.msra.mxu0 %v3061
    %4417 = vmatprep.subr.bf16.mxu0 %v3041
    %4418 = vmatpush2.bf16.msra.mxu0 %v3040
    %4419 = vmatprep.subr.bf16.mxu0 %v3020
    %4420 = vmatpush2.bf16.msra.mxu0 %v3019
    %4421 = vmatprep.subr.bf16.mxu0 %v2999
    %4422 = vmatpush2.bf16.msra.mxu0 %v2998
    %4423 = vmatprep.subr.bf16.mxu0 %v2978
    %4424 = vmatpush2.bf16.msra.mxu0 %v2977
    %4425 = vmatprep.mubr.bf16.mxu0 %v48
    %4426 = vmatmul.mubr.bf16.gmra.mxu0 %v47
    %v4427 = vpop.f32.mrf.mxu0
    %v4428 = vadd.f32 0.0, %v4427
    %v4429 = vpop.f32.mrf.mxu0
    %v4430 = vadd.f32 0.0, %v4429
    %v4431 = vpop.f32.mrf.mxu0
    %v4432 = vpop.f32.mrf.mxu0
    %4433 = vdwg.mxu0
    %4434 = vmatprep.subr.bf16.mxu0 %v3293
    %4435 = vmatpush1.bf16.msra.mxu0 %v3292
    %4436 = vmatprep.subr.bf16.mxu0 %v3272
    %4437 = vmatpush1.bf16.msra.mxu0 %v3271
    %4438 = vmatprep.subr.bf16.mxu0 %v3251
    %4439 = vmatpush1.bf16.msra.mxu0 %v3250
    %4440 = vmatprep.subr.bf16.mxu0 %v3230
    %4441 = vmatpush1.bf16.msra.mxu0 %v3229
    %4442 = vmatprep.subr.bf16.mxu0 %v3209
    %4443 = vmatpush1.bf16.msra.mxu0 %v3208
    %4444 = vmatprep.subr.bf16.mxu0 %v3188
    %4445 = vmatpush1.bf16.msra.mxu0 %v3187
    %4446 = vmatprep.subr.bf16.mxu0 %v3167
    %4447 = vmatpush1.bf16.msra.mxu0 %v3166
    %4448 = vmatprep.subr.bf16.mxu0 %v3146
    %4449 = vmatpush1.bf16.msra.mxu0 %v3145
    %4450 = vmatprep.subr.bf16.mxu0 %v3461
    %4451 = vmatpush2.bf16.msra.mxu0 %v3460
    %4452 = vmatprep.subr.bf16.mxu0 %v3440
    %4453 = vmatpush2.bf16.msra.mxu0 %v3439
    %4454 = vmatprep.subr.bf16.mxu0 %v3419
    %4455 = vmatpush2.bf16.msra.mxu0 %v3418
    %4456 = vmatprep.subr.bf16.mxu0 %v3398
    %4457 = vmatpush2.bf16.msra.mxu0 %v3397
    %4458 = vmatprep.subr.bf16.mxu0 %v3377
    %4459 = vmatpush2.bf16.msra.mxu0 %v3376
    %4460 = vmatprep.subr.bf16.mxu0 %v3356
    %4461 = vmatpush2.bf16.msra.mxu0 %v3355
    %4462 = vmatprep.subr.bf16.mxu0 %v3335
    %4463 = vmatpush2.bf16.msra.mxu0 %v3334
    %4464 = vmatprep.subr.bf16.mxu0 %v3314
    %4465 = vmatpush2.bf16.msra.mxu0 %v3313
    %4466 = vmatprep.mubr.bf16.mxu0 %v50
    %4467 = vmatmul.mubr.bf16.gmra.mxu0 %v49
    %v4468 = vpop.f32.mrf.mxu0
    %v4469 = vadd.f32 %v4428, %v4468
    %v4470 = vpop.f32.mrf.mxu0
    %v4471 = vadd.f32 %v4430, %v4470
    %v4472 = vpop.f32.mrf.mxu0
    %v4473 = vpop.f32.mrf.mxu0
    %4474 = vdwg.mxu0
    %4475 = vmatprep.subr.bf16.mxu0 %v2959
    %4476 = vmatpush1.bf16.msra.mxu0 %v2958
    %4477 = vmatprep.subr.bf16.mxu0 %v2938
    %4478 = vmatpush1.bf16.msra.mxu0 %v2937
    %4479 = vmatprep.subr.bf16.mxu0 %v2917
    %4480 = vmatpush1.bf16.msra.mxu0 %v2916
    %4481 = vmatprep.subr.bf16.mxu0 %v2896
    %4482 = vmatpush1.bf16.msra.mxu0 %v2895
    %4483 = vmatprep.subr.bf16.mxu0 %v2875
    %4484 = vmatpush1.bf16.msra.mxu0 %v2874
    %4485 = vmatprep.subr.bf16.mxu0 %v2854
    %4486 = vmatpush1.bf16.msra.mxu0 %v2853
    %4487 = vmatprep.subr.bf16.mxu0 %v2833
    %4488 = vmatpush1.bf16.msra.mxu0 %v2832
    %4489 = vmatprep.subr.bf16.mxu0 %v2812
    %4490 = vmatpush1.bf16.msra.mxu0 %v2811
    %4491 = vmatprep.subr.bf16.mxu0 %v3127
    %4492 = vmatpush2.bf16.msra.mxu0 %v3126
    %4493 = vmatprep.subr.bf16.mxu0 %v3106
    %4494 = vmatpush2.bf16.msra.mxu0 %v3105
    %4495 = vmatprep.subr.bf16.mxu0 %v3085
    %4496 = vmatpush2.bf16.msra.mxu0 %v3084
    %4497 = vmatprep.subr.bf16.mxu0 %v3064
    %4498 = vmatpush2.bf16.msra.mxu0 %v3063
    %4499 = vmatprep.subr.bf16.mxu0 %v3043
    %4500 = vmatpush2.bf16.msra.mxu0 %v3042
    %4501 = vmatprep.subr.bf16.mxu0 %v3022
    %4502 = vmatpush2.bf16.msra.mxu0 %v3021
    %4503 = vmatprep.subr.bf16.mxu0 %v3001
    %4504 = vmatpush2.bf16.msra.mxu0 %v3000
    %4505 = vmatprep.subr.bf16.mxu0 %v2980
    %4506 = vmatpush2.bf16.msra.mxu0 %v2979
    %4507 = vmatprep.mubr.bf16.mxu0 %v48
    %4508 = vmatmul.mubr.bf16.gmra.mxu0 %v47
    %v4509 = vpop.f32.mrf.mxu0
    %v4510 = vadd.f32 0.0, %v4509
    %v4511 = vpop.f32.mrf.mxu0
    %v4512 = vadd.f32 0.0, %v4511
    %v4513 = vpop.f32.mrf.mxu0
    %v4514 = vpop.f32.mrf.mxu0
    %4515 = vdwg.mxu0
    %4516 = vmatprep.subr.bf16.mxu0 %v3295
    %4517 = vmatpush1.bf16.msra.mxu0 %v3294
    %4518 = vmatprep.subr.bf16.mxu0 %v3274
    %4519 = vmatpush1.bf16.msra.mxu0 %v3273
    %4520 = vmatprep.subr.bf16.mxu0 %v3253
    %4521 = vmatpush1.bf16.msra.mxu0 %v3252
    %4522 = vmatprep.subr.bf16.mxu0 %v3232
    %4523 = vmatpush1.bf16.msra.mxu0 %v3231
    %4524 = vmatprep.subr.bf16.mxu0 %v3211
    %4525 = vmatpush1.bf16.msra.mxu0 %v3210
    %4526 = vmatprep.subr.bf16.mxu0 %v3190
    %4527 = vmatpush1.bf16.msra.mxu0 %v3189
    %4528 = vmatprep.subr.bf16.mxu0 %v3169
    %4529 = vmatpush1.bf16.msra.mxu0 %v3168
    %4530 = vmatprep.subr.bf16.mxu0 %v3148
    %4531 = vmatpush1.bf16.msra.mxu0 %v3147
    %4532 = vmatprep.subr.bf16.mxu0 %v3463
    %4533 = vmatpush2.bf16.msra.mxu0 %v3462
    %4534 = vmatprep.subr.bf16.mxu0 %v3442
    %4535 = vmatpush2.bf16.msra.mxu0 %v3441
    %4536 = vmatprep.subr.bf16.mxu0 %v3421
    %4537 = vmatpush2.bf16.msra.mxu0 %v3420
    %4538 = vmatprep.subr.bf16.mxu0 %v3400
    %4539 = vmatpush2.bf16.msra.mxu0 %v3399
    %4540 = vmatprep.subr.bf16.mxu0 %v3379
    %4541 = vmatpush2.bf16.msra.mxu0 %v3378
    %4542 = vmatprep.subr.bf16.mxu0 %v3358
    %4543 = vmatpush2.bf16.msra.mxu0 %v3357
    %4544 = vmatprep.subr.bf16.mxu0 %v3337
    %4545 = vmatpush2.bf16.msra.mxu0 %v3336
    %4546 = vmatprep.subr.bf16.mxu0 %v3316
    %4547 = vmatpush2.bf16.msra.mxu0 %v3315
    %4548 = vmatprep.mubr.bf16.mxu0 %v50
    %4549 = vmatmul.mubr.bf16.gmra.mxu0 %v49
    %v4550 = vpop.f32.mrf.mxu0
    %v4551 = vadd.f32 %v4510, %v4550
    %v4552 = vpop.f32.mrf.mxu0
    %v4553 = vadd.f32 %v4512, %v4552
    %v4554 = vpop.f32.mrf.mxu0
    %v4555 = vpop.f32.mrf.mxu0
    %4556 = vdwg.mxu0
    %4557 = vmatprep.subr.bf16.mxu0 %v2961
    %4558 = vmatpush1.bf16.msra.mxu0 %v2960
    %4559 = vmatprep.subr.bf16.mxu0 %v2940
    %4560 = vmatpush1.bf16.msra.mxu0 %v2939
    %4561 = vmatprep.subr.bf16.mxu0 %v2919
    %4562 = vmatpush1.bf16.msra.mxu0 %v2918
    %4563 = vmatprep.subr.bf16.mxu0 %v2898
    %4564 = vmatpush1.bf16.msra.mxu0 %v2897
    %4565 = vmatprep.subr.bf16.mxu0 %v2877
    %4566 = vmatpush1.bf16.msra.mxu0 %v2876
    %4567 = vmatprep.subr.bf16.mxu0 %v2856
    %4568 = vmatpush1.bf16.msra.mxu0 %v2855
    %4569 = vmatprep.subr.bf16.mxu0 %v2835
    %4570 = vmatpush1.bf16.msra.mxu0 %v2834
    %4571 = vmatprep.subr.bf16.mxu0 %v2814
    %4572 = vmatpush1.bf16.msra.mxu0 %v2813
    %4573 = vmatprep.subr.bf16.mxu0 %v3129
    %4574 = vmatpush2.bf16.msra.mxu0 %v3128
    %4575 = vmatprep.subr.bf16.mxu0 %v3108
    %4576 = vmatpush2.bf16.msra.mxu0 %v3107
    %4577 = vmatprep.subr.bf16.mxu0 %v3087
    %4578 = vmatpush2.bf16.msra.mxu0 %v3086
    %4579 = vmatprep.subr.bf16.mxu0 %v3066
    %4580 = vmatpush2.bf16.msra.mxu0 %v3065
    %4581 = vmatprep.subr.bf16.mxu0 %v3045
    %4582 = vmatpush2.bf16.msra.mxu0 %v3044
    %4583 = vmatprep.subr.bf16.mxu0 %v3024
    %4584 = vmatpush2.bf16.msra.mxu0 %v3023
    %4585 = vmatprep.subr.bf16.mxu0 %v3003
    %4586 = vmatpush2.bf16.msra.mxu0 %v3002
    %4587 = vmatprep.subr.bf16.mxu0 %v2982
    %4588 = vmatpush2.bf16.msra.mxu0 %v2981
    %4589 = vmatprep.mubr.bf16.mxu0 %v48
    %4590 = vmatmul.mubr.bf16.gmra.mxu0 %v47
    %v4591 = vpop.f32.mrf.mxu0
    %v4592 = vadd.f32 0.0, %v4591
    %v4593 = vpop.f32.mrf.mxu0
    %v4594 = vadd.f32 0.0, %v4593
    %v4595 = vpop.f32.mrf.mxu0
    %v4596 = vpop.f32.mrf.mxu0
    %4597 = vdwg.mxu0
    %4598 = vmatprep.subr.bf16.mxu0 %v3297
    %4599 = vmatpush1.bf16.msra.mxu0 %v3296
    %4600 = vmatprep.subr.bf16.mxu0 %v3276
    %4601 = vmatpush1.bf16.msra.mxu0 %v3275
    %4602 = vmatprep.subr.bf16.mxu0 %v3255
    %4603 = vmatpush1.bf16.msra.mxu0 %v3254
    %4604 = vmatprep.subr.bf16.mxu0 %v3234
    %4605 = vmatpush1.bf16.msra.mxu0 %v3233
    %4606 = vmatprep.subr.bf16.mxu0 %v3213
    %4607 = vmatpush1.bf16.msra.mxu0 %v3212
    %4608 = vmatprep.subr.bf16.mxu0 %v3192
    %4609 = vmatpush1.bf16.msra.mxu0 %v3191
    %4610 = vmatprep.subr.bf16.mxu0 %v3171
    %4611 = vmatpush1.bf16.msra.mxu0 %v3170
    %4612 = vmatprep.subr.bf16.mxu0 %v3150
    %4613 = vmatpush1.bf16.msra.mxu0 %v3149
    %4614 = vmatprep.subr.bf16.mxu0 %v3465
    %4615 = vmatpush2.bf16.msra.mxu0 %v3464
    %4616 = vmatprep.subr.bf16.mxu0 %v3444
    %4617 = vmatpush2.bf16.msra.mxu0 %v3443
    %4618 = vmatprep.subr.bf16.mxu0 %v3423
    %4619 = vmatpush2.bf16.msra.mxu0 %v3422
    %4620 = vmatprep.subr.bf16.mxu0 %v3402
    %4621 = vmatpush2.bf16.msra.mxu0 %v3401
    %4622 = vmatprep.subr.bf16.mxu0 %v3381
    %4623 = vmatpush2.bf16.msra.mxu0 %v3380
    %4624 = vmatprep.subr.bf16.mxu0 %v3360
    %4625 = vmatpush2.bf16.msra.mxu0 %v3359
    %4626 = vmatprep.subr.bf16.mxu0 %v3339
    %4627 = vmatpush2.bf16.msra.mxu0 %v3338
    %4628 = vmatprep.subr.bf16.mxu0 %v3318
    %4629 = vmatpush2.bf16.msra.mxu0 %v3317
    %4630 = vmatprep.mubr.bf16.mxu0 %v50
    %4631 = vmatmul.mubr.bf16.gmra.mxu0 %v49
    %v4632 = vpop.f32.mrf.mxu0
    %v4633 = vadd.f32 %v4592, %v4632
    %v4634 = vpop.f32.mrf.mxu0
    %v4635 = vadd.f32 %v4594, %v4634
    %v4636 = vpop.f32.mrf.mxu0
    %v4637 = vpop.f32.mrf.mxu0
    %4638 = vdwg.mxu0
    %4639 = vmatprep.subr.bf16.mxu0 %v2963
    %4640 = vmatpush1.bf16.msra.mxu0 %v2962
    %4641 = vmatprep.subr.bf16.mxu0 %v2942
    %4642 = vmatpush1.bf16.msra.mxu0 %v2941
    %4643 = vmatprep.subr.bf16.mxu0 %v2921
    %4644 = vmatpush1.bf16.msra.mxu0 %v2920
    %4645 = vmatprep.subr.bf16.mxu0 %v2900
    %4646 = vmatpush1.bf16.msra.mxu0 %v2899
    %4647 = vmatprep.subr.bf16.mxu0 %v2879
    %4648 = vmatpush1.bf16.msra.mxu0 %v2878
    %4649 = vmatprep.subr.bf16.mxu0 %v2858
    %4650 = vmatpush1.bf16.msra.mxu0 %v2857
    %4651 = vmatprep.subr.bf16.mxu0 %v2837
    %4652 = vmatpush1.bf16.msra.mxu0 %v2836
    %4653 = vmatprep.subr.bf16.mxu0 %v2816
    %4654 = vmatpush1.bf16.msra.mxu0 %v2815
    %4655 = vmatprep.subr.bf16.mxu0 %v3131
    %4656 = vmatpush2.bf16.msra.mxu0 %v3130
    %4657 = vmatprep.subr.bf16.mxu0 %v3110
    %4658 = vmatpush2.bf16.msra.mxu0 %v3109
    %4659 = vmatprep.subr.bf16.mxu0 %v3089
    %4660 = vmatpush2.bf16.msra.mxu0 %v3088
    %4661 = vmatprep.subr.bf16.mxu0 %v3068
    %4662 = vmatpush2.bf16.msra.mxu0 %v3067
    %4663 = vmatprep.subr.bf16.mxu0 %v3047
    %4664 = vmatpush2.bf16.msra.mxu0 %v3046
    %4665 = vmatprep.subr.bf16.mxu0 %v3026
    %4666 = vmatpush2.bf16.msra.mxu0 %v3025
    %4667 = vmatprep.subr.bf16.mxu0 %v3005
    %4668 = vmatpush2.bf16.msra.mxu0 %v3004
    %4669 = vmatprep.subr.bf16.mxu0 %v2984
    %4670 = vmatpush2.bf16.msra.mxu0 %v2983
    %4671 = vmatprep.mubr.bf16.mxu0 %v48
    %4672 = vmatmul.mubr.bf16.gmra.mxu0 %v47
    %v4673 = vpop.f32.mrf.mxu0
    %v4674 = vadd.f32 0.0, %v4673
    %v4675 = vpop.f32.mrf.mxu0
    %v4676 = vadd.f32 0.0, %v4675
    %v4677 = vpop.f32.mrf.mxu0
    %v4678 = vpop.f32.mrf.mxu0
    %4679 = vdwg.mxu0
    %4680 = vmatprep.subr.bf16.mxu0 %v3299
    %4681 = vmatpush1.bf16.msra.mxu0 %v3298
    %4682 = vmatprep.subr.bf16.mxu0 %v3278
    %4683 = vmatpush1.bf16.msra.mxu0 %v3277
    %4684 = vmatprep.subr.bf16.mxu0 %v3257
    %4685 = vmatpush1.bf16.msra.mxu0 %v3256
    %4686 = vmatprep.subr.bf16.mxu0 %v3236
    %4687 = vmatpush1.bf16.msra.mxu0 %v3235
    %4688 = vmatprep.subr.bf16.mxu0 %v3215
    %4689 = vmatpush1.bf16.msra.mxu0 %v3214
    %4690 = vmatprep.subr.bf16.mxu0 %v3194
    %4691 = vmatpush1.bf16.msra.mxu0 %v3193
    %4692 = vmatprep.subr.bf16.mxu0 %v3173
    %4693 = vmatpush1.bf16.msra.mxu0 %v3172
    %4694 = vmatprep.subr.bf16.mxu0 %v3152
    %4695 = vmatpush1.bf16.msra.mxu0 %v3151
    %4696 = vmatprep.subr.bf16.mxu0 %v3467
    %4697 = vmatpush2.bf16.msra.mxu0 %v3466
    %4698 = vmatprep.subr.bf16.mxu0 %v3446
    %4699 = vmatpush2.bf16.msra.mxu0 %v3445
    %4700 = vmatprep.subr.bf16.mxu0 %v3425
    %4701 = vmatpush2.bf16.msra.mxu0 %v3424
    %4702 = vmatprep.subr.bf16.mxu0 %v3404
    %4703 = vmatpush2.bf16.msra.mxu0 %v3403
    %4704 = vmatprep.subr.bf16.mxu0 %v3383
    %4705 = vmatpush2.bf16.msra.mxu0 %v3382
    %4706 = vmatprep.subr.bf16.mxu0 %v3362
    %4707 = vmatpush2.bf16.msra.mxu0 %v3361
    %4708 = vmatprep.subr.bf16.mxu0 %v3341
    %4709 = vmatpush2.bf16.msra.mxu0 %v3340
    %4710 = vmatprep.subr.bf16.mxu0 %v3320
    %4711 = vmatpush2.bf16.msra.mxu0 %v3319
    %4712 = vmatprep.mubr.bf16.mxu0 %v50
    %4713 = vmatmul.mubr.bf16.gmra.mxu0 %v49
    %v4714 = vpop.f32.mrf.mxu0
    %v4715 = vadd.f32 %v4674, %v4714
    %v4716 = vpop.f32.mrf.mxu0
    %v4717 = vadd.f32 %v4676, %v4716
    %v4718 = vpop.f32.mrf.mxu0
    %v4719 = vpop.f32.mrf.mxu0
    %4720 = vdwg.mxu0
    %4721 = vmatprep.subr.bf16.mxu0 %v2965
    %4722 = vmatpush1.bf16.msra.mxu0 %v2964
    %4723 = vmatprep.subr.bf16.mxu0 %v2944
    %4724 = vmatpush1.bf16.msra.mxu0 %v2943
    %4725 = vmatprep.subr.bf16.mxu0 %v2923
    %4726 = vmatpush1.bf16.msra.mxu0 %v2922
    %4727 = vmatprep.subr.bf16.mxu0 %v2902
    %4728 = vmatpush1.bf16.msra.mxu0 %v2901
    %4729 = vmatprep.subr.bf16.mxu0 %v2881
    %4730 = vmatpush1.bf16.msra.mxu0 %v2880
    %4731 = vmatprep.subr.bf16.mxu0 %v2860
    %4732 = vmatpush1.bf16.msra.mxu0 %v2859
    %4733 = vmatprep.subr.bf16.mxu0 %v2839
    %4734 = vmatpush1.bf16.msra.mxu0 %v2838
    %4735 = vmatprep.subr.bf16.mxu0 %v2818
    %4736 = vmatpush1.bf16.msra.mxu0 %v2817
    %4737 = vmatprep.subr.bf16.mxu0 %v3133
    %4738 = vmatpush2.bf16.msra.mxu0 %v3132
    %4739 = vmatprep.subr.bf16.mxu0 %v3112
    %4740 = vmatpush2.bf16.msra.mxu0 %v3111
    %4741 = vmatprep.subr.bf16.mxu0 %v3091
    %4742 = vmatpush2.bf16.msra.mxu0 %v3090
    %4743 = vmatprep.subr.bf16.mxu0 %v3070
    %4744 = vmatpush2.bf16.msra.mxu0 %v3069
    %4745 = vmatprep.subr.bf16.mxu0 %v3049
    %4746 = vmatpush2.bf16.msra.mxu0 %v3048
    %4747 = vmatprep.subr.bf16.mxu0 %v3028
    %4748 = vmatpush2.bf16.msra.mxu0 %v3027
    %4749 = vmatprep.subr.bf16.mxu0 %v3007
    %4750 = vmatpush2.bf16.msra.mxu0 %v3006
    %4751 = vmatprep.subr.bf16.mxu0 %v2986
    %4752 = vmatpush2.bf16.msra.mxu0 %v2985
    %4753 = vmatprep.mubr.bf16.mxu0 %v48
    %4754 = vmatmul.mubr.bf16.gmra.mxu0 %v47
    %v4755 = vpop.f32.mrf.mxu0
    %v4756 = vadd.f32 0.0, %v4755
    %v4757 = vpop.f32.mrf.mxu0
    %v4758 = vadd.f32 0.0, %v4757
    %v4759 = vpop.f32.mrf.mxu0
    %v4760 = vpop.f32.mrf.mxu0
    %4761 = vdwg.mxu0
    %4762 = vmatprep.subr.bf16.mxu0 %v3301
    %4763 = vmatpush1.bf16.msra.mxu0 %v3300
    %4764 = vmatprep.subr.bf16.mxu0 %v3280
    %4765 = vmatpush1.bf16.msra.mxu0 %v3279
    %4766 = vmatprep.subr.bf16.mxu0 %v3259
    %4767 = vmatpush1.bf16.msra.mxu0 %v3258
    %4768 = vmatprep.subr.bf16.mxu0 %v3238
    %4769 = vmatpush1.bf16.msra.mxu0 %v3237
    %4770 = vmatprep.subr.bf16.mxu0 %v3217
    %4771 = vmatpush1.bf16.msra.mxu0 %v3216
    %4772 = vmatprep.subr.bf16.mxu0 %v3196
    %4773 = vmatpush1.bf16.msra.mxu0 %v3195
    %4774 = vmatprep.subr.bf16.mxu0 %v3175
    %4775 = vmatpush1.bf16.msra.mxu0 %v3174
    %4776 = vmatprep.subr.bf16.mxu0 %v3154
    %4777 = vmatpush1.bf16.msra.mxu0 %v3153
    %4778 = vmatprep.subr.bf16.mxu0 %v3469
    %4779 = vmatpush2.bf16.msra.mxu0 %v3468
    %4780 = vmatprep.subr.bf16.mxu0 %v3448
    %4781 = vmatpush2.bf16.msra.mxu0 %v3447
    %4782 = vmatprep.subr.bf16.mxu0 %v3427
    %4783 = vmatpush2.bf16.msra.mxu0 %v3426
    %4784 = vmatprep.subr.bf16.mxu0 %v3406
    %4785 = vmatpush2.bf16.msra.mxu0 %v3405
    %4786 = vmatprep.subr.bf16.mxu0 %v3385
    %4787 = vmatpush2.bf16.msra.mxu0 %v3384
    %4788 = vmatprep.subr.bf16.mxu0 %v3364
    %4789 = vmatpush2.bf16.msra.mxu0 %v3363
    %4790 = vmatprep.subr.bf16.mxu0 %v3343
    %4791 = vmatpush2.bf16.msra.mxu0 %v3342
    %4792 = vmatprep.subr.bf16.mxu0 %v3322
    %4793 = vmatpush2.bf16.msra.mxu0 %v3321
    %4794 = vmatprep.mubr.bf16.mxu0 %v50
    %4795 = vmatmul.mubr.bf16.gmra.mxu0 %v49
    %v4796 = vpop.f32.mrf.mxu0
    %v4797 = vadd.f32 %v4756, %v4796
    %v4798 = vpop.f32.mrf.mxu0
    %v4799 = vadd.f32 %v4758, %v4798
    %v4800 = vpop.f32.mrf.mxu0
    %v4801 = vpop.f32.mrf.mxu0
    %4802 = vdwg.mxu0
    %4803 = vmatprep.subr.bf16.mxu0 %v2967
    %4804 = vmatpush1.bf16.msra.mxu0 %v2966
    %4805 = vmatprep.subr.bf16.mxu0 %v2946
    %4806 = vmatpush1.bf16.msra.mxu0 %v2945
    %4807 = vmatprep.subr.bf16.mxu0 %v2925
    %4808 = vmatpush1.bf16.msra.mxu0 %v2924
    %4809 = vmatprep.subr.bf16.mxu0 %v2904
    %4810 = vmatpush1.bf16.msra.mxu0 %v2903
    %4811 = vmatprep.subr.bf16.mxu0 %v2883
    %4812 = vmatpush1.bf16.msra.mxu0 %v2882
    %4813 = vmatprep.subr.bf16.mxu0 %v2862
    %4814 = vmatpush1.bf16.msra.mxu0 %v2861
    %4815 = vmatprep.subr.bf16.mxu0 %v2841
    %4816 = vmatpush1.bf16.msra.mxu0 %v2840
    %4817 = vmatprep.subr.bf16.mxu0 %v2820
    %4818 = vmatpush1.bf16.msra.mxu0 %v2819
    %4819 = vmatprep.subr.bf16.mxu0 %v3135
    %4820 = vmatpush2.bf16.msra.mxu0 %v3134
    %4821 = vmatprep.subr.bf16.mxu0 %v3114
    %4822 = vmatpush2.bf16.msra.mxu0 %v3113
    %4823 = vmatprep.subr.bf16.mxu0 %v3093
    %4824 = vmatpush2.bf16.msra.mxu0 %v3092
    %4825 = vmatprep.subr.bf16.mxu0 %v3072
    %4826 = vmatpush2.bf16.msra.mxu0 %v3071
    %4827 = vmatprep.subr.bf16.mxu0 %v3051
    %4828 = vmatpush2.bf16.msra.mxu0 %v3050
    %4829 = vmatprep.subr.bf16.mxu0 %v3030
    %4830 = vmatpush2.bf16.msra.mxu0 %v3029
    %4831 = vmatprep.subr.bf16.mxu0 %v3009
    %4832 = vmatpush2.bf16.msra.mxu0 %v3008
    %4833 = vmatprep.subr.bf16.mxu0 %v2988
    %4834 = vmatpush2.bf16.msra.mxu0 %v2987
    %4835 = vmatprep.mubr.bf16.mxu0 %v48
    %4836 = vmatmul.mubr.bf16.gmra.mxu0 %v47
    %v4837 = vpop.f32.mrf.mxu0
    %v4838 = vadd.f32 0.0, %v4837
    %v4839 = vpop.f32.mrf.mxu0
    %v4840 = vadd.f32 0.0, %v4839
    %v4841 = vpop.f32.mrf.mxu0
    %v4842 = vpop.f32.mrf.mxu0
    %4843 = vdwg.mxu0
    %4844 = vmatprep.subr.bf16.mxu0 %v3303
    %4845 = vmatpush1.bf16.msra.mxu0 %v3302
    %4846 = vmatprep.subr.bf16.mxu0 %v3282
    %4847 = vmatpush1.bf16.msra.mxu0 %v3281
    %4848 = vmatprep.subr.bf16.mxu0 %v3261
    %4849 = vmatpush1.bf16.msra.mxu0 %v3260
    %4850 = vmatprep.subr.bf16.mxu0 %v3240
    %4851 = vmatpush1.bf16.msra.mxu0 %v3239
    %4852 = vmatprep.subr.bf16.mxu0 %v3219
    %4853 = vmatpush1.bf16.msra.mxu0 %v3218
    %4854 = vmatprep.subr.bf16.mxu0 %v3198
    %4855 = vmatpush1.bf16.msra.mxu0 %v3197
    %4856 = vmatprep.subr.bf16.mxu0 %v3177
    %4857 = vmatpush1.bf16.msra.mxu0 %v3176
    %4858 = vmatprep.subr.bf16.mxu0 %v3156
    %4859 = vmatpush1.bf16.msra.mxu0 %v3155
    %4860 = vmatprep.subr.bf16.mxu0 %v3471
    %4861 = vmatpush2.bf16.msra.mxu0 %v3470
    %4862 = vmatprep.subr.bf16.mxu0 %v3450
    %4863 = vmatpush2.bf16.msra.mxu0 %v3449
    %4864 = vmatprep.subr.bf16.mxu0 %v3429
    %4865 = vmatpush2.bf16.msra.mxu0 %v3428
    %4866 = vmatprep.subr.bf16.mxu0 %v3408
    %4867 = vmatpush2.bf16.msra.mxu0 %v3407
    %4868 = vmatprep.subr.bf16.mxu0 %v3387
    %4869 = vmatpush2.bf16.msra.mxu0 %v3386
    %4870 = vmatprep.subr.bf16.mxu0 %v3366
    %4871 = vmatpush2.bf16.msra.mxu0 %v3365
    %4872 = vmatprep.subr.bf16.mxu0 %v3345
    %4873 = vmatpush2.bf16.msra.mxu0 %v3344
    %4874 = vmatprep.subr.bf16.mxu0 %v3324
    %4875 = vmatpush2.bf16.msra.mxu0 %v3323
    %4876 = vmatprep.mubr.bf16.mxu0 %v50
    %4877 = vmatmul.mubr.bf16.gmra.mxu0 %v49
    %v4878 = vpop.f32.mrf.mxu0
    %v4879 = vadd.f32 %v4838, %v4878
    %v4880 = vpop.f32.mrf.mxu0
    %v4881 = vadd.f32 %v4840, %v4880
    %v4882 = vpop.f32.mrf.mxu0
    %v4883 = vpop.f32.mrf.mxu0
    %4884 = vdwg.mxu0
    %4885 = vmatprep.subr.bf16.mxu0 %v2969
    %4886 = vmatpush1.bf16.msra.mxu0 %v2968
    %4887 = vmatprep.subr.bf16.mxu0 %v2948
    %4888 = vmatpush1.bf16.msra.mxu0 %v2947
    %4889 = vmatprep.subr.bf16.mxu0 %v2927
    %4890 = vmatpush1.bf16.msra.mxu0 %v2926
    %4891 = vmatprep.subr.bf16.mxu0 %v2906
    %4892 = vmatpush1.bf16.msra.mxu0 %v2905
    %4893 = vmatprep.subr.bf16.mxu0 %v2885
    %4894 = vmatpush1.bf16.msra.mxu0 %v2884
    %4895 = vmatprep.subr.bf16.mxu0 %v2864
    %4896 = vmatpush1.bf16.msra.mxu0 %v2863
    %4897 = vmatprep.subr.bf16.mxu0 %v2843
    %4898 = vmatpush1.bf16.msra.mxu0 %v2842
    %4899 = vmatprep.subr.bf16.mxu0 %v2822
    %4900 = vmatpush1.bf16.msra.mxu0 %v2821
    %4901 = vmatprep.subr.bf16.mxu0 %v3137
    %4902 = vmatpush2.bf16.msra.mxu0 %v3136
    %4903 = vmatprep.subr.bf16.mxu0 %v3116
    %4904 = vmatpush2.bf16.msra.mxu0 %v3115
    %4905 = vmatprep.subr.bf16.mxu0 %v3095
    %4906 = vmatpush2.bf16.msra.mxu0 %v3094
    %4907 = vmatprep.subr.bf16.mxu0 %v3074
    %4908 = vmatpush2.bf16.msra.mxu0 %v3073
    %4909 = vmatprep.subr.bf16.mxu0 %v3053
    %4910 = vmatpush2.bf16.msra.mxu0 %v3052
    %4911 = vmatprep.subr.bf16.mxu0 %v3032
    %4912 = vmatpush2.bf16.msra.mxu0 %v3031
    %4913 = vmatprep.subr.bf16.mxu0 %v3011
    %4914 = vmatpush2.bf16.msra.mxu0 %v3010
    %4915 = vmatprep.subr.bf16.mxu0 %v2990
    %4916 = vmatpush2.bf16.msra.mxu0 %v2989
    %4917 = vmatprep.mubr.bf16.mxu0 %v48
    %4918 = vmatmul.mubr.bf16.gmra.mxu0 %v47
    %v4919 = vpop.f32.mrf.mxu0
    %v4920 = vadd.f32 0.0, %v4919
    %v4921 = vpop.f32.mrf.mxu0
    %v4922 = vadd.f32 0.0, %v4921
    %v4923 = vpop.f32.mrf.mxu0
    %v4924 = vpop.f32.mrf.mxu0
    %4925 = vdwg.mxu0
    %4926 = vmatprep.subr.bf16.mxu0 %v3305
    %4927 = vmatpush1.bf16.msra.mxu0 %v3304
    %4928 = vmatprep.subr.bf16.mxu0 %v3284
    %4929 = vmatpush1.bf16.msra.mxu0 %v3283
    %4930 = vmatprep.subr.bf16.mxu0 %v3263
    %4931 = vmatpush1.bf16.msra.mxu0 %v3262
    %4932 = vmatprep.subr.bf16.mxu0 %v3242
    %4933 = vmatpush1.bf16.msra.mxu0 %v3241
    %4934 = vmatprep.subr.bf16.mxu0 %v3221
    %4935 = vmatpush1.bf16.msra.mxu0 %v3220
    %4936 = vmatprep.subr.bf16.mxu0 %v3200
    %4937 = vmatpush1.bf16.msra.mxu0 %v3199
    %4938 = vmatprep.subr.bf16.mxu0 %v3179
    %4939 = vmatpush1.bf16.msra.mxu0 %v3178
    %4940 = vmatprep.subr.bf16.mxu0 %v3158
    %4941 = vmatpush1.bf16.msra.mxu0 %v3157
    %4942 = vmatprep.subr.bf16.mxu0 %v3473
    %4943 = vmatpush2.bf16.msra.mxu0 %v3472
    %4944 = vmatprep.subr.bf16.mxu0 %v3452
    %4945 = vmatpush2.bf16.msra.mxu0 %v3451
    %4946 = vmatprep.subr.bf16.mxu0 %v3431
    %4947 = vmatpush2.bf16.msra.mxu0 %v3430
    %4948 = vmatprep.subr.bf16.mxu0 %v3410
    %4949 = vmatpush2.bf16.msra.mxu0 %v3409
    %4950 = vmatprep.subr.bf16.mxu0 %v3389
    %4951 = vmatpush2.bf16.msra.mxu0 %v3388
    %4952 = vmatprep.subr.bf16.mxu0 %v3368
    %4953 = vmatpush2.bf16.msra.mxu0 %v3367
    %4954 = vmatprep.subr.bf16.mxu0 %v3347
    %4955 = vmatpush2.bf16.msra.mxu0 %v3346
    %4956 = vmatprep.subr.bf16.mxu0 %v3326
    %4957 = vmatpush2.bf16.msra.mxu0 %v3325
    %4958 = vmatprep.mubr.bf16.mxu0 %v50
    %4959 = vmatmul.mubr.bf16.gmra.mxu0 %v49
    %v4960 = vpop.f32.mrf.mxu0
    %v4961 = vadd.f32 %v4920, %v4960
    %v4962 = vpop.f32.mrf.mxu0
    %v4963 = vadd.f32 %v4922, %v4962
    %v4964 = vpop.f32.mrf.mxu0
    %v4965 = vpop.f32.mrf.mxu0
    %4966 = vdwg.mxu0
    %4967 = vmatprep.subr.bf16.mxu0 0
    %4968 = vmatpush1.bf16.msra.mxu0 %v2970
    %4969 = vmatprep.subr.bf16.mxu0 0
    %4970 = vmatpush1.bf16.msra.mxu0 %v2949
    %4971 = vmatprep.subr.bf16.mxu0 0
    %4972 = vmatpush1.bf16.msra.mxu0 %v2928
    %4973 = vmatprep.subr.bf16.mxu0 0
    %4974 = vmatpush1.bf16.msra.mxu0 %v2907
    %4975 = vmatprep.subr.bf16.mxu0 0
    %4976 = vmatpush1.bf16.msra.mxu0 %v2886
    %4977 = vmatprep.subr.bf16.mxu0 0
    %4978 = vmatpush1.bf16.msra.mxu0 %v2865
    %4979 = vmatprep.subr.bf16.mxu0 0
    %4980 = vmatpush1.bf16.msra.mxu0 %v2844
    %4981 = vmatprep.subr.bf16.mxu0 0
    %4982 = vmatpush1.bf16.msra.mxu0 %v2823
    %4983 = vmatprep.subr.bf16.mxu0 0
    %4984 = vmatpush2.bf16.msra.mxu0 %v3138
    %4985 = vmatprep.subr.bf16.mxu0 0
    %4986 = vmatpush2.bf16.msra.mxu0 %v3117
    %4987 = vmatprep.subr.bf16.mxu0 0
    %4988 = vmatpush2.bf16.msra.mxu0 %v3096
    %4989 = vmatprep.subr.bf16.mxu0 0
    %4990 = vmatpush2.bf16.msra.mxu0 %v3075
    %4991 = vmatprep.subr.bf16.mxu0 0
    %4992 = vmatpush2.bf16.msra.mxu0 %v3054
    %4993 = vmatprep.subr.bf16.mxu0 0
    %4994 = vmatpush2.bf16.msra.mxu0 %v3033
    %4995 = vmatprep.subr.bf16.mxu0 0
    %4996 = vmatpush2.bf16.msra.mxu0 %v3012
    %4997 = vmatprep.subr.bf16.mxu0 0
    %4998 = vmatpush2.bf16.msra.mxu0 %v2991
    %4999 = vmatprep.mubr.bf16.mxu0 %v48
    %5000 = vmatmul.mubr.bf16.gmra.mxu0 %v47
    %v5001 = vpop.f32.mrf.mxu0
    %v5002 = vadd.f32 0.0, %v5001
    %v5003 = vpop.f32.mrf.mxu0
    %v5004 = vpop.f32.mrf.mxu0
    %v5005 = vpop.f32.mrf.mxu0
    %5006 = vdwg.mxu0
    %5007 = vmatprep.subr.bf16.mxu0 0
    %5008 = vmatpush1.bf16.msra.mxu0 %v3306
    %5009 = vmatprep.subr.bf16.mxu0 0
    %5010 = vmatpush1.bf16.msra.mxu0 %v3285
    %5011 = vmatprep.subr.bf16.mxu0 0
    %5012 = vmatpush1.bf16.msra.mxu0 %v3264
    %5013 = vmatprep.subr.bf16.mxu0 0
    %5014 = vmatpush1.bf16.msra.mxu0 %v3243
    %5015 = vmatprep.subr.bf16.mxu0 0
    %5016 = vmatpush1.bf16.msra.mxu0 %v3222
    %5017 = vmatprep.subr.bf16.mxu0 0
    %5018 = vmatpush1.bf16.msra.mxu0 %v3201
    %5019 = vmatprep.subr.bf16.mxu0 0
    %5020 = vmatpush1.bf16.msra.mxu0 %v3180
    %5021 = vmatprep.subr.bf16.mxu0 0
    %5022 = vmatpush1.bf16.msra.mxu0 %v3159
    %5023 = vmatprep.subr.bf16.mxu0 0
    %5024 = vmatpush2.bf16.msra.mxu0 %v3474
    %5025 = vmatprep.subr.bf16.mxu0 0
    %5026 = vmatpush2.bf16.msra.mxu0 %v3453
    %5027 = vmatprep.subr.bf16.mxu0 0
    %5028 = vmatpush2.bf16.msra.mxu0 %v3432
    %5029 = vmatprep.subr.bf16.mxu0 0
    %5030 = vmatpush2.bf16.msra.mxu0 %v3411
    %5031 = vmatprep.subr.bf16.mxu0 0
    %5032 = vmatpush2.bf16.msra.mxu0 %v3390
    %5033 = vmatprep.subr.bf16.mxu0 0
    %5034 = vmatpush2.bf16.msra.mxu0 %v3369
    %5035 = vmatprep.subr.bf16.mxu0 0
    %5036 = vmatpush2.bf16.msra.mxu0 %v3348
    %5037 = vmatprep.subr.bf16.mxu0 0
    %5038 = vmatpush2.bf16.msra.mxu0 %v3327
    %5039 = vmatprep.mubr.bf16.mxu0 %v50
    %5040 = vmatmul.mubr.bf16.gmra.mxu0 %v49
    %v5041 = vpop.f32.mrf.mxu0
    %v5042 = vadd.f32 %v5002, %v5041
    %v5043 = vpop.f32.mrf.mxu0
    %v5044 = vpop.f32.mrf.mxu0
    %v5045 = vpop.f32.mrf.mxu0
    %5046 = vdwg.mxu0
    %v5067 = vcombine.low %v4223, %v4225
    %v5068 = vcombine.low %v4305, %v4307
    %v5069 = vcombine.low %v4387, %v4389
    %v5070 = vcombine.low %v4469, %v4471
    %v5071 = vcombine.low %v4551, %v4553
    %v5072 = vcombine.low %v4633, %v4635
    %v5073 = vcombine.low %v4715, %v4717
    %v5074 = vcombine.low %v4797, %v4799
    %v5075 = vcombine.low %v4879, %v4881
    %v5076 = vcombine.low %v4961, %v4963
    %5087 = vst [vmem:[#allocation7] sm:$0xff] %v5067
    %5088 = vst [vmem:[#allocation7 + $0x8] sm:$0xff] %v5068
    %5089 = vst [vmem:[#allocation7 + $0x10] sm:$0xff] %v5069
    %5090 = vst [vmem:[#allocation7 + $0x18] sm:$0xff] %v5070
    %5091 = vst [vmem:[#allocation7 + $0x20] sm:$0xff] %v5071
    %5092 = vst [vmem:[#allocation7 + $0x28] sm:$0xff] %v5072
    %5093 = vst [vmem:[#allocation7 + $0x30] sm:$0xff] %v5073
    %5094 = vst [vmem:[#allocation7 + $0x38] sm:$0xff] %v5074
    %5095 = vst [vmem:[#allocation7 + $0x40] sm:$0xff] %v5075
    %5096 = vst [vmem:[#allocation7 + $0x48] sm:$0xff] %v5076
    %5097 = vst [vmem:[#allocation7 + $0x50] sm:$0xf] %v5042
    // Predicated region
    $region18: #{tpu_custom_call.1} parent=1 // pred_check
      _
    $region19: #{tpu_custom_call.1} parent=1 // pred_check_branch
      %5099 = sbr.rel (0) target = $region21
    $region20: #{tpu_custom_call.1} parent=1 // pred_region
      %s5101 = ssub.s32 1344, 1344
      %5102 = vsyncadd [#allocation4], %s5101
      %s5104 = sshll.u32 [#allocation7], 4
      %s5105 = int_to_ptr.vmem [resolvable:$true] %s5104
      %5107 = dma.vmem_to_hbm [thread:$0]  %s5105, 1344, %s2, [#allocation4]
    $region21: #{tpu_custom_call.1} parent=1 // pred_fallthru
      _
    // Predicated region
    $region22: #{tpu_custom_call.1} parent=1 // pred_check
      _
    $region23: #{tpu_custom_call.1} parent=1 // pred_check_branch
      %5109 = sbr.rel (0) target = $region25
    $region24: #{tpu_custom_call.1} parent=1 // pred_region
      %5110 = dma.done [#allocation4], 1344
    $region25: #{tpu_custom_call.1} parent=1 // pred_fallthru
      _
    %5111 = vsyncpa [#allocation3], 1
    %5112 = vsyncpa [#allocation6], 1
    %5113 = vsyncpa [#allocation4], 1

</llo_original>
